<compile_context>
chip_gen: v7x
topology: tpu7x:2x2x1
jax: 0.10.0
libtpu: 0.0.40
codegen_flags: <defaults>
</compile_context>

<pallas_src>
import functools

import jax
import jax.numpy as jnp
from jax.experimental import pallas as pl
from jax.experimental.pallas import tpu as pltpu

# Scaled-down synthetic sizes (originals in comments).
NUM_CLASSES = 4
HIGH_LEVEL_CH = 64        # original: 720
MID = 64                  # OCR_block.MID_CHANNELS (original: 512)
KEY = 32                  # OCR_block.KEY_CHANNELS (original: 256)
BN_EPS = 1e-5

_VMEM_LIMIT_CACHE = None


def _vmem_limit_bytes():
    """~75% of physical VMEM (96 MiB on v5e/v6e's 128 MiB, 48 MiB on v7x's 64 MiB)."""
    global _VMEM_LIMIT_CACHE
    if _VMEM_LIMIT_CACHE is None:
        try:
            info = pltpu.get_tpu_info()
            cap = int(getattr(info, "vmem_capacity_bytes", 128 * 1024 * 1024))
        except Exception:
            cap = 128 * 1024 * 1024
        _VMEM_LIMIT_CACHE = min(cap * 3 // 4, 100 * 1024 * 1024)
    return _VMEM_LIMIT_CACHE


# ---------------------------------------------------------------------------
# Kernel 1: conv3x3+BNReLU (single long-K im2col matmul, aux 1x1 fused into the
# same matmul) + aux head + SpatialGather softmax + f_object / f_down, all on
# one VMEM-resident per-batch tile. Outputs are channel-major (lane-dense).
# ---------------------------------------------------------------------------
def _conv_aux_gather_kernel(xp_ref, wbig_ref, bbig_ref, wa2_ref, ba2_ref,
                            wo1_ref, bo1_ref, wo2_ref, bo2_ref, wd_ref, bd_ref,
                            feats_ref, aux_ref, key_ref, val_ref, slab_ref,
                            *, H, W, mid):
    # HBM/VMEM traffic is bf16; widen once in-register for the window slicing
    # (proven-safe f32 slicing path), downcast per window into the bf16 slab.
    x = xp_ref[0].astype(jnp.float32)                     # (H+2, W+2, cin)
    cin = x.shape[-1]
    N = H * W

    # In-VMEM im2col: 9 shifted windows written into one (N, 9*cin) slab so the
    # whole 3x3 conv is ONE long-K matmul (accumulation stays inside the MXU,
    # no per-tap f32 adds). No HBM im2col: the input is read once.
    for t in range(9):                                    # static unrolled taps
        di, dj = t // 3, t % 3
        win = x[di:di + H, dj:dj + W, :].reshape(N, cin)
        slab_ref[:, t * cin:(t + 1) * cin] = win.astype(jnp.bfloat16)
    slab = slab_ref[...]                                  # (N, 9*cin) bf16

    # Transposed ("channels x pixels") conv output -> lane-dense downstream.
    # Rows [0:mid] = conv3x3_ocr (+folded BN), rows [mid:] = aux conv1 (+BN);
    # the aux 1x1 rides the same matmul through center-tap weight columns.
    big = jax.lax.dot_general(wbig_ref[...], slab, (((1,), (1,)), ((), ())),
                              preferred_element_type=jnp.float32) + bbig_ref[...]
    big = jnp.maximum(big, 0.0)                           # fused ReLU
    feats_t = big[:mid]                                   # (mid, N) f32
    aux1_t = big[mid:]                                    # (cin, N) f32
    feats_ref[0] = feats_t.astype(feats_ref.dtype)        # bf16, lane-dense

    # aux head second 1x1 (bias, no BN/ReLU) -> class-major logits (ncls, N).
    aux_t = jax.lax.dot_general(wa2_ref[...], aux1_t.astype(jnp.bfloat16),
                                (((0,), (0,)), ((), ())),
                                preferred_element_type=jnp.float32) + ba2_ref[...]
    aux_ref[0] = aux_t                                    # f32, lane-dense

    # SpatialGather: softmax over pixels reduces along the lane axis (dense).
    m = jnp.max(aux_t, axis=-1, keepdims=True)
    e = jnp.exp(aux_t - m)
    probs = e * pl.reciprocal(jnp.sum(e, axis=-1, keepdims=True), approx=True)
    # Keep this contraction fully f32 (per-pixel probs are tiny at large N).
    ctx = jax.lax.dot_general(probs, feats_t, (((1,), (1,)), ((), ())),
                              preferred_element_type=jnp.float32)     # (ncls, mid)

    # f_object (2x 1x1+BNReLU) -> key ; f_down (1x1+BNReLU) -> value.
    k1 = jnp.maximum(
        jnp.dot(ctx.astype(jnp.bfloat16), wo1_ref[...],
                preferred_element_type=jnp.float32) + bo1_ref[...], 0.0)
    k2 = jnp.maximum(
        jnp.dot(k1.astype(jnp.bfloat16), wo2_ref[...],
                preferred_element_type=jnp.float32) + bo2_ref[...], 0.0)
    v = jnp.maximum(
        jnp.dot(ctx.astype(jnp.bfloat16), wd_ref[...],
                preferred_element_type=jnp.float32) + bd_ref[...], 0.0)
    key_ref[0] = k2.astype(key_ref.dtype)                 # (ncls, KEY) bf16
    val_ref[0] = v.astype(val_ref.dtype)                  # (ncls, KEY) bf16


def conv_aux_gather(xp, wbig, bbig, wa2, ba2, wo1, bo1, wo2, bo2, wd, bd, *, H, W):
    B = xp.shape[0]
    cin = xp.shape[-1]
    mid = wbig.shape[0] - cin
    keyc = wo1.shape[-1]
    ncls = wa2.shape[-1]
    N = H * W
    kernel = functools.partial(_conv_aux_gather_kernel, H=H, W=W, mid=mid)
    return pl.pallas_call(
        kernel,
        out_shape=(jax.ShapeDtypeStruct((B, mid, N), jnp.bfloat16),     # feats^T
                   jax.ShapeDtypeStruct((B, ncls, N), jnp.float32),     # aux logits
                   jax.ShapeDtypeStruct((B, ncls, keyc), jnp.bfloat16), # key
                   jax.ShapeDtypeStruct((B, ncls, keyc), jnp.bfloat16)),# value
        grid=(B,),
        in_specs=[
            pl.BlockSpec((1, H + 2, W + 2, cin), lambda b: (b, 0, 0, 0)),
            pl.BlockSpec((mid + cin, 9 * cin), lambda b: (0, 0)),
            pl.BlockSpec((mid + cin, 1), lambda b: (0, 0)),
            pl.BlockSpec((cin, ncls), lambda b: (0, 0)),
            pl.BlockSpec((ncls, 1), lambda b: (0, 0)),
            pl.BlockSpec((mid, keyc), lambda b: (0, 0)),
            pl.BlockSpec((1, keyc), lambda b: (0, 0)),
            pl.BlockSpec((keyc, keyc), lambda b: (0, 0)),
            pl.BlockSpec((1, keyc), lambda b: (0, 0)),
            pl.BlockSpec((mid, keyc), lambda b: (0, 0)),
            pl.BlockSpec((1, keyc), lambda b: (0, 0)),
        ],
        out_specs=(pl.BlockSpec((1, mid, N), lambda b: (b, 0, 0)),
                   pl.BlockSpec((1, ncls, N), lambda b: (b, 0, 0)),
                   pl.BlockSpec((1, ncls, keyc), lambda b: (b, 0, 0)),
                   pl.BlockSpec((1, ncls, keyc), lambda b: (b, 0, 0))),
        scratch_shapes=[pltpu.VMEM((N, 9 * cin), jnp.bfloat16)],
        compiler_params=pltpu.CompilerParams(
            dimension_semantics=("parallel",),
            vmem_limit_bytes=_vmem_limit_bytes()),
    )(xp, wbig, bbig, wa2, ba2, wo1, bo1, wo2, bo2, wd, bd)


# ---------------------------------------------------------------------------
# Kernel 3: f_pixel -> object attention -> f_up -> ocr_fuse (split weights, no
# cat) -> cls_head. Everything stays in "channels x pixels" layout: lane-dense
# compute and lane-dense stores for feats/ocr/cls; only NN/NT/TN dot_generals.
# ---------------------------------------------------------------------------
def _pixel_attn_fuse_kernel(featsT_ref, key_ref, val_ref, wp1_ref, bp1_ref,
                            wp2_ref, bp2_ref, wu_ref, bu_ref, wfa_ref, wfb_ref,
                            bfr_ref, wc_ref, bc_ref, ocr_ref, cls_ref):
    ft = featsT_ref[0]                                    # (mid, tile_n) bf16

    # f_pixel: two 1x1+BNReLU (KEY**-0.5 folded into wp2/bp2).
    q = jnp.maximum(
        jax.lax.dot_general(wp1_ref[...], ft, (((0,), (0,)), ((), ())),
                            preferred_element_type=jnp.float32) + bp1_ref[...], 0.0)
    q = jnp.maximum(
        jax.lax.dot_general(wp2_ref[...], q.astype(jnp.bfloat16),
                            (((0,), (0,)), ((), ())),
                            preferred_element_type=jnp.float32) + bp2_ref[...], 0.0)

    # Object attention: sim is (ncls, tile_n) -> lane-dense; the class softmax
    # is a cheap reduction over 4 sublane rows.
    sim = jnp.dot(key_ref[0], q.astype(jnp.bfloat16),
                  preferred_element_type=jnp.float32)     # (ncls, tile_n)
    sim = sim - jnp.max(sim, axis=0, keepdims=True)
    e = jnp.exp(sim)
    pr = e * pl.reciprocal(jnp.sum(e, axis=0, keepdims=True), approx=True)

    attn = jax.lax.dot_general(val_ref[0], pr.astype(jnp.bfloat16),
                               (((0,), (0,)), ((), ())),
                               preferred_element_type=jnp.float32)     # (KEY, tile_n)

    ctx = jnp.maximum(
        jax.lax.dot_general(wu_ref[...], attn.astype(jnp.bfloat16),
                            (((0,), (0,)), ((), ())),
                            preferred_element_type=jnp.float32) + bu_ref[...], 0.0)

    # ocr_fuse: cat([context, feats]) @ W  ==  W_a^T.ctx + W_b^T.feats (no cat).
    fuse = (jax.lax.dot_general(wfa_ref[...], ctx.astype(jnp.bfloat16),
                                (((0,), (0,)), ((), ())),
                                preferred_element_type=jnp.float32)
            + jax.lax.dot_general(wfb_ref[...], ft, (((0,), (0,)), ((), ())),
                                  preferred_element_type=jnp.float32)
            + bfr_ref[...])
    ocr = jnp.maximum(fuse, 0.0)                          # Dropout2d = identity (eval)
    ocr_ref[0] = ocr.astype(ocr_ref.dtype)                # bf16, (mid, tile_n)

    cls_ref[0] = (jax.lax.dot_general(wc_ref[...], ocr.astype(jnp.bfloat16),
                                      (((0,), (0,)), ((), ())),
                                      preferred_element_type=jnp.float32)
                  + bc_ref[...])                          # (ncls, tile_n) f32


def pixel_attention_fuse(featsT, key_kv, val_kv, wp1, bp1, wp2, bp2,
                         wu, bu, wfa, wfb, bfr, wc, bc, *, tile_n):
    B, mid, Np = featsT.shape
    ncls, keyc = key_kv.shape[1], key_kv.shape[2]
    nt = Np // tile_n

    def wspec(shape):
        return pl.BlockSpec(shape, lambda t, b: (0, 0))

    return pl.pallas_call(
        _pixel_attn_fuse_kernel,
        out_shape=(jax.ShapeDtypeStruct((B, mid, Np), jnp.bfloat16),
                   jax.ShapeDtypeStruct((B, ncls, Np), jnp.float32)),
        grid=(nt, B),          # pixel-tile axis leads: splits across v7x's 2 TCs even at B=1
        in_specs=[
            pl.BlockSpec((1, mid, tile_n), lambda t, b: (b, 0, t)),
            pl.BlockSpec((1, ncls, keyc), lambda t, b: (b, 0, 0)),
            pl.BlockSpec((1, ncls, keyc), lambda t, b: (b, 0, 0)),
            wspec((mid, keyc)), wspec((keyc, 1)),
            wspec((keyc, keyc)), wspec((keyc, 1)),
            wspec((keyc, mid)), wspec((mid, 1)),
            wspec((mid, mid)), wspec((mid, mid)), wspec((mid, 1)),
            wspec((mid, ncls)), wspec((ncls, 1)),
        ],
        out_specs=(pl.BlockSpec((1, mid, tile_n), lambda t, b: (b, 0, t)),
                   pl.BlockSpec((1, ncls, tile_n), lambda t, b: (b, 0, t))),
        compiler_params=pltpu.CompilerParams(
            dimension_semantics=("parallel", "parallel"),
            vmem_limit_bytes=_vmem_limit_bytes()),
    )(featsT, key_kv, val_kv, wp1, bp1, wp2, bp2, wu, bu, wfa, wfb, bfr, wc, bc)


# ---------------------------------------------------------------------------
# Deterministic synthetic parameters (inference BatchNorm folded into conv)
# ---------------------------------------------------------------------------
def make_conv(key, cin, cout, taps=1, bn=True, bias=True):
    ks = jax.random.split(key, 6)
    shape = (taps, cin, cout) if taps > 1 else (cin, cout)
    w = jax.random.normal(ks[0], shape, jnp.float32) * ((cin * taps) ** -0.5)
    b = (0.05 * jax.random.normal(ks[1], (cout,), jnp.float32) if bias
         else jnp.zeros((cout,), jnp.float32))
    if bn:
        gamma = 1.0 + 0.1 * jax.random.normal(ks[2], (cout,), jnp.float32)
        beta = 0.1 * jax.random.normal(ks[3], (cout,), jnp.float32)
        mean = 0.1 * jax.random.normal(ks[4], (cout,), jnp.float32)
        var = 1.0 + 0.5 * jax.random.uniform(ks[5], (cout,), jnp.float32)
        s = gamma * jax.lax.rsqrt(var + BN_EPS)
        w = w * s
        b = (b - mean) * s + beta
    return w, b


def _prep_row(w, b):
    # bf16 weight for the MXU, f32 row bias (added after f32 accumulation).
    return w.astype(jnp.bfloat16), b.reshape(1, -1).astype(jnp.float32)


def _prep_col(w, b):
    # bf16 weight, f32 column bias (transposed "channels x pixels" layout).
    return w.astype(jnp.bfloat16), b.reshape(-1, 1).astype(jnp.float32)


def init_params(key):
    keys = iter(jax.random.split(key, 12))
    cin = HIGH_LEVEL_CH
    p = {}

    # Combined conv3x3_ocr + aux conv1 weight, output-channel-major (Cout, 9*cin):
    # the aux 1x1 occupies extra output rows whose only nonzero input rows are
    # the center tap (tap index 4).
    w3, b3 = make_conv(next(keys), cin, MID, taps=9, bn=True, bias=True)
    wa1, ba1 = make_conv(next(keys), cin, cin, bn=True, bias=True)
    w3_flat = w3.reshape(9 * cin, MID)
    wa1_pad = jnp.zeros((9 * cin, cin), jnp.float32).at[4 * cin:5 * cin].set(wa1)
    wbig = jnp.concatenate([w3_flat, wa1_pad], axis=1).T          # (MID+cin, 9*cin)
    bbig = jnp.concatenate([b3, ba1]).reshape(-1, 1)
    p['conv_aux'] = (wbig.astype(jnp.bfloat16), bbig.astype(jnp.float32))

    p['aux2'] = _prep_col(*make_conv(next(keys), cin, NUM_CLASSES,
                                     bn=False, bias=True))
    p['f_object1'] = _prep_row(*make_conv(next(keys), MID, KEY, bn=True, bias=False))
    p['f_object2'] = _prep_row(*make_conv(next(keys), KEY, KEY, bn=True, bias=False))
    p['f_down'] = _prep_row(*make_conv(next(keys), MID, KEY, bn=True, bias=False))

    p['f_pixel1'] = _prep_col(*make_conv(next(keys), MID, KEY, bn=True, bias=False))
    wp2, bp2 = make_conv(next(keys), KEY, KEY, bn=True, bias=False)
    scale = KEY ** -0.5          # fold attention scale (ReLU is pos-homogeneous)
    p['f_pixel2'] = _prep_col(wp2 * scale, bp2 * scale)
    p['f_up'] = _prep_col(*make_conv(next(keys), KEY, MID, bn=True, bias=False))

    wf, bf = make_conv(next(keys), 2 * MID, MID, bn=True, bias=False)
    p['ocr_fuse'] = (wf[:MID].astype(jnp.bfloat16),   # half applied to context
                     wf[MID:].astype(jnp.bfloat16),   # half applied to feats
                     bf.reshape(-1, 1).astype(jnp.float32))
    p['cls_head'] = _prep_col(*make_conv(next(keys), MID, NUM_CLASSES,
                                         bn=False, bias=True))
    return p


# ---------------------------------------------------------------------------
# Forward (mirrors OCR_block.forward, eval mode)
# ---------------------------------------------------------------------------
def ocr_block_forward(params, high_level_features, *, tile_n=256):
    # NCHW -> NHWC + bf16 cast + 1-px pad: one fused XLA pass over the input;
    # the kernels then see a bf16 activation (half the HBM bytes of f32).
    x = jnp.transpose(high_level_features, (0, 2, 3, 1)).astype(jnp.bfloat16)
    B, H, W, _ = x.shape
    N = H * W
    xp = jnp.pad(x, ((0, 0), (1, 1), (1, 1), (0, 0)))

    wbig, bbig = params['conv_aux']
    wa2, ba2 = params['aux2']
    wo1, bo1 = params['f_object1']
    wo2, bo2 = params['f_object2']
    wd, bd = params['f_down']
    featsT, aux_t, key_kv, val_kv = conv_aux_gather(
        xp, wbig, bbig, wa2, ba2, wo1, bo1, wo2, bo2, wd, bd, H=H, W=W)

    # Pad the pixel axis to a multiple of tile_n (tile_n is a 128 multiple so K3's
    # stores stay lane-dense); never silently fall back to a whole-image tile.
    tile_n = max(128, (tile_n // 128) * 128)
    tile_n = min(tile_n, pl.cdiv(N, 128) * 128)
    n_pad = pl.cdiv(N, tile_n) * tile_n
    if n_pad != N:
        featsT = jnp.pad(featsT, ((0, 0), (0, 0), (0, n_pad - N)))

    wp1, bp1 = params['f_pixel1']
    wp2, bp2 = params['f_pixel2']
    wu, bu = params['f_up']
    wfa, wfb, bfr = params['ocr_fuse']
    wc, bc = params['cls_head']
    ocrT, clsT = pixel_attention_fuse(
        featsT, key_kv, val_kv, wp1, bp1, wp2, bp2, wu, bu,
        wfa, wfb, bfr, wc, bc, tile_n=tile_n)

    # Channel-major (B, C, N) kernel outputs -> NCHW via free reshapes (no transposes).
    cls_out = clsT[:, :, :N].reshape(B, NUM_CLASSES, H, W)
    aux_out = aux_t.reshape(B, NUM_CLASSES, H, W)
    ocr_feats = ocrT[:, :, :N].reshape(B, MID, H, W)      # bf16 writeback
    return cls_out, aux_out, ocr_feats


# ---------------------------------------------------------------------------
if __name__ == "__main__":
    key = jax.random.PRNGKey(0)
    kp, kx = jax.random.split(key)
    params = init_params(kp)
    high_level_features = jax.random.normal(
        kx, (2, HIGH_LEVEL_CH, 16, 16), jnp.float32)      # NCHW, like PyTorch

    fwd = jax.jit(ocr_block_forward)
    cls_out, aux_out, ocr_feats = fwd(params, high_level_features)
    jax.block_until_ready((cls_out, aux_out, ocr_feats))

    assert cls_out.shape == (2, NUM_CLASSES, 16, 16)
    assert aux_out.shape == (2, NUM_CLASSES, 16, 16)
    assert ocr_feats.shape == (2, MID, 16, 16)
    assert bool(jnp.all(jnp.isfinite(cls_out)))
    assert bool(jnp.all(jnp.isfinite(aux_out)))
    assert bool(jnp.all(jnp.isfinite(ocr_feats.astype(jnp.float32))))
    print("KERNEL_OK")
</pallas_src>

<mosaic_0001>
module attributes {stable_mosaic.version = 11 : i64} {
  func.func @_conv_aux_gather_kernel(%arg0: i32, %arg1: memref<1x18x18x64xbf16, #tpu.memory_space<vmem>>, %arg2: memref<128x576xbf16, #tpu.memory_space<vmem>>, %arg3: memref<128x1xf32, #tpu.memory_space<vmem>>, %arg4: memref<64x4xbf16, #tpu.memory_space<vmem>>, %arg5: memref<4x1xf32, #tpu.memory_space<vmem>>, %arg6: memref<64x32xbf16, #tpu.memory_space<vmem>>, %arg7: memref<1x32xf32, #tpu.memory_space<vmem>>, %arg8: memref<32x32xbf16, #tpu.memory_space<vmem>>, %arg9: memref<1x32xf32, #tpu.memory_space<vmem>>, %arg10: memref<64x32xbf16, #tpu.memory_space<vmem>>, %arg11: memref<1x32xf32, #tpu.memory_space<vmem>>, %arg12: memref<1x64x256xbf16, #tpu.memory_space<vmem>>, %arg13: memref<1x4x256xf32, #tpu.memory_space<vmem>>, %arg14: memref<1x4x32xbf16, #tpu.memory_space<vmem>>, %arg15: memref<1x4x32xbf16, #tpu.memory_space<vmem>>, %arg16: memref<256x576xbf16, #tpu.memory_space<vmem>>) attributes {dimension_semantics = [#tpu.dimension_semantics<parallel>], iteration_bounds = array<i64: 2>, scalar_prefetch = 0 : i64, scratch_operands = 1 : i64, tpu.core_type = #tpu.core_type<tc>, window_params = [{transform_indices = @transform_0, window_bounds = array<i64: 1, 18, 18, 64>}, {pipeline_mode = #tpu.pipeline_mode<synchronous>, transform_indices = @transform_1, window_bounds = array<i64: 128, 576>}, {pipeline_mode = #tpu.pipeline_mode<synchronous>, transform_indices = @transform_2, window_bounds = array<i64: 128, 1>}, {pipeline_mode = #tpu.pipeline_mode<synchronous>, transform_indices = @transform_3, window_bounds = array<i64: 64, 4>}, {pipeline_mode = #tpu.pipeline_mode<synchronous>, transform_indices = @transform_4, window_bounds = array<i64: 4, 1>}, {pipeline_mode = #tpu.pipeline_mode<synchronous>, transform_indices = @transform_5, window_bounds = array<i64: 64, 32>}, {pipeline_mode = #tpu.pipeline_mode<synchronous>, transform_indices = @transform_6, window_bounds = array<i64: 1, 32>}, {pipeline_mode = #tpu.pipeline_mode<synchronous>, transform_indices = @transform_7, window_bounds = array<i64: 32, 32>}, {pipeline_mode = #tpu.pipeline_mode<synchronous>, transform_indices = @transform_8, window_bounds = array<i64: 1, 32>}, {pipeline_mode = #tpu.pipeline_mode<synchronous>, transform_indices = @transform_9, window_bounds = array<i64: 64, 32>}, {pipeline_mode = #tpu.pipeline_mode<synchronous>, transform_indices = @transform_10, window_bounds = array<i64: 1, 32>}, {transform_indices = @transform_11, window_bounds = array<i64: 1, 64, 256>}, {transform_indices = @transform_12, window_bounds = array<i64: 1, 4, 256>}, {transform_indices = @transform_13, window_bounds = array<i64: 1, 4, 32>}, {transform_indices = @transform_14, window_bounds = array<i64: 1, 4, 32>}]} {
    %c0 = arith.constant 0 : index
    %c0_0 = arith.constant 0 : index
    %c0_1 = arith.constant 0 : index
    %c0_2 = arith.constant 0 : index
    %0 = vector.load %arg1[%c0, %c0_0, %c0_1, %c0_2] : memref<1x18x18x64xbf16, #tpu.memory_space<vmem>>, vector<1x18x18x64xbf16>
    %1 = vector.shape_cast %0 : vector<1x18x18x64xbf16> to vector<18x18x64xbf16>
    %2 = arith.extf %1 : vector<18x18x64xbf16> to vector<18x18x64xf32>
    %3 = vector.extract_strided_slice %2 {offsets = [0, 0, 0], sizes = [16, 16, 64], strides = [1, 1, 1]} : vector<18x18x64xf32> to vector<16x16x64xf32>
    %4 = vector.shape_cast %3 : vector<16x16x64xf32> to vector<256x64xf32>
    %5 = arith.truncf %4 : vector<256x64xf32> to vector<256x64xbf16>
    %c0_3 = arith.constant 0 : index
    %c0_4 = arith.constant 0 : index
    %6 = vector.load %arg16[%c0_3, %c0_4] : memref<256x576xbf16, #tpu.memory_space<vmem>>, vector<256x64xbf16>
    tpu.vector_store %arg16[%c0_3, %c0_4], %5 {strides = array<i32>} : memref<256x576xbf16, #tpu.memory_space<vmem>>, vector<256x64xbf16>,
    %7 = vector.extract_strided_slice %2 {offsets = [0, 1, 0], sizes = [16, 16, 64], strides = [1, 1, 1]} : vector<18x18x64xf32> to vector<16x16x64xf32>
    %8 = vector.shape_cast %7 : vector<16x16x64xf32> to vector<256x64xf32>
    %9 = arith.truncf %8 : vector<256x64xf32> to vector<256x64xbf16>
    %c0_5 = arith.constant 0 : index
    %c64 = arith.constant 64 : index
    %10 = vector.load %arg16[%c0_5, %c64] : memref<256x576xbf16, #tpu.memory_space<vmem>>, vector<256x64xbf16>
    tpu.vector_store %arg16[%c0_5, %c64], %9 {strides = array<i32>} : memref<256x576xbf16, #tpu.memory_space<vmem>>, vector<256x64xbf16>,
    %11 = vector.extract_strided_slice %2 {offsets = [0, 2, 0], sizes = [16, 16, 64], strides = [1, 1, 1]} : vector<18x18x64xf32> to vector<16x16x64xf32>
    %12 = vector.shape_cast %11 : vector<16x16x64xf32> to vector<256x64xf32>
    %13 = arith.truncf %12 : vector<256x64xf32> to vector<256x64xbf16>
    %c0_6 = arith.constant 0 : index
    %c128 = arith.constant 128 : index
    %14 = vector.load %arg16[%c0_6, %c128] : memref<256x576xbf16, #tpu.memory_space<vmem>>, vector<256x64xbf16>
    tpu.vector_store %arg16[%c0_6, %c128], %13 {strides = array<i32>} : memref<256x576xbf16, #tpu.memory_space<vmem>>, vector<256x64xbf16>,
    %15 = vector.extract_strided_slice %2 {offsets = [1, 0, 0], sizes = [16, 16, 64], strides = [1, 1, 1]} : vector<18x18x64xf32> to vector<16x16x64xf32>
    %16 = vector.shape_cast %15 : vector<16x16x64xf32> to vector<256x64xf32>
    %17 = arith.truncf %16 : vector<256x64xf32> to vector<256x64xbf16>
    %c0_7 = arith.constant 0 : index
    %c192 = arith.constant 192 : index
    %18 = vector.load %arg16[%c0_7, %c192] : memref<256x576xbf16, #tpu.memory_space<vmem>>, vector<256x64xbf16>
    tpu.vector_store %arg16[%c0_7, %c192], %17 {strides = array<i32>} : memref<256x576xbf16, #tpu.memory_space<vmem>>, vector<256x64xbf16>,
    %19 = vector.extract_strided_slice %2 {offsets = [1, 1, 0], sizes = [16, 16, 64], strides = [1, 1, 1]} : vector<18x18x64xf32> to vector<16x16x64xf32>
    %20 = vector.shape_cast %19 : vector<16x16x64xf32> to vector<256x64xf32>
    %21 = arith.truncf %20 : vector<256x64xf32> to vector<256x64xbf16>
    %c0_8 = arith.constant 0 : index
    %c256 = arith.constant 256 : index
    %22 = vector.load %arg16[%c0_8, %c256] : memref<256x576xbf16, #tpu.memory_space<vmem>>, vector<256x64xbf16>
    tpu.vector_store %arg16[%c0_8, %c256], %21 {strides = array<i32>} : memref<256x576xbf16, #tpu.memory_space<vmem>>, vector<256x64xbf16>,
    %23 = vector.extract_strided_slice %2 {offsets = [1, 2, 0], sizes = [16, 16, 64], strides = [1, 1, 1]} : vector<18x18x64xf32> to vector<16x16x64xf32>
    %24 = vector.shape_cast %23 : vector<16x16x64xf32> to vector<256x64xf32>
    %25 = arith.truncf %24 : vector<256x64xf32> to vector<256x64xbf16>
    %c0_9 = arith.constant 0 : index
    %c320 = arith.constant 320 : index
    %26 = vector.load %arg16[%c0_9, %c320] : memref<256x576xbf16, #tpu.memory_space<vmem>>, vector<256x64xbf16>
    tpu.vector_store %arg16[%c0_9, %c320], %25 {strides = array<i32>} : memref<256x576xbf16, #tpu.memory_space<vmem>>, vector<256x64xbf16>,
    %27 = vector.extract_strided_slice %2 {offsets = [2, 0, 0], sizes = [16, 16, 64], strides = [1, 1, 1]} : vector<18x18x64xf32> to vector<16x16x64xf32>
    %28 = vector.shape_cast %27 : vector<16x16x64xf32> to vector<256x64xf32>
    %29 = arith.truncf %28 : vector<256x64xf32> to vector<256x64xbf16>
    %c0_10 = arith.constant 0 : index
    %c384 = arith.constant 384 : index
    %30 = vector.load %arg16[%c0_10, %c384] : memref<256x576xbf16, #tpu.memory_space<vmem>>, vector<256x64xbf16>
    tpu.vector_store %arg16[%c0_10, %c384], %29 {strides = array<i32>} : memref<256x576xbf16, #tpu.memory_space<vmem>>, vector<256x64xbf16>,
    %31 = vector.extract_strided_slice %2 {offsets = [2, 1, 0], sizes = [16, 16, 64], strides = [1, 1, 1]} : vector<18x18x64xf32> to vector<16x16x64xf32>
    %32 = vector.shape_cast %31 : vector<16x16x64xf32> to vector<256x64xf32>
    %33 = arith.truncf %32 : vector<256x64xf32> to vector<256x64xbf16>
    %c0_11 = arith.constant 0 : index
    %c448 = arith.constant 448 : index
    %34 = vector.load %arg16[%c0_11, %c448] : memref<256x576xbf16, #tpu.memory_space<vmem>>, vector<256x64xbf16>
    tpu.vector_store %arg16[%c0_11, %c448], %33 {strides = array<i32>} : memref<256x576xbf16, #tpu.memory_space<vmem>>, vector<256x64xbf16>,
    %35 = vector.extract_strided_slice %2 {offsets = [2, 2, 0], sizes = [16, 16, 64], strides = [1, 1, 1]} : vector<18x18x64xf32> to vector<16x16x64xf32>
    %36 = vector.shape_cast %35 : vector<16x16x64xf32> to vector<256x64xf32>
    %37 = arith.truncf %36 : vector<256x64xf32> to vector<256x64xbf16>
    %c0_12 = arith.constant 0 : index
    %c512 = arith.constant 512 : index
    %38 = vector.load %arg16[%c0_12, %c512] : memref<256x576xbf16, #tpu.memory_space<vmem>>, vector<256x64xbf16>
    tpu.vector_store %arg16[%c0_12, %c512], %37 {strides = array<i32>} : memref<256x576xbf16, #tpu.memory_space<vmem>>, vector<256x64xbf16>,
    %c0_13 = arith.constant 0 : index
    %c0_14 = arith.constant 0 : index
    %39 = vector.load %arg16[%c0_13, %c0_14] : memref<256x576xbf16, #tpu.memory_space<vmem>>, vector<256x576xbf16>
    %c0_15 = arith.constant 0 : index
    %c0_16 = arith.constant 0 : index
    %40 = vector.load %arg2[%c0_15, %c0_16] : memref<128x576xbf16, #tpu.memory_space<vmem>>, vector<128x576xbf16>
    %cst = arith.constant dense<0.000000e+00> : vector<128x256xf32>
    %41 = tpu.matmul %40, %39, %cst {dimension_numbers = #tpu.dot_dimension_numbers<[1], [1], [0], [0], [0, 0, 1, 0], [], []>} : vector<128x576xbf16>, vector<256x576xbf16>, vector<128x256xf32> -> vector<128x256xf32>
    %c0_17 = arith.constant 0 : index
    %c0_18 = arith.constant 0 : index
    %42 = vector.load %arg3[%c0_17, %c0_18] : memref<128x1xf32, #tpu.memory_space<vmem>>, vector<128x1xf32>
    %43 = vector.broadcast %42 : vector<128x1xf32> to vector<128x256xf32>
    %44 = arith.addf %41, %43 : vector<128x256xf32>
    %cst_19 = arith.constant 0.000000e+00 : f32
    %45 = vector.broadcast %cst_19 : f32 to vector<128x256xf32>
    %46 = arith.maximumf %44, %45 : vector<128x256xf32>
    %47 = vector.extract_strided_slice %46 {offsets = [0, 0], sizes = [64, 256], strides = [1, 1]} : vector<128x256xf32> to vector<64x256xf32>
    %48 = vector.extract_strided_slice %46 {offsets = [64, 0], sizes = [64, 256], strides = [1, 1]} : vector<128x256xf32> to vector<64x256xf32>
    %49 = arith.truncf %47 : vector<64x256xf32> to vector<64x256xbf16>
    %c0_20 = arith.constant 0 : index
    %c0_21 = arith.constant 0 : index
    %c0_22 = arith.constant 0 : index
    %50 = vector.load %arg12[%c0_20, %c0_21, %c0_22] : memref<1x64x256xbf16, #tpu.memory_space<vmem>>, vector<1x64x256xbf16>
    %51 = vector.shape_cast %50 : vector<1x64x256xbf16> to vector<64x256xbf16>
    %52 = vector.shape_cast %49 : vector<64x256xbf16> to vector<1x64x256xbf16>
    tpu.vector_store %arg12[%c0_20, %c0_21, %c0_22], %52 {strides = array<i32>} : memref<1x64x256xbf16, #tpu.memory_space<vmem>>, vector<1x64x256xbf16>,
    %c0_23 = arith.constant 0 : index
    %c0_24 = arith.constant 0 : index
    %53 = vector.load %arg4[%c0_23, %c0_24] : memref<64x4xbf16, #tpu.memory_space<vmem>>, vector<64x4xbf16>
    %54 = arith.truncf %48 : vector<64x256xf32> to vector<64x256xbf16>
    %cst_25 = arith.constant dense<0.000000e+00> : vector<4x256xf32>
    %55 = tpu.matmul %53, %54, %cst_25 {dimension_numbers = #tpu.dot_dimension_numbers<[0], [0], [1], [1], [0, 1, 1, 1], [], []>} : vector<64x4xbf16>, vector<64x256xbf16>, vector<4x256xf32> -> vector<4x256xf32>
    %c0_26 = arith.constant 0 : index
    %c0_27 = arith.constant 0 : index
    %56 = vector.load %arg5[%c0_26, %c0_27] : memref<4x1xf32, #tpu.memory_space<vmem>>, vector<4x1xf32>
    %57 = vector.broadcast %56 : vector<4x1xf32> to vector<4x256xf32>
    %58 = arith.addf %55, %57 : vector<4x256xf32>
    %c0_28 = arith.constant 0 : index
    %c0_29 = arith.constant 0 : index
    %c0_30 = arith.constant 0 : index
    %59 = vector.load %arg13[%c0_28, %c0_29, %c0_30] : memref<1x4x256xf32, #tpu.memory_space<vmem>>, vector<1x4x256xf32>
    %60 = vector.shape_cast %59 : vector<1x4x256xf32> to vector<4x256xf32>
    %61 = vector.shape_cast %58 : vector<4x256xf32> to vector<1x4x256xf32>
    tpu.vector_store %arg13[%c0_28, %c0_29, %c0_30], %61 {strides = array<i32>} : memref<1x4x256xf32, #tpu.memory_space<vmem>>, vector<1x4x256xf32>,
    %cst_31 = arith.constant dense<0xFF800000> : vector<4xf32>
    %62 = vector.multi_reduction <maximumf>, %58, %cst_31 [1] : vector<4x256xf32> to vector<4xf32>
    %63 = vector.shape_cast %62 : vector<4xf32> to vector<4x1xf32>
    %64 = vector.broadcast %63 : vector<4x1xf32> to vector<4x256xf32>
    %65 = arith.subf %58, %64 : vector<4x256xf32>
    %66 = math.exp %65 : vector<4x256xf32>
    %cst_32 = arith.constant dense<0.000000e+00> : vector<4xf32>
    %67 = vector.multi_reduction <add>, %66, %cst_32 [1] : vector<4x256xf32> to vector<4xf32>
    %68 = vector.shape_cast %67 : vector<4xf32> to vector<4x1xf32>
    %69 = tpu.reciprocal %68 {approx = true} : vector<4x1xf32> -> vector<4x1xf32>
    %70 = vector.broadcast %69 : vector<4x1xf32> to vector<4x256xf32>
    %71 = arith.mulf %66, %70 : vector<4x256xf32>
    %cst_33 = arith.constant dense<0.000000e+00> : vector<4x64xf32>
    %72 = tpu.matmul %71, %47, %cst_33 {dimension_numbers = #tpu.dot_dimension_numbers<[1], [1], [0], [0], [0, 0, 1, 0], [], []>} : vector<4x256xf32>, vector<64x256xf32>, vector<4x64xf32> -> vector<4x64xf32>
    %73 = arith.truncf %72 : vector<4x64xf32> to vector<4x64xbf16>
    %c0_34 = arith.constant 0 : index
    %c0_35 = arith.constant 0 : index
    %74 = vector.load %arg6[%c0_34, %c0_35] : memref<64x32xbf16, #tpu.memory_space<vmem>>, vector<64x32xbf16>
    %cst_36 = arith.constant dense<0.000000e+00> : vector<4x32xf32>
    %75 = tpu.matmul %73, %74, %cst_36 {dimension_numbers = #tpu.dot_dimension_numbers<[1], [0], [0], [1], [0, 0, 1, 1], [], []>} : vector<4x64xbf16>, vector<64x32xbf16>, vector<4x32xf32> -> vector<4x32xf32>
    %c0_37 = arith.constant 0 : index
    %c0_38 = arith.constant 0 : index
    %76 = vector.load %arg7[%c0_37, %c0_38] : memref<1x32xf32, #tpu.memory_space<vmem>>, vector<1x32xf32>
    %77 = vector.broadcast %76 : vector<1x32xf32> to vector<4x32xf32>
    %78 = arith.addf %75, %77 : vector<4x32xf32>
    %cst_39 = arith.constant 0.000000e+00 : f32
    %79 = vector.broadcast %cst_39 : f32 to vector<4x32xf32>
    %80 = arith.maximumf %78, %79 : vector<4x32xf32>
    %81 = arith.truncf %80 : vector<4x32xf32> to vector<4x32xbf16>
    %c0_40 = arith.constant 0 : index
    %c0_41 = arith.constant 0 : index
    %82 = vector.load %arg8[%c0_40, %c0_41] : memref<32x32xbf16, #tpu.memory_space<vmem>>, vector<32x32xbf16>
    %cst_42 = arith.constant dense<0.000000e+00> : vector<4x32xf32>
    %83 = tpu.matmul %81, %82, %cst_42 {dimension_numbers = #tpu.dot_dimension_numbers<[1], [0], [0], [1], [0, 0, 1, 1], [], []>} : vector<4x32xbf16>, vector<32x32xbf16>, vector<4x32xf32> -> vector<4x32xf32>
    %c0_43 = arith.constant 0 : index
    %c0_44 = arith.constant 0 : index
    %84 = vector.load %arg9[%c0_43, %c0_44] : memref<1x32xf32, #tpu.memory_space<vmem>>, vector<1x32xf32>
    %85 = vector.broadcast %84 : vector<1x32xf32> to vector<4x32xf32>
    %86 = arith.addf %83, %85 : vector<4x32xf32>
    %cst_45 = arith.constant 0.000000e+00 : f32
    %87 = vector.broadcast %cst_45 : f32 to vector<4x32xf32>
    %88 = arith.maximumf %86, %87 : vector<4x32xf32>
    %89 = arith.truncf %72 : vector<4x64xf32> to vector<4x64xbf16>
    %c0_46 = arith.constant 0 : index
    %c0_47 = arith.constant 0 : index
    %90 = vector.load %arg10[%c0_46, %c0_47] : memref<64x32xbf16, #tpu.memory_space<vmem>>, vector<64x32xbf16>
    %cst_48 = arith.constant dense<0.000000e+00> : vector<4x32xf32>
    %91 = tpu.matmul %89, %90, %cst_48 {dimension_numbers = #tpu.dot_dimension_numbers<[1], [0], [0], [1], [0, 0, 1, 1], [], []>} : vector<4x64xbf16>, vector<64x32xbf16>, vector<4x32xf32> -> vector<4x32xf32>
    %c0_49 = arith.constant 0 : index
    %c0_50 = arith.constant 0 : index
    %92 = vector.load %arg11[%c0_49, %c0_50] : memref<1x32xf32, #tpu.memory_space<vmem>>, vector<1x32xf32>
    %93 = vector.broadcast %92 : vector<1x32xf32> to vector<4x32xf32>
    %94 = arith.addf %91, %93 : vector<4x32xf32>
    %cst_51 = arith.constant 0.000000e+00 : f32
    %95 = vector.broadcast %cst_51 : f32 to vector<4x32xf32>
    %96 = arith.maximumf %94, %95 : vector<4x32xf32>
    %97 = arith.truncf %88 : vector<4x32xf32> to vector<4x32xbf16>
    %c0_52 = arith.constant 0 : index
    %c0_53 = arith.constant 0 : index
    %c0_54 = arith.constant 0 : index
    %98 = vector.load %arg14[%c0_52, %c0_53, %c0_54] : memref<1x4x32xbf16, #tpu.memory_space<vmem>>, vector<1x4x32xbf16>
    %99 = vector.shape_cast %98 : vector<1x4x32xbf16> to vector<4x32xbf16>
    %100 = vector.shape_cast %97 : vector<4x32xbf16> to vector<1x4x32xbf16>
    tpu.vector_store %arg14[%c0_52, %c0_53, %c0_54], %100 {strides = array<i32>} : memref<1x4x32xbf16, #tpu.memory_space<vmem>>, vector<1x4x32xbf16>,
    %101 = arith.truncf %96 : vector<4x32xf32> to vector<4x32xbf16>
    %c0_55 = arith.constant 0 : index
    %c0_56 = arith.constant 0 : index
    %c0_57 = arith.constant 0 : index
    %102 = vector.load %arg15[%c0_55, %c0_56, %c0_57] : memref<1x4x32xbf16, #tpu.memory_space<vmem>>, vector<1x4x32xbf16>
    %103 = vector.shape_cast %102 : vector<1x4x32xbf16> to vector<4x32xbf16>
    %104 = vector.shape_cast %101 : vector<4x32xbf16> to vector<1x4x32xbf16>
    tpu.vector_store %arg15[%c0_55, %c0_56, %c0_57], %104 {strides = array<i32>} : memref<1x4x32xbf16, #tpu.memory_space<vmem>>, vector<1x4x32xbf16>,
    return
  }
  func.func @transform_0(%arg0: i32) -> (i32, i32, i32, i32) {
    %c0_i32 = arith.constant 0 : i32
    %c0_i32_0 = arith.constant 0 : i32
    %c0_i32_1 = arith.constant 0 : i32
    %c0_i32_2 = arith.constant 0 : i32
    return %arg0, %c0_i32, %c0_i32_0, %c0_i32_1 : i32, i32, i32, i32
  }
  func.func @transform_1(%arg0: i32) -> (i32, i32) {
    %c0_i32 = arith.constant 0 : i32
    %c0_i32_0 = arith.constant 0 : i32
    %c0_i32_1 = arith.constant 0 : i32
    return %c0_i32, %c0_i32_0 : i32, i32
  }
  func.func @transform_2(%arg0: i32) -> (i32, i32) {
    %c0_i32 = arith.constant 0 : i32
    %c0_i32_0 = arith.constant 0 : i32
    %c0_i32_1 = arith.constant 0 : i32
    return %c0_i32, %c0_i32_0 : i32, i32
  }
  func.func @transform_3(%arg0: i32) -> (i32, i32) {
    %c0_i32 = arith.constant 0 : i32
    %c0_i32_0 = arith.constant 0 : i32
    %c0_i32_1 = arith.constant 0 : i32
    return %c0_i32, %c0_i32_0 : i32, i32
  }
  func.func @transform_4(%arg0: i32) -> (i32, i32) {
    %c0_i32 = arith.constant 0 : i32
    %c0_i32_0 = arith.constant 0 : i32
    %c0_i32_1 = arith.constant 0 : i32
    return %c0_i32, %c0_i32_0 : i32, i32
  }
  func.func @transform_5(%arg0: i32) -> (i32, i32) {
    %c0_i32 = arith.constant 0 : i32
    %c0_i32_0 = arith.constant 0 : i32
    %c0_i32_1 = arith.constant 0 : i32
    return %c0_i32, %c0_i32_0 : i32, i32
  }
  func.func @transform_6(%arg0: i32) -> (i32, i32) {
    %c0_i32 = arith.constant 0 : i32
    %c0_i32_0 = arith.constant 0 : i32
    %c0_i32_1 = arith.constant 0 : i32
    return %c0_i32, %c0_i32_0 : i32, i32
  }
  func.func @transform_7(%arg0: i32) -> (i32, i32) {
    %c0_i32 = arith.constant 0 : i32
    %c0_i32_0 = arith.constant 0 : i32
    %c0_i32_1 = arith.constant 0 : i32
    return %c0_i32, %c0_i32_0 : i32, i32
  }
  func.func @transform_8(%arg0: i32) -> (i32, i32) {
    %c0_i32 = arith.constant 0 : i32
    %c0_i32_0 = arith.constant 0 : i32
    %c0_i32_1 = arith.constant 0 : i32
    return %c0_i32, %c0_i32_0 : i32, i32
  }
  func.func @transform_9(%arg0: i32) -> (i32, i32) {
    %c0_i32 = arith.constant 0 : i32
    %c0_i32_0 = arith.constant 0 : i32
    %c0_i32_1 = arith.constant 0 : i32
    return %c0_i32, %c0_i32_0 : i32, i32
  }
  func.func @transform_10(%arg0: i32) -> (i32, i32) {
    %c0_i32 = arith.constant 0 : i32
    %c0_i32_0 = arith.constant 0 : i32
    %c0_i32_1 = arith.constant 0 : i32
    return %c0_i32, %c0_i32_0 : i32, i32
  }
  func.func @transform_11(%arg0: i32) -> (i32, i32, i32) {
    %c0_i32 = arith.constant 0 : i32
    %c0_i32_0 = arith.constant 0 : i32
    %c0_i32_1 = arith.constant 0 : i32
    return %arg0, %c0_i32, %c0_i32_0 : i32, i32, i32
  }
  func.func @transform_12(%arg0: i32) -> (i32, i32, i32) {
    %c0_i32 = arith.constant 0 : i32
    %c0_i32_0 = arith.constant 0 : i32
    %c0_i32_1 = arith.constant 0 : i32
    return %arg0, %c0_i32, %c0_i32_0 : i32, i32, i32
  }
  func.func @transform_13(%arg0: i32) -> (i32, i32, i32) {
    %c0_i32 = arith.constant 0 : i32
    %c0_i32_0 = arith.constant 0 : i32
    %c0_i32_1 = arith.constant 0 : i32
    return %arg0, %c0_i32, %c0_i32_0 : i32, i32, i32
  }
  func.func @transform_14(%arg0: i32) -> (i32, i32, i32) {
    %c0_i32 = arith.constant 0 : i32
    %c0_i32_0 = arith.constant 0 : i32
    %c0_i32_1 = arith.constant 0 : i32
    return %arg0, %c0_i32, %c0_i32_0 : i32, i32, i32
  }
}

module attributes {stable_mosaic.version = 11 : i64} {
  func.func @_pixel_attn_fuse_kernel(%arg0: i32, %arg1: i32, %arg2: memref<1x64x256xbf16, #tpu.memory_space<vmem>>, %arg3: memref<1x4x32xbf16, #tpu.memory_space<vmem>>, %arg4: memref<1x4x32xbf16, #tpu.memory_space<vmem>>, %arg5: memref<64x32xbf16, #tpu.memory_space<vmem>>, %arg6: memref<32x1xf32, #tpu.memory_space<vmem>>, %arg7: memref<32x32xbf16, #tpu.memory_space<vmem>>, %arg8: memref<32x1xf32, #tpu.memory_space<vmem>>, %arg9: memref<32x64xbf16, #tpu.memory_space<vmem>>, %arg10: memref<64x1xf32, #tpu.memory_space<vmem>>, %arg11: memref<64x64xbf16, #tpu.memory_space<vmem>>, %arg12: memref<64x64xbf16, #tpu.memory_space<vmem>>, %arg13: memref<64x1xf32, #tpu.memory_space<vmem>>, %arg14: memref<64x4xbf16, #tpu.memory_space<vmem>>, %arg15: memref<4x1xf32, #tpu.memory_space<vmem>>, %arg16: memref<1x64x256xbf16, #tpu.memory_space<vmem>>, %arg17: memref<1x4x256xf32, #tpu.memory_space<vmem>>) attributes {dimension_semantics = [#tpu.dimension_semantics<parallel>, #tpu.dimension_semantics<parallel>], iteration_bounds = array<i64: 1, 2>, scalar_prefetch = 0 : i64, scratch_operands = 0 : i64, tpu.core_type = #tpu.core_type<tc>, window_params = [{transform_indices = @transform_0, window_bounds = array<i64: 1, 64, 256>}, {transform_indices = @transform_1, window_bounds = array<i64: 1, 4, 32>}, {transform_indices = @transform_2, window_bounds = array<i64: 1, 4, 32>}, {pipeline_mode = #tpu.pipeline_mode<synchronous>, transform_indices = @transform_3, window_bounds = array<i64: 64, 32>}, {pipeline_mode = #tpu.pipeline_mode<synchronous>, transform_indices = @transform_4, window_bounds = array<i64: 32, 1>}, {pipeline_mode = #tpu.pipeline_mode<synchronous>, transform_indices = @transform_5, window_bounds = array<i64: 32, 32>}, {pipeline_mode = #tpu.pipeline_mode<synchronous>, transform_indices = @transform_6, window_bounds = array<i64: 32, 1>}, {pipeline_mode = #tpu.pipeline_mode<synchronous>, transform_indices = @transform_7, window_bounds = array<i64: 32, 64>}, {pipeline_mode = #tpu.pipeline_mode<synchronous>, transform_indices = @transform_8, window_bounds = array<i64: 64, 1>}, {pipeline_mode = #tpu.pipeline_mode<synchronous>, transform_indices = @transform_9, window_bounds = array<i64: 64, 64>}, {pipeline_mode = #tpu.pipeline_mode<synchronous>, transform_indices = @transform_10, window_bounds = array<i64: 64, 64>}, {pipeline_mode = #tpu.pipeline_mode<synchronous>, transform_indices = @transform_11, window_bounds = array<i64: 64, 1>}, {pipeline_mode = #tpu.pipeline_mode<synchronous>, transform_indices = @transform_12, window_bounds = array<i64: 64, 4>}, {pipeline_mode = #tpu.pipeline_mode<synchronous>, transform_indices = @transform_13, window_bounds = array<i64: 4, 1>}, {transform_indices = @transform_14, window_bounds = array<i64: 1, 64, 256>}, {transform_indices = @transform_15, window_bounds = array<i64: 1, 4, 256>}]} {
    %c0 = arith.constant 0 : index
    %c0_0 = arith.constant 0 : index
    %c0_1 = arith.constant 0 : index
    %0 = vector.load %arg2[%c0, %c0_0, %c0_1] : memref<1x64x256xbf16, #tpu.memory_space<vmem>>, vector<1x64x256xbf16>
    %1 = vector.shape_cast %0 : vector<1x64x256xbf16> to vector<64x256xbf16>
    %c0_2 = arith.constant 0 : index
    %c0_3 = arith.constant 0 : index
    %2 = vector.load %arg5[%c0_2, %c0_3] : memref<64x32xbf16, #tpu.memory_space<vmem>>, vector<64x32xbf16>
    %cst = arith.constant dense<0.000000e+00> : vector<32x256xf32>
    %3 = tpu.matmul %2, %1, %cst {dimension_numbers = #tpu.dot_dimension_numbers<[0], [0], [1], [1], [0, 1, 1, 1], [], []>} : vector<64x32xbf16>, vector<64x256xbf16>, vector<32x256xf32> -> vector<32x256xf32>
    %c0_4 = arith.constant 0 : index
    %c0_5 = arith.constant 0 : index
    %4 = vector.load %arg6[%c0_4, %c0_5] : memref<32x1xf32, #tpu.memory_space<vmem>>, vector<32x1xf32>
    %5 = vector.broadcast %4 : vector<32x1xf32> to vector<32x256xf32>
    %6 = arith.addf %3, %5 : vector<32x256xf32>
    %cst_6 = arith.constant 0.000000e+00 : f32
    %7 = vector.broadcast %cst_6 : f32 to vector<32x256xf32>
    %8 = arith.maximumf %6, %7 : vector<32x256xf32>
    %c0_7 = arith.constant 0 : index
    %c0_8 = arith.constant 0 : index
    %9 = vector.load %arg7[%c0_7, %c0_8] : memref<32x32xbf16, #tpu.memory_space<vmem>>, vector<32x32xbf16>
    %10 = arith.truncf %8 : vector<32x256xf32> to vector<32x256xbf16>
    %cst_9 = arith.constant dense<0.000000e+00> : vector<32x256xf32>
    %11 = tpu.matmul %9, %10, %cst_9 {dimension_numbers = #tpu.dot_dimension_numbers<[0], [0], [1], [1], [0, 1, 1, 1], [], []>} : vector<32x32xbf16>, vector<32x256xbf16>, vector<32x256xf32> -> vector<32x256xf32>
    %c0_10 = arith.constant 0 : index
    %c0_11 = arith.constant 0 : index
    %12 = vector.load %arg8[%c0_10, %c0_11] : memref<32x1xf32, #tpu.memory_space<vmem>>, vector<32x1xf32>
    %13 = vector.broadcast %12 : vector<32x1xf32> to vector<32x256xf32>
    %14 = arith.addf %11, %13 : vector<32x256xf32>
    %cst_12 = arith.constant 0.000000e+00 : f32
    %15 = vector.broadcast %cst_12 : f32 to vector<32x256xf32>
    %16 = arith.maximumf %14, %15 : vector<32x256xf32>
    %c0_13 = arith.constant 0 : index
    %c0_14 = arith.constant 0 : index
    %c0_15 = arith.constant 0 : index
    %17 = vector.load %arg3[%c0_13, %c0_14, %c0_15] : memref<1x4x32xbf16, #tpu.memory_space<vmem>>, vector<1x4x32xbf16>
    %18 = vector.shape_cast %17 : vector<1x4x32xbf16> to vector<4x32xbf16>
    %19 = arith.truncf %16 : vector<32x256xf32> to vector<32x256xbf16>
    %cst_16 = arith.constant dense<0.000000e+00> : vector<4x256xf32>
    %20 = tpu.matmul %18, %19, %cst_16 {dimension_numbers = #tpu.dot_dimension_numbers<[1], [0], [0], [1], [0, 0, 1, 1], [], []>} : vector<4x32xbf16>, vector<32x256xbf16>, vector<4x256xf32> -> vector<4x256xf32>
    %cst_17 = arith.constant dense<0xFF800000> : vector<256xf32>
    %21 = vector.multi_reduction <maximumf>, %20, %cst_17 [0] : vector<4x256xf32> to vector<256xf32>
    %22 = vector.shape_cast %21 : vector<256xf32> to vector<1x256xf32>
    %23 = vector.broadcast %22 : vector<1x256xf32> to vector<4x256xf32>
    %24 = arith.subf %20, %23 : vector<4x256xf32>
    %25 = math.exp %24 : vector<4x256xf32>
    %cst_18 = arith.constant dense<0.000000e+00> : vector<256xf32>
    %26 = vector.multi_reduction <add>, %25, %cst_18 [0] : vector<4x256xf32> to vector<256xf32>
    %27 = vector.shape_cast %26 : vector<256xf32> to vector<1x256xf32>
    %28 = tpu.reciprocal %27 {approx = true} : vector<1x256xf32> -> vector<1x256xf32>
    %29 = vector.broadcast %28 : vector<1x256xf32> to vector<4x256xf32>
    %30 = arith.mulf %25, %29 : vector<4x256xf32>
    %c0_19 = arith.constant 0 : index
    %c0_20 = arith.constant 0 : index
    %c0_21 = arith.constant 0 : index
    %31 = vector.load %arg4[%c0_19, %c0_20, %c0_21] : memref<1x4x32xbf16, #tpu.memory_space<vmem>>, vector<1x4x32xbf16>
    %32 = vector.shape_cast %31 : vector<1x4x32xbf16> to vector<4x32xbf16>
    %33 = arith.truncf %30 : vector<4x256xf32> to vector<4x256xbf16>
    %cst_22 = arith.constant dense<0.000000e+00> : vector<32x256xf32>
    %34 = tpu.matmul %32, %33, %cst_22 {dimension_numbers = #tpu.dot_dimension_numbers<[0], [0], [1], [1], [0, 1, 1, 1], [], []>} : vector<4x32xbf16>, vector<4x256xbf16>, vector<32x256xf32> -> vector<32x256xf32>
    %c0_23 = arith.constant 0 : index
    %c0_24 = arith.constant 0 : index
    %35 = vector.load %arg9[%c0_23, %c0_24] : memref<32x64xbf16, #tpu.memory_space<vmem>>, vector<32x64xbf16>
    %36 = arith.truncf %34 : vector<32x256xf32> to vector<32x256xbf16>
    %cst_25 = arith.constant dense<0.000000e+00> : vector<64x256xf32>
    %37 = tpu.matmul %35, %36, %cst_25 {dimension_numbers = #tpu.dot_dimension_numbers<[0], [0], [1], [1], [0, 1, 1, 1], [], []>} : vector<32x64xbf16>, vector<32x256xbf16>, vector<64x256xf32> -> vector<64x256xf32>
    %c0_26 = arith.constant 0 : index
    %c0_27 = arith.constant 0 : index
    %38 = vector.load %arg10[%c0_26, %c0_27] : memref<64x1xf32, #tpu.memory_space<vmem>>, vector<64x1xf32>
    %39 = vector.broadcast %38 : vector<64x1xf32> to vector<64x256xf32>
    %40 = arith.addf %37, %39 : vector<64x256xf32>
    %cst_28 = arith.constant 0.000000e+00 : f32
    %41 = vector.broadcast %cst_28 : f32 to vector<64x256xf32>
    %42 = arith.maximumf %40, %41 : vector<64x256xf32>
    %c0_29 = arith.constant 0 : index
    %c0_30 = arith.constant 0 : index
    %43 = vector.load %arg11[%c0_29, %c0_30] : memref<64x64xbf16, #tpu.memory_space<vmem>>, vector<64x64xbf16>
    %44 = arith.truncf %42 : vector<64x256xf32> to vector<64x256xbf16>
    %cst_31 = arith.constant dense<0.000000e+00> : vector<64x256xf32>
    %45 = tpu.matmul %43, %44, %cst_31 {dimension_numbers = #tpu.dot_dimension_numbers<[0], [0], [1], [1], [0, 1, 1, 1], [], []>} : vector<64x64xbf16>, vector<64x256xbf16>, vector<64x256xf32> -> vector<64x256xf32>
    %c0_32 = arith.constant 0 : index
    %c0_33 = arith.constant 0 : index
    %46 = vector.load %arg12[%c0_32, %c0_33] : memref<64x64xbf16, #tpu.memory_space<vmem>>, vector<64x64xbf16>
    %cst_34 = arith.constant dense<0.000000e+00> : vector<64x256xf32>
    %47 = tpu.matmul %46, %1, %cst_34 {dimension_numbers = #tpu.dot_dimension_numbers<[0], [0], [1], [1], [0, 1, 1, 1], [], []>} : vector<64x64xbf16>, vector<64x256xbf16>, vector<64x256xf32> -> vector<64x256xf32>
    %48 = arith.addf %45, %47 : vector<64x256xf32>
    %c0_35 = arith.constant 0 : index
    %c0_36 = arith.constant 0 : index
    %49 = vector.load %arg13[%c0_35, %c0_36] : memref<64x1xf32, #tpu.memory_space<vmem>>, vector<64x1xf32>
    %50 = vector.broadcast %49 : vector<64x1xf32> to vector<64x256xf32>
    %51 = arith.addf %48, %50 : vector<64x256xf32>
    %cst_37 = arith.constant 0.000000e+00 : f32
    %52 = vector.broadcast %cst_37 : f32 to vector<64x256xf32>
    %53 = arith.maximumf %51, %52 : vector<64x256xf32>
    %54 = arith.truncf %53 : vector<64x256xf32> to vector<64x256xbf16>
    %c0_38 = arith.constant 0 : index
    %c0_39 = arith.constant 0 : index
    %c0_40 = arith.constant 0 : index
    %55 = vector.load %arg16[%c0_38, %c0_39, %c0_40] : memref<1x64x256xbf16, #tpu.memory_space<vmem>>, vector<1x64x256xbf16>
    %56 = vector.shape_cast %55 : vector<1x64x256xbf16> to vector<64x256xbf16>
    %57 = vector.shape_cast %54 : vector<64x256xbf16> to vector<1x64x256xbf16>
    tpu.vector_store %arg16[%c0_38, %c0_39, %c0_40], %57 {strides = array<i32>} : memref<1x64x256xbf16, #tpu.memory_space<vmem>>, vector<1x64x256xbf16>,
    %c0_41 = arith.constant 0 : index
    %c0_42 = arith.constant 0 : index
    %58 = vector.load %arg14[%c0_41, %c0_42] : memref<64x4xbf16, #tpu.memory_space<vmem>>, vector<64x4xbf16>
    %59 = arith.truncf %53 : vector<64x256xf32> to vector<64x256xbf16>
    %cst_43 = arith.constant dense<0.000000e+00> : vector<4x256xf32>
    %60 = tpu.matmul %58, %59, %cst_43 {dimension_numbers = #tpu.dot_dimension_numbers<[0], [0], [1], [1], [0, 1, 1, 1], [], []>} : vector<64x4xbf16>, vector<64x256xbf16>, vector<4x256xf32> -> vector<4x256xf32>
    %c0_44 = arith.constant 0 : index
    %c0_45 = arith.constant 0 : index
    %61 = vector.load %arg15[%c0_44, %c0_45] : memref<4x1xf32, #tpu.memory_space<vmem>>, vector<4x1xf32>
    %62 = vector.broadcast %61 : vector<4x1xf32> to vector<4x256xf32>
    %63 = arith.addf %60, %62 : vector<4x256xf32>
    %c0_46 = arith.constant 0 : index
    %c0_47 = arith.constant 0 : index
    %c0_48 = arith.constant 0 : index
    %64 = vector.load %arg17[%c0_46, %c0_47, %c0_48] : memref<1x4x256xf32, #tpu.memory_space<vmem>>, vector<1x4x256xf32>
    %65 = vector.shape_cast %64 : vector<1x4x256xf32> to vector<4x256xf32>
    %66 = vector.shape_cast %63 : vector<4x256xf32> to vector<1x4x256xf32>
    tpu.vector_store %arg17[%c0_46, %c0_47, %c0_48], %66 {strides = array<i32>} : memref<1x4x256xf32, #tpu.memory_space<vmem>>, vector<1x4x256xf32>,
    return
  }
  func.func @transform_0(%arg0: i32, %arg1: i32) -> (i32, i32, i32) {
    %c0_i32 = arith.constant 0 : i32
    %c0_i32_0 = arith.constant 0 : i32
    return %arg1, %c0_i32, %arg0 : i32, i32, i32
  }
  func.func @transform_1(%arg0: i32, %arg1: i32) -> (i32, i32, i32) {
    %c0_i32 = arith.constant 0 : i32
    %c0_i32_0 = arith.constant 0 : i32
    %c0_i32_1 = arith.constant 0 : i32
    return %arg1, %c0_i32, %c0_i32_0 : i32, i32, i32
  }
  func.func @transform_2(%arg0: i32, %arg1: i32) -> (i32, i32, i32) {
    %c0_i32 = arith.constant 0 : i32
    %c0_i32_0 = arith.constant 0 : i32
    %c0_i32_1 = arith.constant 0 : i32
    return %arg1, %c0_i32, %c0_i32_0 : i32, i32, i32
  }
  func.func @transform_3(%arg0: i32, %arg1: i32) -> (i32, i32) {
    %c0_i32 = arith.constant 0 : i32
    %c0_i32_0 = arith.constant 0 : i32
    %c0_i32_1 = arith.constant 0 : i32
    return %c0_i32, %c0_i32_0 : i32, i32
  }
  func.func @transform_4(%arg0: i32, %arg1: i32) -> (i32, i32) {
    %c0_i32 = arith.constant 0 : i32
    %c0_i32_0 = arith.constant 0 : i32
    %c0_i32_1 = arith.constant 0 : i32
    return %c0_i32, %c0_i32_0 : i32, i32
  }
  func.func @transform_5(%arg0: i32, %arg1: i32) -> (i32, i32) {
    %c0_i32 = arith.constant 0 : i32
    %c0_i32_0 = arith.constant 0 : i32
    %c0_i32_1 = arith.constant 0 : i32
    return %c0_i32, %c0_i32_0 : i32, i32
  }
  func.func @transform_6(%arg0: i32, %arg1: i32) -> (i32, i32) {
    %c0_i32 = arith.constant 0 : i32
    %c0_i32_0 = arith.constant 0 : i32
    %c0_i32_1 = arith.constant 0 : i32
    return %c0_i32, %c0_i32_0 : i32, i32
  }
  func.func @transform_7(%arg0: i32, %arg1: i32) -> (i32, i32) {
    %c0_i32 = arith.constant 0 : i32
    %c0_i32_0 = arith.constant 0 : i32
    %c0_i32_1 = arith.constant 0 : i32
    return %c0_i32, %c0_i32_0 : i32, i32
  }
  func.func @transform_8(%arg0: i32, %arg1: i32) -> (i32, i32) {
    %c0_i32 = arith.constant 0 : i32
    %c0_i32_0 = arith.constant 0 : i32
    %c0_i32_1 = arith.constant 0 : i32
    return %c0_i32, %c0_i32_0 : i32, i32
  }
  func.func @transform_9(%arg0: i32, %arg1: i32) -> (i32, i32) {
    %c0_i32 = arith.constant 0 : i32
    %c0_i32_0 = arith.constant 0 : i32
    %c0_i32_1 = arith.constant 0 : i32
    return %c0_i32, %c0_i32_0 : i32, i32
  }
  func.func @transform_10(%arg0: i32, %arg1: i32) -> (i32, i32) {
    %c0_i32 = arith.constant 0 : i32
    %c0_i32_0 = arith.constant 0 : i32
    %c0_i32_1 = arith.constant 0 : i32
    return %c0_i32, %c0_i32_0 : i32, i32
  }
  func.func @transform_11(%arg0: i32, %arg1: i32) -> (i32, i32) {
    %c0_i32 = arith.constant 0 : i32
    %c0_i32_0 = arith.constant 0 : i32
    %c0_i32_1 = arith.constant 0 : i32
    return %c0_i32, %c0_i32_0 : i32, i32
  }
  func.func @transform_12(%arg0: i32, %arg1: i32) -> (i32, i32) {
    %c0_i32 = arith.constant 0 : i32
    %c0_i32_0 = arith.constant 0 : i32
    %c0_i32_1 = arith.constant 0 : i32
    return %c0_i32, %c0_i32_0 : i32, i32
  }
  func.func @transform_13(%arg0: i32, %arg1: i32) -> (i32, i32) {
    %c0_i32 = arith.constant 0 : i32
    %c0_i32_0 = arith.constant 0 : i32
    %c0_i32_1 = arith.constant 0 : i32
    return %c0_i32, %c0_i32_0 : i32, i32
  }
  func.func @transform_14(%arg0: i32, %arg1: i32) -> (i32, i32, i32) {
    %c0_i32 = arith.constant 0 : i32
    %c0_i32_0 = arith.constant 0 : i32
    return %arg1, %c0_i32, %arg0 : i32, i32, i32
  }
  func.func @transform_15(%arg0: i32, %arg1: i32) -> (i32, i32, i32) {
    %c0_i32 = arith.constant 0 : i32
    %c0_i32_0 = arith.constant 0 : i32
    return %arg1, %c0_i32, %arg0 : i32, i32, i32
  }
}

</mosaic_0001>

<llo_original>
// kernel: ocr_block_forward.3
$region0: #{ocr_block_forward.3}
  #allocation0 [shape = 'u32[]', space=smem, size = 0x4, offset = 0x4, fixed_abs, tag = 'smem constant byte address 0x4 - core index']
  #allocation1 [shape = 'u32[144,128]{1,0:T(1,128)}', space=vmem, size = 0x12000, scoped, tag = 'internal scratch']
  %s0 = inlined_call_operand.hbm [shape: bf16[2,64,256], index: 0, kind: input, shape index: {}]
  %s1 = inlined_call_operand.hbm [shape: bf16[2,4,32], index: 1, kind: input, shape index: {}]
  %s2 = inlined_call_operand.hbm [shape: bf16[2,4,32], index: 2, kind: input, shape index: {}]
  %s3 = inlined_call_operand.hbm [shape: bf16[64,32], index: 3, kind: input, shape index: {}]
  %s4 = inlined_call_operand.hbm [shape: f32[32,1], index: 4, kind: input, shape index: {}]
  %s5 = inlined_call_operand.hbm [shape: bf16[32,32], index: 5, kind: input, shape index: {}]
  %s6 = inlined_call_operand.hbm [shape: f32[32,1], index: 6, kind: input, shape index: {}]
  %s7 = inlined_call_operand.hbm [shape: bf16[32,64], index: 7, kind: input, shape index: {}]
  %s8 = inlined_call_operand.hbm [shape: f32[64,1], index: 8, kind: input, shape index: {}]
  %s9 = inlined_call_operand.hbm [shape: bf16[64,64], index: 9, kind: input, shape index: {}]
  %s10 = inlined_call_operand.hbm [shape: bf16[64,64], index: 10, kind: input, shape index: {}]
  %s11 = inlined_call_operand.hbm [shape: f32[64,1], index: 11, kind: input, shape index: {}]
  %s12 = inlined_call_operand.hbm [shape: bf16[64,4], index: 12, kind: input, shape index: {}]
  %s13 = inlined_call_operand.hbm [shape: f32[4,1], index: 13, kind: input, shape index: {}]
  %s14 = inlined_call_operand.hbm [shape: bf16[2,64,256], index: 14, kind: output, shape index: {0}]
  %s15 = inlined_call_operand.hbm [shape: f32[2,4,256], index: 15, kind: output, shape index: {1}]
  %16 = xla_tuple %s14, %s15
  %s17 = sld [smem:[#allocation0]]
  $region153: #{ocr_block_forward.3} parent=0
    _
  %s19 = ssub.s32 1, %s17
  %s20 = scalar_select 0, %s19, %s17
  $region1: #{ocr_block_forward.3} parent=0
    #allocation2 [shape = 'u8[65536]{0}', space=vmem, size = 0x10000, scoped, tag = 'input window, operand 0']
    #allocation3 [shape = 's32[2]{0}', space=sflag, size = 0x8, scoped, tag = 'scoped memory for ocr_block_forward.3']
    #allocation4 [shape = 's32[2]{0}', space=sflag, size = 0x8, scoped, tag = 'scoped memory for ocr_block_forward.3']
    #allocation5 [shape = 'u8[2048]{0}', space=vmem, size = 0x800, scoped, tag = 'input window, operand 1']
    #allocation6 [shape = 's32[2]{0}', space=sflag, size = 0x8, scoped, tag = 'scoped memory for ocr_block_forward.3']
    #allocation7 [shape = 'u8[2048]{0}', space=vmem, size = 0x800, scoped, tag = 'input window, operand 2']
    #allocation8 [shape = 'u8[16384]{0}', space=vmem, size = 0x4000, scoped, tag = 'input window, operand 3, single buffered']
    #allocation9 [shape = 's32[1]{0}', space=sflag, size = 0x4, scoped, tag = 'scoped memory for ocr_block_forward.3']
    #allocation10 [shape = 'u8[16384]{0}', space=vmem, size = 0x4000, scoped, tag = 'input window, operand 4, single buffered']
    #allocation11 [shape = 'u8[8192]{0}', space=vmem, size = 0x2000, scoped, tag = 'input window, operand 5, single buffered']
    #allocation12 [shape = 's32[1]{0}', space=sflag, size = 0x4, scoped, tag = 'scoped memory for ocr_block_forward.3']
    #allocation13 [shape = 'u8[16384]{0}', space=vmem, size = 0x4000, scoped, tag = 'input window, operand 6, single buffered']
    #allocation14 [shape = 'u8[8192]{0}', space=vmem, size = 0x2000, scoped, tag = 'input window, operand 7, single buffered']
    #allocation15 [shape = 's32[1]{0}', space=sflag, size = 0x4, scoped, tag = 'scoped memory for ocr_block_forward.3']
    #allocation16 [shape = 'u8[32768]{0}', space=vmem, size = 0x8000, scoped, tag = 'input window, operand 8, single buffered']
    #allocation17 [shape = 'u8[16384]{0}', space=vmem, size = 0x4000, scoped, tag = 'input window, operand 9, single buffered']
    #allocation18 [shape = 's32[1]{0}', space=sflag, size = 0x4, scoped, tag = 'scoped memory for ocr_block_forward.3']
    #allocation19 [shape = 'u8[16384]{0}', space=vmem, size = 0x4000, scoped, tag = 'input window, operand 10, single buffered']
    #allocation20 [shape = 'u8[32768]{0}', space=vmem, size = 0x8000, scoped, tag = 'input window, operand 11, single buffered']
    #allocation21 [shape = 's32[1]{0}', space=sflag, size = 0x4, scoped, tag = 'scoped memory for ocr_block_forward.3']
    #allocation22 [shape = 'u8[16384]{0}', space=vmem, size = 0x4000, scoped, tag = 'input window, operand 12, single buffered']
    #allocation23 [shape = 'u8[2048]{0}', space=vmem, size = 0x800, scoped, tag = 'input window, operand 13, single buffered']
    #allocation24 [shape = 's32[1]{0}', space=sflag, size = 0x4, scoped, tag = 'scoped memory for ocr_block_forward.3']
    #allocation25 [shape = 'u8[65536]{0}', space=vmem, size = 0x10000, scoped, tag = 'output window, operand 0']
    #allocation26 [shape = 'u8[8192]{0}', space=vmem, size = 0x2000, scoped, tag = 'output window, operand 1']
    #allocation27 [shape = 's32[2]{0}', space=sflag, size = 0x8, scoped, tag = 'scoped memory for ocr_block_forward.3']
    %21 = vsyncpa [#allocation3], 0
    %s22 = scalar_lea.sflag [#allocation3], 1
    %23 = vsyncpa %s22, 0
    %24 = vsyncpa [#allocation6], 0
    %s25 = scalar_lea.sflag [#allocation6], 1
    %26 = vsyncpa %s25, 0
    %27 = vsyncpa [#allocation9], 0
    %28 = vsyncpa [#allocation12], 0
    %29 = vsyncpa [#allocation15], 0
    %30 = vsyncpa [#allocation18], 0
    %31 = vsyncpa [#allocation21], 0
    %32 = vsyncpa [#allocation24], 0
    %33 = vsyncpa [#allocation4], 0
    %s34 = scalar_lea.sflag [#allocation4], 1
    %35 = vsyncpa %s34, 0
    %36 = vsyncpa [#allocation27], 0
    %s37 = scalar_lea.sflag [#allocation27], 1
    %38 = vsyncpa %s37, 0
    loop: start=0, step=1, limit=4
    $region2: #{ocr_block_forward.3} parent=1 // loop_pre_header
      _
    $region3: #{ocr_block_forward.3} parent=1 // loop_header
      %s40 = sphi 0, %s44
      %p41 = scmp.ge.s32.totalorder %s40, 4
      %s47 = sphi 0, %s59
      %s48 = sphi 0, %s55
      %s49 = sphi 0, %s47
      %s50 = sphi 0, %s48
      %s51 = sphi 0, %s49
      %s52 = sphi 0, %s50
      %s64 = sphi 0, %s66
      %s67 = sphi 0, %s64
      %s68 = sphi 0, %s67
      %s84 = sphi 0, %s68
      %s90 = sphi 0, %s92
      %s93 = sphi 0, %s90
      %s94 = sphi 0, %s93
      %s110 = sphi 0, %s94
      %s116 = sphi 0, %s118
      %s119 = sphi 0, %s116
      %s120 = sphi 0, %s119
      %s136 = sphi 0, %s120
      %s140 = sphi 0, %s140
      %s142 = sphi 0, %s140
      %s143 = sphi 0, %s142
      %s157 = sphi 0, %s143
      %s161 = sphi 0, %s161
      %s163 = sphi 0, %s161
      %s164 = sphi 0, %s163
      %s178 = sphi 0, %s164
      %s182 = sphi 0, %s182
      %s184 = sphi 0, %s182
      %s185 = sphi 0, %s184
      %s199 = sphi 0, %s185
      %s203 = sphi 0, %s203
      %s205 = sphi 0, %s203
      %s206 = sphi 0, %s205
      %s220 = sphi 0, %s206
      %s224 = sphi 0, %s224
      %s226 = sphi 0, %s224
      %s227 = sphi 0, %s226
      %s241 = sphi 0, %s227
      %s245 = sphi 0, %s245
      %s247 = sphi 0, %s245
      %s248 = sphi 0, %s247
      %s262 = sphi 0, %s248
      %s266 = sphi 0, %s266
      %s268 = sphi 0, %s266
      %s269 = sphi 0, %s268
      %s283 = sphi 0, %s269
      %s287 = sphi 0, %s287
      %s289 = sphi 0, %s287
      %s290 = sphi 0, %s289
      %s304 = sphi 0, %s290
      %s308 = sphi 0, %s308
      %s310 = sphi 0, %s308
      %s311 = sphi 0, %s310
      %s325 = sphi 0, %s311
      %s329 = sphi 0, %s329
      %s331 = sphi 0, %s329
      %s332 = sphi 0, %s331
      %s346 = sphi 0, %s332
      %s350 = sphi 0, %s350
      %s352 = sphi 0, %s350
      %s353 = sphi 0, %s352
      %s367 = sphi 0, %s353
      %s375 = sphi 0, %s377
      %s378 = sphi 0, %s375
      %s379 = sphi 0, %s378
      %s395 = sphi 0, %s379
      %s403 = sphi 0, %s405
      %s406 = sphi 0, %s403
      %s407 = sphi 0, %s406
      %s423 = sphi 0, %s407
    $region4: #{ocr_block_forward.3} parent=1 // loop_header_branch
      %43 = sbr.rel (%p41) target = $region8
    $region5: #{ocr_block_forward.3} parent=1 // loop_body
      %s45 = ssub.s32 %s40, 1
      %s46 = ssub.s32 %s40, 2
      %s53 = sadd.s32 1, %s48
      %p54 = scmp.ge.s32.totalorder %s53, 2
      %s55 = scalar_select %p54, 0, %s53
      %s56 = sadd.s32 1, %s47
      %s57 = scalar_select %p54, %s56, %s47
      %p58 = scmp.ge.s32.totalorder %s57, 1
      %s59 = scalar_select %p58, 0, %s57
      %s60 = ssub.s32 %s48, %s55
      %s61 = ssub.s32 %s47, %s59
      %s62 = sor.u32 %s60, %s61
      %p63 = scmp.eq.s32.totalorder %s62, 0
      %s65 = sadd.s32 %s64, 1
      %s66 = scalar_select %p63, %s64, %s65
      %p69 = pneg %p63
      %p70 = scmp.eq.s32.totalorder %s40, 1
      %p71 = por %p69, %p70
      %p72 = scmp.ne.s32.totalorder %s64, %s67
      %p73 = scmp.eq.s32.totalorder %s40, 0
      %p74 = por %p72, %p73
      %p75 = scmp.ne.s32.totalorder %s64, %s67
      %p76 = scmp.eq.s32.totalorder %s45, 1
      %p77 = por %p75, %p76
      %p78 = scmp.ne.s32.totalorder %s67, %s68
      %p79 = scmp.eq.s32.totalorder %s45, 0
      %p80 = por %p78, %p79
      %p81 = scmp.ne.s32.totalorder %s67, %s68
      %p82 = scmp.eq.s32.totalorder %s46, 1
      %p83 = por %p81, %p82
      %p85 = scmp.ne.s32.totalorder %s68, %s84
      %p86 = scmp.eq.s32.totalorder %s46, 0
      %p87 = por %p85, %p86
      %s88 = ssub.s32 %s48, %s55
      %p89 = scmp.eq.s32.totalorder %s88, 0
      %s91 = sadd.s32 %s90, 1
      %s92 = scalar_select %p89, %s90, %s91
      %p95 = pneg %p89
      %p96 = scmp.eq.s32.totalorder %s40, 1
      %p97 = por %p95, %p96
      %p98 = scmp.ne.s32.totalorder %s90, %s93
      %p99 = scmp.eq.s32.totalorder %s40, 0
      %p100 = por %p98, %p99
      %p101 = scmp.ne.s32.totalorder %s90, %s93
      %p102 = scmp.eq.s32.totalorder %s45, 1
      %p103 = por %p101, %p102
      %p104 = scmp.ne.s32.totalorder %s93, %s94
      %p105 = scmp.eq.s32.totalorder %s45, 0
      %p106 = por %p104, %p105
      %p107 = scmp.ne.s32.totalorder %s93, %s94
      %p108 = scmp.eq.s32.totalorder %s46, 1
      %p109 = por %p107, %p108
      %p111 = scmp.ne.s32.totalorder %s94, %s110
      %p112 = scmp.eq.s32.totalorder %s46, 0
      %p113 = por %p111, %p112
      %s114 = ssub.s32 %s48, %s55
      %p115 = scmp.eq.s32.totalorder %s114, 0
      %s117 = sadd.s32 %s116, 1
      %s118 = scalar_select %p115, %s116, %s117
      %p121 = pneg %p115
      %p122 = scmp.eq.s32.totalorder %s40, 1
      %p123 = por %p121, %p122
      %p124 = scmp.ne.s32.totalorder %s116, %s119
      %p125 = scmp.eq.s32.totalorder %s40, 0
      %p126 = por %p124, %p125
      %p127 = scmp.ne.s32.totalorder %s116, %s119
      %p128 = scmp.eq.s32.totalorder %s45, 1
      %p129 = por %p127, %p128
      %p130 = scmp.ne.s32.totalorder %s119, %s120
      %p131 = scmp.eq.s32.totalorder %s45, 0
      %p132 = por %p130, %p131
      %p133 = scmp.ne.s32.totalorder %s119, %s120
      %p134 = scmp.eq.s32.totalorder %s46, 1
      %p135 = por %p133, %p134
      %p137 = scmp.ne.s32.totalorder %s120, %s136
      %p138 = scmp.eq.s32.totalorder %s46, 0
      %p139 = por %p137, %p138
      %s141 = sadd.s32 %s140, 1
      %p144 = scmp.eq.s32.totalorder %s40, 1
      %p145 = scmp.ne.s32.totalorder %s140, %s142
      %p146 = scmp.eq.s32.totalorder %s40, 0
      %p147 = por %p145, %p146
      %p148 = scmp.ne.s32.totalorder %s140, %s142
      %p149 = scmp.eq.s32.totalorder %s45, 1
      %p150 = por %p148, %p149
      %p151 = scmp.ne.s32.totalorder %s142, %s143
      %p152 = scmp.eq.s32.totalorder %s45, 0
      %p153 = por %p151, %p152
      %p154 = scmp.ne.s32.totalorder %s142, %s143
      %p155 = scmp.eq.s32.totalorder %s46, 1
      %p156 = por %p154, %p155
      %p158 = scmp.ne.s32.totalorder %s143, %s157
      %p159 = scmp.eq.s32.totalorder %s46, 0
      %p160 = por %p158, %p159
      %s162 = sadd.s32 %s161, 1
      %p165 = scmp.eq.s32.totalorder %s40, 1
      %p166 = scmp.ne.s32.totalorder %s161, %s163
      %p167 = scmp.eq.s32.totalorder %s40, 0
      %p168 = por %p166, %p167
      %p169 = scmp.ne.s32.totalorder %s161, %s163
      %p170 = scmp.eq.s32.totalorder %s45, 1
      %p171 = por %p169, %p170
      %p172 = scmp.ne.s32.totalorder %s163, %s164
      %p173 = scmp.eq.s32.totalorder %s45, 0
      %p174 = por %p172, %p173
      %p175 = scmp.ne.s32.totalorder %s163, %s164
      %p176 = scmp.eq.s32.totalorder %s46, 1
      %p177 = por %p175, %p176
      %p179 = scmp.ne.s32.totalorder %s164, %s178
      %p180 = scmp.eq.s32.totalorder %s46, 0
      %p181 = por %p179, %p180
      %s183 = sadd.s32 %s182, 1
      %p186 = scmp.eq.s32.totalorder %s40, 1
      %p187 = scmp.ne.s32.totalorder %s182, %s184
      %p188 = scmp.eq.s32.totalorder %s40, 0
      %p189 = por %p187, %p188
      %p190 = scmp.ne.s32.totalorder %s182, %s184
      %p191 = scmp.eq.s32.totalorder %s45, 1
      %p192 = por %p190, %p191
      %p193 = scmp.ne.s32.totalorder %s184, %s185
      %p194 = scmp.eq.s32.totalorder %s45, 0
      %p195 = por %p193, %p194
      %p196 = scmp.ne.s32.totalorder %s184, %s185
      %p197 = scmp.eq.s32.totalorder %s46, 1
      %p198 = por %p196, %p197
      %p200 = scmp.ne.s32.totalorder %s185, %s199
      %p201 = scmp.eq.s32.totalorder %s46, 0
      %p202 = por %p200, %p201
      %s204 = sadd.s32 %s203, 1
      %p207 = scmp.eq.s32.totalorder %s40, 1
      %p208 = scmp.ne.s32.totalorder %s203, %s205
      %p209 = scmp.eq.s32.totalorder %s40, 0
      %p210 = por %p208, %p209
      %p211 = scmp.ne.s32.totalorder %s203, %s205
      %p212 = scmp.eq.s32.totalorder %s45, 1
      %p213 = por %p211, %p212
      %p214 = scmp.ne.s32.totalorder %s205, %s206
      %p215 = scmp.eq.s32.totalorder %s45, 0
      %p216 = por %p214, %p215
      %p217 = scmp.ne.s32.totalorder %s205, %s206
      %p218 = scmp.eq.s32.totalorder %s46, 1
      %p219 = por %p217, %p218
      %p221 = scmp.ne.s32.totalorder %s206, %s220
      %p222 = scmp.eq.s32.totalorder %s46, 0
      %p223 = por %p221, %p222
      %s225 = sadd.s32 %s224, 1
      %p228 = scmp.eq.s32.totalorder %s40, 1
      %p229 = scmp.ne.s32.totalorder %s224, %s226
      %p230 = scmp.eq.s32.totalorder %s40, 0
      %p231 = por %p229, %p230
      %p232 = scmp.ne.s32.totalorder %s224, %s226
      %p233 = scmp.eq.s32.totalorder %s45, 1
      %p234 = por %p232, %p233
      %p235 = scmp.ne.s32.totalorder %s226, %s227
      %p236 = scmp.eq.s32.totalorder %s45, 0
      %p237 = por %p235, %p236
      %p238 = scmp.ne.s32.totalorder %s226, %s227
      %p239 = scmp.eq.s32.totalorder %s46, 1
      %p240 = por %p238, %p239
      %p242 = scmp.ne.s32.totalorder %s227, %s241
      %p243 = scmp.eq.s32.totalorder %s46, 0
      %p244 = por %p242, %p243
      %s246 = sadd.s32 %s245, 1
      %p249 = scmp.eq.s32.totalorder %s40, 1
      %p250 = scmp.ne.s32.totalorder %s245, %s247
      %p251 = scmp.eq.s32.totalorder %s40, 0
      %p252 = por %p250, %p251
      %p253 = scmp.ne.s32.totalorder %s245, %s247
      %p254 = scmp.eq.s32.totalorder %s45, 1
      %p255 = por %p253, %p254
      %p256 = scmp.ne.s32.totalorder %s247, %s248
      %p257 = scmp.eq.s32.totalorder %s45, 0
      %p258 = por %p256, %p257
      %p259 = scmp.ne.s32.totalorder %s247, %s248
      %p260 = scmp.eq.s32.totalorder %s46, 1
      %p261 = por %p259, %p260
      %p263 = scmp.ne.s32.totalorder %s248, %s262
      %p264 = scmp.eq.s32.totalorder %s46, 0
      %p265 = por %p263, %p264
      %s267 = sadd.s32 %s266, 1
      %p270 = scmp.eq.s32.totalorder %s40, 1
      %p271 = scmp.ne.s32.totalorder %s266, %s268
      %p272 = scmp.eq.s32.totalorder %s40, 0
      %p273 = por %p271, %p272
      %p274 = scmp.ne.s32.totalorder %s266, %s268
      %p275 = scmp.eq.s32.totalorder %s45, 1
      %p276 = por %p274, %p275
      %p277 = scmp.ne.s32.totalorder %s268, %s269
      %p278 = scmp.eq.s32.totalorder %s45, 0
      %p279 = por %p277, %p278
      %p280 = scmp.ne.s32.totalorder %s268, %s269
      %p281 = scmp.eq.s32.totalorder %s46, 1
      %p282 = por %p280, %p281
      %p284 = scmp.ne.s32.totalorder %s269, %s283
      %p285 = scmp.eq.s32.totalorder %s46, 0
      %p286 = por %p284, %p285
      %s288 = sadd.s32 %s287, 1
      %p291 = scmp.eq.s32.totalorder %s40, 1
      %p292 = scmp.ne.s32.totalorder %s287, %s289
      %p293 = scmp.eq.s32.totalorder %s40, 0
      %p294 = por %p292, %p293
      %p295 = scmp.ne.s32.totalorder %s287, %s289
      %p296 = scmp.eq.s32.totalorder %s45, 1
      %p297 = por %p295, %p296
      %p298 = scmp.ne.s32.totalorder %s289, %s290
      %p299 = scmp.eq.s32.totalorder %s45, 0
      %p300 = por %p298, %p299
      %p301 = scmp.ne.s32.totalorder %s289, %s290
      %p302 = scmp.eq.s32.totalorder %s46, 1
      %p303 = por %p301, %p302
      %p305 = scmp.ne.s32.totalorder %s290, %s304
      %p306 = scmp.eq.s32.totalorder %s46, 0
      %p307 = por %p305, %p306
      %s309 = sadd.s32 %s308, 1
      %p312 = scmp.eq.s32.totalorder %s40, 1
      %p313 = scmp.ne.s32.totalorder %s308, %s310
      %p314 = scmp.eq.s32.totalorder %s40, 0
      %p315 = por %p313, %p314
      %p316 = scmp.ne.s32.totalorder %s308, %s310
      %p317 = scmp.eq.s32.totalorder %s45, 1
      %p318 = por %p316, %p317
      %p319 = scmp.ne.s32.totalorder %s310, %s311
      %p320 = scmp.eq.s32.totalorder %s45, 0
      %p321 = por %p319, %p320
      %p322 = scmp.ne.s32.totalorder %s310, %s311
      %p323 = scmp.eq.s32.totalorder %s46, 1
      %p324 = por %p322, %p323
      %p326 = scmp.ne.s32.totalorder %s311, %s325
      %p327 = scmp.eq.s32.totalorder %s46, 0
      %p328 = por %p326, %p327
      %s330 = sadd.s32 %s329, 1
      %p333 = scmp.eq.s32.totalorder %s40, 1
      %p334 = scmp.ne.s32.totalorder %s329, %s331
      %p335 = scmp.eq.s32.totalorder %s40, 0
      %p336 = por %p334, %p335
      %p337 = scmp.ne.s32.totalorder %s329, %s331
      %p338 = scmp.eq.s32.totalorder %s45, 1
      %p339 = por %p337, %p338
      %p340 = scmp.ne.s32.totalorder %s331, %s332
      %p341 = scmp.eq.s32.totalorder %s45, 0
      %p342 = por %p340, %p341
      %p343 = scmp.ne.s32.totalorder %s331, %s332
      %p344 = scmp.eq.s32.totalorder %s46, 1
      %p345 = por %p343, %p344
      %p347 = scmp.ne.s32.totalorder %s332, %s346
      %p348 = scmp.eq.s32.totalorder %s46, 0
      %p349 = por %p347, %p348
      %s351 = sadd.s32 %s350, 1
      %p354 = scmp.eq.s32.totalorder %s40, 1
      %p355 = scmp.ne.s32.totalorder %s350, %s352
      %p356 = scmp.eq.s32.totalorder %s40, 0
      %p357 = por %p355, %p356
      %p358 = scmp.ne.s32.totalorder %s350, %s352
      %p359 = scmp.eq.s32.totalorder %s45, 1
      %p360 = por %p358, %p359
      %p361 = scmp.ne.s32.totalorder %s352, %s353
      %p362 = scmp.eq.s32.totalorder %s45, 0
      %p363 = por %p361, %p362
      %p364 = scmp.ne.s32.totalorder %s352, %s353
      %p365 = scmp.eq.s32.totalorder %s46, 1
      %p366 = por %p364, %p365
      %p368 = scmp.ne.s32.totalorder %s353, %s367
      %p369 = scmp.eq.s32.totalorder %s46, 0
      %p370 = por %p368, %p369
      %s371 = ssub.s32 %s48, %s55
      %s372 = ssub.s32 %s47, %s59
      %s373 = sor.u32 %s371, %s372
      %p374 = scmp.eq.s32.totalorder %s373, 0
      %s376 = sadd.s32 %s375, 1
      %s377 = scalar_select %p374, %s375, %s376
      %p380 = pneg %p374
      %p381 = scmp.eq.s32.totalorder %s40, 1
      %p382 = por %p380, %p381
      %p383 = scmp.ne.s32.totalorder %s375, %s378
      %p384 = scmp.eq.s32.totalorder %s40, 0
      %p385 = por %p383, %p384
      %p386 = scmp.ne.s32.totalorder %s375, %s378
      %p387 = scmp.eq.s32.totalorder %s45, 1
      %p388 = por %p386, %p387
      %p389 = scmp.ne.s32.totalorder %s378, %s379
      %p390 = scmp.eq.s32.totalorder %s45, 0
      %p391 = por %p389, %p390
      %p392 = scmp.ne.s32.totalorder %s378, %s379
      %p393 = scmp.eq.s32.totalorder %s46, 1
      %p394 = por %p392, %p393
      %p396 = scmp.ne.s32.totalorder %s379, %s395
      %p397 = scmp.eq.s32.totalorder %s46, 0
      %p398 = por %p396, %p397
      %s399 = ssub.s32 %s48, %s55
      %s400 = ssub.s32 %s47, %s59
      %s401 = sor.u32 %s399, %s400
      %p402 = scmp.eq.s32.totalorder %s401, 0
      %s404 = sadd.s32 %s403, 1
      %s405 = scalar_select %p402, %s403, %s404
      %p408 = pneg %p402
      %p409 = scmp.eq.s32.totalorder %s40, 1
      %p410 = por %p408, %p409
      %p411 = scmp.ne.s32.totalorder %s403, %s406
      %p412 = scmp.eq.s32.totalorder %s40, 0
      %p413 = por %p411, %p412
      %p414 = scmp.ne.s32.totalorder %s403, %s406
      %p415 = scmp.eq.s32.totalorder %s45, 1
      %p416 = por %p414, %p415
      %p417 = scmp.ne.s32.totalorder %s406, %s407
      %p418 = scmp.eq.s32.totalorder %s45, 0
      %p419 = por %p417, %p418
      %p420 = scmp.ne.s32.totalorder %s406, %s407
      %p421 = scmp.eq.s32.totalorder %s46, 1
      %p422 = por %p420, %p421
      %p424 = scmp.ne.s32.totalorder %s407, %s423
      %p425 = scmp.eq.s32.totalorder %s46, 0
      %p426 = por %p424, %p425
      %p427 = scmp.le.s32.totalorder 1, %s40
      %p428 = scmp.lt.s32.totalorder %s40, 3
      %p429 = pnand %p427, %p428
      %p430 = pneg %p429
      // Predicated region
      $region9: #{ocr_block_forward.3} parent=5 // pred_check
        _
      $region10: #{ocr_block_forward.3} parent=5 // pred_check_branch
        %432 = sbr.rel (%p429) target = $region12
      $region11: #{ocr_block_forward.3} parent=5 // pred_region
        %s433 = ssub.s32 %s40, 1
        // Predicated region
        $region13: #{ocr_block_forward.3} parent=11 // pred_check
          %p434 = pneg %p153
        $region14: #{ocr_block_forward.3} parent=11 // pred_check_branch
          %436 = sbr.rel (%p434) target = $region16
        $region15: #{ocr_block_forward.3} parent=11 // pred_region
          %s438 = ssub.s32 512, 512
          %439 = vsyncadd [#allocation9], %s438
          %s440 = sshll.u32 [#allocation8], 4
          %s441 = int_to_ptr.vmem [resolvable:$true] %s440
          %446 = dma.hbm_to_vmem [thread:$0]  %s3, 512, %s441, [#allocation9], 64, 64, 4
        $region16: #{ocr_block_forward.3} parent=11 // pred_fallthru
          _
        // Predicated region
        $region17: #{ocr_block_forward.3} parent=11 // pred_check
          %p447 = pneg %p174
        $region18: #{ocr_block_forward.3} parent=11 // pred_check_branch
          %449 = sbr.rel (%p447) target = $region20
        $region19: #{ocr_block_forward.3} parent=11 // pred_region
          %s451 = ssub.s32 512, 512
          %452 = vsyncadd [#allocation9], %s451
          %s453 = sshll.u32 [#allocation10], 4
          %s454 = int_to_ptr.vmem [resolvable:$true] %s453
          %459 = dma.hbm_to_vmem [thread:$0]  %s4, 512, %s454, [#allocation9], 128, 128, 8
        $region20: #{ocr_block_forward.3} parent=11 // pred_fallthru
          _
        // Predicated region
        $region21: #{ocr_block_forward.3} parent=11 // pred_check
          %p460 = pneg %p195
        $region22: #{ocr_block_forward.3} parent=11 // pred_check_branch
          %462 = sbr.rel (%p460) target = $region24
        $region23: #{ocr_block_forward.3} parent=11 // pred_region
          %s464 = ssub.s32 256, 256
          %465 = vsyncadd [#allocation12], %s464
          %s466 = sshll.u32 [#allocation11], 4
          %s467 = int_to_ptr.vmem [resolvable:$true] %s466
          %472 = dma.hbm_to_vmem [thread:$0]  %s5, 256, %s467, [#allocation12], 64, 64, 4
        $region24: #{ocr_block_forward.3} parent=11 // pred_fallthru
          _
        // Predicated region
        $region25: #{ocr_block_forward.3} parent=11 // pred_check
          %p473 = pneg %p216
        $region26: #{ocr_block_forward.3} parent=11 // pred_check_branch
          %475 = sbr.rel (%p473) target = $region28
        $region27: #{ocr_block_forward.3} parent=11 // pred_region
          %s477 = ssub.s32 512, 512
          %478 = vsyncadd [#allocation12], %s477
          %s479 = sshll.u32 [#allocation13], 4
          %s480 = int_to_ptr.vmem [resolvable:$true] %s479
          %485 = dma.hbm_to_vmem [thread:$0]  %s6, 512, %s480, [#allocation12], 128, 128, 8
        $region28: #{ocr_block_forward.3} parent=11 // pred_fallthru
          _
        // Predicated region
        $region29: #{ocr_block_forward.3} parent=11 // pred_check
          %p486 = pneg %p237
        $region30: #{ocr_block_forward.3} parent=11 // pred_check_branch
          %488 = sbr.rel (%p486) target = $region32
        $region31: #{ocr_block_forward.3} parent=11 // pred_region
          %s490 = ssub.s32 256, 256
          %491 = vsyncadd [#allocation15], %s490
          %s492 = sshll.u32 [#allocation14], 4
          %s493 = int_to_ptr.vmem [resolvable:$true] %s492
          %498 = dma.hbm_to_vmem [thread:$0]  %s7, 256, %s493, [#allocation15], 64, 64, 4
        $region32: #{ocr_block_forward.3} parent=11 // pred_fallthru
          _
        // Predicated region
        $region33: #{ocr_block_forward.3} parent=11 // pred_check
          %p499 = pneg %p258
        $region34: #{ocr_block_forward.3} parent=11 // pred_check_branch
          %501 = sbr.rel (%p499) target = $region36
        $region35: #{ocr_block_forward.3} parent=11 // pred_region
          %s503 = ssub.s32 1024, 1024
          %504 = vsyncadd [#allocation15], %s503
          %s505 = sshll.u32 [#allocation16], 4
          %s506 = int_to_ptr.vmem [resolvable:$true] %s505
          %511 = dma.hbm_to_vmem [thread:$0]  %s8, 1024, %s506, [#allocation15], 128, 128, 8
        $region36: #{ocr_block_forward.3} parent=11 // pred_fallthru
          _
        // Predicated region
        $region37: #{ocr_block_forward.3} parent=11 // pred_check
          %p512 = pneg %p279
        $region38: #{ocr_block_forward.3} parent=11 // pred_check_branch
          %514 = sbr.rel (%p512) target = $region40
        $region39: #{ocr_block_forward.3} parent=11 // pred_region
          %s516 = ssub.s32 512, 512
          %517 = vsyncadd [#allocation18], %s516
          %s518 = sshll.u32 [#allocation17], 4
          %s519 = int_to_ptr.vmem [resolvable:$true] %s518
          %524 = dma.hbm_to_vmem [thread:$0]  %s9, 512, %s519, [#allocation18], 64, 64, 4
        $region40: #{ocr_block_forward.3} parent=11 // pred_fallthru
          _
        // Predicated region
        $region41: #{ocr_block_forward.3} parent=11 // pred_check
          %p525 = pneg %p300
        $region42: #{ocr_block_forward.3} parent=11 // pred_check_branch
          %527 = sbr.rel (%p525) target = $region44
        $region43: #{ocr_block_forward.3} parent=11 // pred_region
          %s529 = ssub.s32 512, 512
          %530 = vsyncadd [#allocation18], %s529
          %s531 = sshll.u32 [#allocation19], 4
          %s532 = int_to_ptr.vmem [resolvable:$true] %s531
          %537 = dma.hbm_to_vmem [thread:$0]  %s10, 512, %s532, [#allocation18], 64, 64, 4
        $region44: #{ocr_block_forward.3} parent=11 // pred_fallthru
          _
        // Predicated region
        $region45: #{ocr_block_forward.3} parent=11 // pred_check
          %p538 = pneg %p321
        $region46: #{ocr_block_forward.3} parent=11 // pred_check_branch
          %540 = sbr.rel (%p538) target = $region48
        $region47: #{ocr_block_forward.3} parent=11 // pred_region
          %s542 = ssub.s32 1024, 1024
          %543 = vsyncadd [#allocation21], %s542
          %s544 = sshll.u32 [#allocation20], 4
          %s545 = int_to_ptr.vmem [resolvable:$true] %s544
          %550 = dma.hbm_to_vmem [thread:$0]  %s11, 1024, %s545, [#allocation21], 128, 128, 8
        $region48: #{ocr_block_forward.3} parent=11 // pred_fallthru
          _
        // Predicated region
        $region49: #{ocr_block_forward.3} parent=11 // pred_check
          %p551 = pneg %p342
        $region50: #{ocr_block_forward.3} parent=11 // pred_check_branch
          %553 = sbr.rel (%p551) target = $region52
        $region51: #{ocr_block_forward.3} parent=11 // pred_region
          %s555 = ssub.s32 512, 512
          %556 = vsyncadd [#allocation21], %s555
          %s557 = sshll.u32 [#allocation22], 4
          %s558 = int_to_ptr.vmem [resolvable:$true] %s557
          %563 = dma.hbm_to_vmem [thread:$0]  %s12, 512, %s558, [#allocation21], 64, 64, 4
        $region52: #{ocr_block_forward.3} parent=11 // pred_fallthru
          _
        // Predicated region
        $region53: #{ocr_block_forward.3} parent=11 // pred_check
          %p564 = pneg %p363
        $region54: #{ocr_block_forward.3} parent=11 // pred_check_branch
          %566 = sbr.rel (%p564) target = $region56
        $region55: #{ocr_block_forward.3} parent=11 // pred_region
          %s568 = ssub.s32 64, 64
          %569 = vsyncadd [#allocation24], %s568
          %s571 = sshll.u32 [#allocation23], 4
          %s572 = int_to_ptr.vmem [resolvable:$true] %s571
          %574 = dma.hbm_to_vmem [thread:$0]  %s13, 64, %s572, [#allocation24]
        $region56: #{ocr_block_forward.3} parent=11 // pred_fallthru
          _
      $region12: #{ocr_block_forward.3} parent=5 // pred_fallthru
        _
      %p575 = scmp.lt.s32.totalorder %s40, 2
      // Predicated region
      $region57: #{ocr_block_forward.3} parent=5 // pred_check
        %p576 = pneg %p575
      $region58: #{ocr_block_forward.3} parent=5 // pred_check_branch
        %578 = sbr.rel (%p576) target = $region60
      $region59: #{ocr_block_forward.3} parent=5 // pred_region
        // Predicated region
        $region61: #{ocr_block_forward.3} parent=59 // pred_check
          %p579 = pneg %p74
        $region62: #{ocr_block_forward.3} parent=59 // pred_check_branch
          %581 = sbr.rel (%p579) target = $region64
        $region63: #{ocr_block_forward.3} parent=59 // pred_region
          %s582 = sand.u32 %s64, 1
          %s583 = scalar_lea.sflag [#allocation3], %s582
          %s584 = sand.u32 %s64, 1
          %s585 = smul.addr %s584, 64
          %s586 = scalar_lea.vmem [#allocation2], %s585
          %s587 = smul.u32 2, %s47
          %s589 = ssub.s32 1024, 1024
          %590 = vsyncadd %s583, %s589
          %s591 = smul.addr %s48, 16
          %s592 = sadd.s32 %s587, %s591
          %s593 = smul.addr %s592, 64
          %s594 = scalar_lea.hbm %s0, %s593
          %s595 = sshll.u32 %s586, 4
          %s596 = int_to_ptr.vmem [resolvable:$true] %s595
          %601 = dma.hbm_to_vmem [thread:$0]  %s594, 1024, %s596, %s583, 128, 128, 8
        $region64: #{ocr_block_forward.3} parent=59 // pred_fallthru
          _
        // Predicated region
        $region65: #{ocr_block_forward.3} parent=59 // pred_check
          %p602 = pneg %p100
        $region66: #{ocr_block_forward.3} parent=59 // pred_check_branch
          %604 = sbr.rel (%p602) target = $region68
        $region67: #{ocr_block_forward.3} parent=59 // pred_region
          %s605 = sand.u32 %s40, 1
          %s606 = scalar_lea.sflag [#allocation6], %s605
          %s607 = sand.u32 %s90, 1
          %s608 = smul.addr %s607, 2
          %s609 = scalar_lea.vmem [#allocation5], %s608
          %s611 = ssub.s32 32, 32
          %612 = vsyncadd %s606, %s611
          %s613 = smul.addr %s48, 32
          %s614 = scalar_lea.hbm %s1, %s613
          %s616 = sshll.u32 %s609, 4
          %s617 = int_to_ptr.vmem [resolvable:$true] %s616
          %619 = dma.hbm_to_vmem [thread:$0]  %s614, 32, %s617, %s606
        $region68: #{ocr_block_forward.3} parent=59 // pred_fallthru
          _
        // Predicated region
        $region69: #{ocr_block_forward.3} parent=59 // pred_check
          %p620 = pneg %p126
        $region70: #{ocr_block_forward.3} parent=59 // pred_check_branch
          %622 = sbr.rel (%p620) target = $region72
        $region71: #{ocr_block_forward.3} parent=59 // pred_region
          %s623 = sand.u32 %s40, 1
          %s624 = scalar_lea.sflag [#allocation6], %s623
          %s625 = sand.u32 %s116, 1
          %s626 = smul.addr %s625, 2
          %s627 = scalar_lea.vmem [#allocation7], %s626
          %s629 = ssub.s32 32, 32
          %630 = vsyncadd %s624, %s629
          %s631 = smul.addr %s48, 32
          %s632 = scalar_lea.hbm %s2, %s631
          %s634 = sshll.u32 %s627, 4
          %s635 = int_to_ptr.vmem [resolvable:$true] %s634
          %637 = dma.hbm_to_vmem [thread:$0]  %s632, 32, %s635, %s624
        $region72: #{ocr_block_forward.3} parent=59 // pred_fallthru
          _
      $region60: #{ocr_block_forward.3} parent=5 // pred_fallthru
        _
      %p638 = scmp.le.s32.totalorder 1, %s40
      %p639 = scmp.lt.s32.totalorder %s40, 3
      %p640 = pnand %p638, %p639
      %p641 = pneg %p640
      // Predicated region
      $region73: #{ocr_block_forward.3} parent=5 // pred_check
        _
      $region74: #{ocr_block_forward.3} parent=5 // pred_check_branch
        %643 = sbr.rel (%p640) target = $region76
      $region75: #{ocr_block_forward.3} parent=5 // pred_region
        %s644 = ssub.s32 %s40, 1
        %s645 = sand.u32 %s67, 1
        %s646 = scalar_lea.sflag [#allocation3], %s645
        %s647 = sand.u32 %s67, 1
        %s648 = smul.addr %s647, 64
        %s649 = scalar_lea.vmem [#allocation2], %s648
        // Predicated region
        $region77: #{ocr_block_forward.3} parent=75 // pred_check
          %p650 = pneg %p80
        $region78: #{ocr_block_forward.3} parent=75 // pred_check_branch
          %652 = sbr.rel (%p650) target = $region80
        $region79: #{ocr_block_forward.3} parent=75 // pred_region
          %653 = dma.done %s646, 1024
        $region80: #{ocr_block_forward.3} parent=75 // pred_fallthru
          _
        %s654 = sand.u32 %s45, 1
        %s655 = scalar_lea.sflag [#allocation6], %s654
        %s656 = sand.u32 %s93, 1
        %s657 = smul.addr %s656, 2
        %s658 = scalar_lea.vmem [#allocation5], %s657
        // Predicated region
        $region81: #{ocr_block_forward.3} parent=75 // pred_check
          %p659 = pneg %p106
        $region82: #{ocr_block_forward.3} parent=75 // pred_check_branch
          %661 = sbr.rel (%p659) target = $region84
        $region83: #{ocr_block_forward.3} parent=75 // pred_region
          %662 = dma.done %s655, 32
        $region84: #{ocr_block_forward.3} parent=75 // pred_fallthru
          _
        %s663 = sand.u32 %s45, 1
        %s664 = scalar_lea.sflag [#allocation6], %s663
        %s665 = sand.u32 %s119, 1
        %s666 = smul.addr %s665, 2
        %s667 = scalar_lea.vmem [#allocation7], %s666
        // Predicated region
        $region85: #{ocr_block_forward.3} parent=75 // pred_check
          %p668 = pneg %p132
        $region86: #{ocr_block_forward.3} parent=75 // pred_check_branch
          %670 = sbr.rel (%p668) target = $region88
        $region87: #{ocr_block_forward.3} parent=75 // pred_region
          %671 = dma.done %s664, 32
        $region88: #{ocr_block_forward.3} parent=75 // pred_fallthru
          _
        // Predicated region
        $region89: #{ocr_block_forward.3} parent=75 // pred_check
          %p672 = pneg %p153
        $region90: #{ocr_block_forward.3} parent=75 // pred_check_branch
          %674 = sbr.rel (%p672) target = $region92
        $region91: #{ocr_block_forward.3} parent=75 // pred_region
          %675 = dma.done [#allocation9], 512
        $region92: #{ocr_block_forward.3} parent=75 // pred_fallthru
          _
        // Predicated region
        $region93: #{ocr_block_forward.3} parent=75 // pred_check
          %p676 = pneg %p174
        $region94: #{ocr_block_forward.3} parent=75 // pred_check_branch
          %678 = sbr.rel (%p676) target = $region96
        $region95: #{ocr_block_forward.3} parent=75 // pred_region
          %679 = dma.done [#allocation9], 512
        $region96: #{ocr_block_forward.3} parent=75 // pred_fallthru
          _
        // Predicated region
        $region97: #{ocr_block_forward.3} parent=75 // pred_check
          %p680 = pneg %p195
        $region98: #{ocr_block_forward.3} parent=75 // pred_check_branch
          %682 = sbr.rel (%p680) target = $region100
        $region99: #{ocr_block_forward.3} parent=75 // pred_region
          %683 = dma.done [#allocation12], 256
        $region100: #{ocr_block_forward.3} parent=75 // pred_fallthru
          _
        // Predicated region
        $region101: #{ocr_block_forward.3} parent=75 // pred_check
          %p684 = pneg %p216
        $region102: #{ocr_block_forward.3} parent=75 // pred_check_branch
          %686 = sbr.rel (%p684) target = $region104
        $region103: #{ocr_block_forward.3} parent=75 // pred_region
          %687 = dma.done [#allocation12], 512
        $region104: #{ocr_block_forward.3} parent=75 // pred_fallthru
          _
        // Predicated region
        $region105: #{ocr_block_forward.3} parent=75 // pred_check
          %p688 = pneg %p237
        $region106: #{ocr_block_forward.3} parent=75 // pred_check_branch
          %690 = sbr.rel (%p688) target = $region108
        $region107: #{ocr_block_forward.3} parent=75 // pred_region
          %691 = dma.done [#allocation15], 256
        $region108: #{ocr_block_forward.3} parent=75 // pred_fallthru
          _
        // Predicated region
        $region109: #{ocr_block_forward.3} parent=75 // pred_check
          %p692 = pneg %p258
        $region110: #{ocr_block_forward.3} parent=75 // pred_check_branch
          %694 = sbr.rel (%p692) target = $region112
        $region111: #{ocr_block_forward.3} parent=75 // pred_region
          %695 = dma.done [#allocation15], 1024
        $region112: #{ocr_block_forward.3} parent=75 // pred_fallthru
          _
        // Predicated region
        $region113: #{ocr_block_forward.3} parent=75 // pred_check
          %p696 = pneg %p279
        $region114: #{ocr_block_forward.3} parent=75 // pred_check_branch
          %698 = sbr.rel (%p696) target = $region116
        $region115: #{ocr_block_forward.3} parent=75 // pred_region
          %699 = dma.done [#allocation18], 512
        $region116: #{ocr_block_forward.3} parent=75 // pred_fallthru
          _
        // Predicated region
        $region117: #{ocr_block_forward.3} parent=75 // pred_check
          %p700 = pneg %p300
        $region118: #{ocr_block_forward.3} parent=75 // pred_check_branch
          %702 = sbr.rel (%p700) target = $region120
        $region119: #{ocr_block_forward.3} parent=75 // pred_region
          %703 = dma.done [#allocation18], 512
        $region120: #{ocr_block_forward.3} parent=75 // pred_fallthru
          _
        // Predicated region
        $region121: #{ocr_block_forward.3} parent=75 // pred_check
          %p704 = pneg %p321
        $region122: #{ocr_block_forward.3} parent=75 // pred_check_branch
          %706 = sbr.rel (%p704) target = $region124
        $region123: #{ocr_block_forward.3} parent=75 // pred_region
          %707 = dma.done [#allocation21], 1024
        $region124: #{ocr_block_forward.3} parent=75 // pred_fallthru
          _
        // Predicated region
        $region125: #{ocr_block_forward.3} parent=75 // pred_check
          %p708 = pneg %p342
        $region126: #{ocr_block_forward.3} parent=75 // pred_check_branch
          %710 = sbr.rel (%p708) target = $region128
        $region127: #{ocr_block_forward.3} parent=75 // pred_region
          %711 = dma.done [#allocation21], 512
        $region128: #{ocr_block_forward.3} parent=75 // pred_fallthru
          _
        // Predicated region
        $region129: #{ocr_block_forward.3} parent=75 // pred_check
          %p712 = pneg %p363
        $region130: #{ocr_block_forward.3} parent=75 // pred_check_branch
          %714 = sbr.rel (%p712) target = $region132
        $region131: #{ocr_block_forward.3} parent=75 // pred_region
          %715 = dma.done [#allocation24], 64
        $region132: #{ocr_block_forward.3} parent=75 // pred_fallthru
          _
        %s716 = sand.u32 %s67, 1
        %s717 = scalar_lea.sflag [#allocation3], %s716
        %s718 = sand.u32 %s67, 1
        %s719 = smul.addr %s718, 64
        %s720 = scalar_lea.vmem [#allocation2], %s719
        %p721 = pneg %p80
        %p722 = pneg %p77
        %s723 = sand.u32 %s45, 1
        %s724 = scalar_lea.sflag [#allocation6], %s723
        %s725 = sand.u32 %s93, 1
        %s726 = smul.addr %s725, 2
        %s727 = scalar_lea.vmem [#allocation5], %s726
        %p728 = pneg %p106
        %p729 = pneg %p103
        %s730 = sand.u32 %s45, 1
        %s731 = scalar_lea.sflag [#allocation6], %s730
        %s732 = sand.u32 %s119, 1
        %s733 = smul.addr %s732, 2
        %s734 = scalar_lea.vmem [#allocation7], %s733
        %p735 = pneg %p132
        %p736 = pneg %p129
        %p737 = pneg %p153
        %p738 = pneg %p150
        %p739 = pneg %p174
        %p740 = pneg %p171
        %p741 = pneg %p195
        %p742 = pneg %p192
        %p743 = pneg %p216
        %p744 = pneg %p213
        %p745 = pneg %p237
        %p746 = pneg %p234
        %p747 = pneg %p258
        %p748 = pneg %p255
        %p749 = pneg %p279
        %p750 = pneg %p276
        %p751 = pneg %p300
        %p752 = pneg %p297
        %p753 = pneg %p321
        %p754 = pneg %p318
        %p755 = pneg %p342
        %p756 = pneg %p339
        %p757 = pneg %p363
        %p758 = pneg %p360
        %p759 = pneg %p391
        %p760 = pneg %p388
        %s761 = sand.u32 %s378, 1
        %s762 = scalar_lea.sflag [#allocation4], %s761
        %s763 = sand.u32 %s378, 1
        %s764 = smul.addr %s763, 64
        %s765 = scalar_lea.vmem [#allocation25], %s764
        %p766 = pneg %p419
        %p767 = pneg %p416
        %s768 = sand.u32 %s406, 1
        %s769 = scalar_lea.sflag [#allocation27], %s768
        %s770 = sand.u32 %s406, 1
        %s771 = smul.addr %s770, 8
        %s772 = scalar_lea.vmem [#allocation26], %s771
        %s773 = smul.u32 2, %s49
        %s774 = smul.u32 2, %s49
        %s775 = smul.u32 2, %s49
        %v777 = vld [vmem:[%s649] sm:$0xff]
        %v778 = vld [vmem:[%s649 + $0x8] sm:$0xff]
        %v779 = vld [vmem:[%s649 + $0x10] sm:$0xff]
        %v780 = vld [vmem:[%s649 + $0x18] sm:$0xff]
        %v781 = vld [vmem:[%s649 + $0x20] sm:$0xff]
        %v782 = vld [vmem:[%s649 + $0x28] sm:$0xff]
        %v783 = vld [vmem:[%s649 + $0x30] sm:$0xff]
        %v784 = vld [vmem:[%s649 + $0x38] sm:$0xff]
        %v785 = vld [vmem:[#allocation8] sm:$0xf]
        %v786 = vld [vmem:[#allocation8 + $0x4] sm:$0xf]
        %v787 = vld [vmem:[#allocation8 + $0x8] sm:$0xf]
        %v788 = vld [vmem:[#allocation8 + $0xc] sm:$0xf]
        %v789 = vld [vmem:[#allocation8 + $0x10] sm:$0xf]
        %v790 = vld [vmem:[#allocation8 + $0x14] sm:$0xf]
        %v791 = vld [vmem:[#allocation8 + $0x18] sm:$0xf]
        %v792 = vld [vmem:[#allocation8 + $0x1c] sm:$0xf]
        %v793 = vld [vmem:[#allocation10] sm:$0xff]
        %v794 = vld [vmem:[#allocation10 + $0x8] sm:$0xff]
        %v795 = vld [vmem:[#allocation10 + $0x10] sm:$0xff]
        %v796 = vld [vmem:[#allocation10 + $0x18] sm:$0xff]
        %798 = vset.pattern.permute.xlu0 0
        %799 = vperm.xlu0 %798, %v793
        %v800 = vpop.permute.xlu0 %799
        %803 = vset.pattern.permute.xlu0 0
        %804 = vperm.xlu0 %803, %v794
        %v805 = vpop.permute.xlu0 %804
        %808 = vset.pattern.permute.xlu0 0
        %809 = vperm.xlu0 %808, %v795
        %v810 = vpop.permute.xlu0 %809
        %813 = vset.pattern.permute.xlu0 0
        %814 = vperm.xlu0 %813, %v796
        %v815 = vpop.permute.xlu0 %814
        %v825 = vunpack.c.l.b16 %v785
        %v826 = vunpack.c.l.b16 %v786
        %v827 = vunpack.c.l.b16 %v787
        %v828 = vunpack.c.l.b16 %v788
        %v829 = vunpack.c.l.b16 %v789
        %v830 = vunpack.c.l.b16 %v790
        %v831 = vunpack.c.l.b16 %v791
        %v832 = vunpack.c.l.b16 %v792
        %v833 = vpack.c.b16 %v826, %v825
        %v834 = vpack.c.b16 %v828, %v827
        %v835 = vpack.c.b16 %v830, %v829
        %v836 = vpack.c.b16 %v832, %v831
        %841 = vxpose.xlu0.c.b16.start [1/8] %v833, 128
        %842 = vxpose.xlu0.c.b16.cont [2/8] %v834, 128
        %843 = vxpose.xlu0.c.b16.cont [3/8] %v835, 128
        %844 = vxpose.xlu0.c.b16.cont [4/8] %v836, 128
        %845 = vxpose.xlu0.c.b16.cont [5/8] 0, 128
        %846 = vxpose.xlu0.c.b16.cont [6/8] 0, 128
        %847 = vxpose.xlu0.c.b16.cont [7/8] 0, 128
        %848 = vxpose.xlu0.c.b16.end [8/8] 0, 128
        %v849 = vpop.trf.xlu0
        %v850 = vpop.trf.xlu0
        %v851 = vpop.trf.xlu0
        %v852 = vpop.trf.xlu0
        %v853 = vpop.trf.xlu0
        %v854 = vpop.trf.xlu0
        %v855 = vpop.trf.xlu0
        %v856 = vpop.trf.xlu0
        %v865 = vunpack.c.l.b16 %v777
        %v866 = vunpack.c.h.b16 %v777
        %v867 = vunpack.c.l.b16 %v778
        %v868 = vunpack.c.h.b16 %v778
        %v869 = vunpack.c.l.b16 %v779
        %v870 = vunpack.c.h.b16 %v779
        %v871 = vunpack.c.l.b16 %v780
        %v872 = vunpack.c.h.b16 %v780
        %v873 = vunpack.c.l.b16 %v781
        %v874 = vunpack.c.h.b16 %v781
        %v875 = vunpack.c.l.b16 %v782
        %v876 = vunpack.c.h.b16 %v782
        %v877 = vunpack.c.l.b16 %v783
        %v878 = vunpack.c.h.b16 %v783
        %v879 = vunpack.c.l.b16 %v784
        %v880 = vunpack.c.h.b16 %v784
        %v881 = vpack.c.b16 %v867, %v865
        %v882 = vpack.c.b16 %v868, %v866
        %v883 = vpack.c.b16 %v871, %v869
        %v884 = vpack.c.b16 %v872, %v870
        %v885 = vpack.c.b16 %v875, %v873
        %v886 = vpack.c.b16 %v876, %v874
        %v887 = vpack.c.b16 %v879, %v877
        %v888 = vpack.c.b16 %v880, %v878
        %vm897 = vcmask 523264
        %v899 = vsel %vm897, %v849, 0
        %v902 = vsel %vm897, %v850, 0
        %904 = vmatprep.subr.bf16.mxu0 %v882
        %905 = vmatpush1.bf16.msra.mxu0 %v881
        %906 = vmatprep.subr.bf16.mxu0 %v884
        %907 = vmatpush1.bf16.msra.mxu0 %v883
        %908 = vmatprep.subr.bf16.mxu0 %v886
        %909 = vmatpush1.bf16.msra.mxu0 %v885
        %910 = vmatprep.subr.bf16.mxu0 %v888
        %911 = vmatpush1.bf16.msra.mxu0 %v887
        %912 = vmatprep.subr.bf16.mxu0 0
        %913 = vmatpush1.bf16.msra.mxu0 0
        %914 = vmatprep.subr.bf16.mxu0 0
        %915 = vmatpush1.bf16.msra.mxu0 0
        %916 = vmatprep.subr.bf16.mxu0 0
        %917 = vmatpush1.bf16.msra.mxu0 0
        %918 = vmatprep.subr.bf16.mxu0 0
        %919 = vmatpush1.bf16.msra.mxu0 0
        %920 = vmatprep.subr.bf16.mxu0 0
        %921 = vmatpush1.bf16.msra.mxu0 0
        %922 = vmatprep.subr.bf16.mxu0 0
        %923 = vmatpush1.bf16.msra.mxu0 0
        %924 = vmatprep.subr.bf16.mxu0 0
        %925 = vmatpush1.bf16.msra.mxu0 0
        %926 = vmatprep.subr.bf16.mxu0 0
        %927 = vmatpush1.bf16.msra.mxu0 0
        %928 = vmatprep.subr.bf16.mxu0 0
        %929 = vmatpush1.bf16.msra.mxu0 0
        %930 = vmatprep.subr.bf16.mxu0 0
        %931 = vmatpush1.bf16.msra.mxu0 0
        %932 = vmatprep.subr.bf16.mxu0 0
        %933 = vmatpush1.bf16.msra.mxu0 0
        %934 = vmatprep.subr.bf16.mxu0 0
        %935 = vmatpush1.bf16.msra.mxu0 0
        %936 = vmatprep.mubr.bf16.mxu0 0
        %937 = vmatmul.mubr.bf16.gmra.mrb[0].mxu0 %v899
        %v938 = vpop.f32.mrb[0].mxu0
        %v939 = vadd.f32 %v800, %v938
        %v940 = vpop.f32.mrb[0].mxu0
        %v941 = vadd.f32 %v800, %v940
        %v942 = vpop.f32.mrb[0].mxu0
        %v943 = vadd.f32 %v805, %v942
        %v944 = vpop.f32.mrb[0].mxu0
        %v945 = vadd.f32 %v805, %v944
        %946 = vmatprep.mubr.bf16.mxu0 0
        %947 = vmatmul.mubr.bf16.gmra.mrb[0].mxu0 %v902
        %v948 = vpop.f32.mrb[0].mxu0
        %v949 = vadd.f32 %v810, %v948
        %v950 = vpop.f32.mrb[0].mxu0
        %v951 = vadd.f32 %v810, %v950
        %v952 = vpop.f32.mrb[0].mxu0
        %v953 = vadd.f32 %v815, %v952
        %v954 = vpop.f32.mrb[0].mxu0
        %v955 = vadd.f32 %v815, %v954
        %956 = vdwg.mxu0
        %v957 = vmax.f32 %v939, 0.0
        %v958 = vmax.f32 %v941, 0.0
        %v959 = vmax.f32 %v943, 0.0
        %v960 = vmax.f32 %v945, 0.0
        %v961 = vmax.f32 %v949, 0.0
        %v962 = vmax.f32 %v951, 0.0
        %v963 = vmax.f32 %v953, 0.0
        %v964 = vmax.f32 %v955, 0.0
        %v965 = vld [vmem:[#allocation11] sm:$0xf]
        %v966 = vld [vmem:[#allocation11 + $0x4] sm:$0xf]
        %v967 = vld [vmem:[#allocation11 + $0x8] sm:$0xf]
        %v968 = vld [vmem:[#allocation11 + $0xc] sm:$0xf]
        %v969 = vpack.c.bf16 %v959, %v957
        %v970 = vpack.c.bf16 %v960, %v958
        %v971 = vpack.c.bf16 %v963, %v961
        %v972 = vpack.c.bf16 %v964, %v962
        %v973 = vld [vmem:[#allocation13] sm:$0xff]
        %v974 = vld [vmem:[#allocation13 + $0x8] sm:$0xff]
        %v975 = vld [vmem:[#allocation13 + $0x10] sm:$0xff]
        %v976 = vld [vmem:[#allocation13 + $0x18] sm:$0xff]
        %978 = vset.pattern.permute.xlu0 0
        %979 = vperm.xlu0 %978, %v973
        %v980 = vpop.permute.xlu0 %979
        %983 = vset.pattern.permute.xlu0 0
        %984 = vperm.xlu0 %983, %v974
        %v985 = vpop.permute.xlu0 %984
        %988 = vset.pattern.permute.xlu0 0
        %989 = vperm.xlu0 %988, %v975
        %v990 = vpop.permute.xlu0 %989
        %993 = vset.pattern.permute.xlu0 0
        %994 = vperm.xlu0 %993, %v976
        %v995 = vpop.permute.xlu0 %994
        %v1001 = vunpack.c.l.b16 %v965
        %v1002 = vunpack.c.l.b16 %v966
        %v1003 = vunpack.c.l.b16 %v967
        %v1004 = vunpack.c.l.b16 %v968
        %v1005 = vpack.c.b16 %v1002, %v1001
        %v1006 = vpack.c.b16 %v1004, %v1003
        %1009 = vxpose.xlu0.c.b16.start [1/8] %v1005, 128
        %1010 = vxpose.xlu0.c.b16.cont [2/8] %v1006, 128
        %1011 = vxpose.xlu0.c.b16.cont [3/8] 0, 128
        %1012 = vxpose.xlu0.c.b16.cont [4/8] 0, 128
        %1013 = vxpose.xlu0.c.b16.cont [5/8] 0, 128
        %1014 = vxpose.xlu0.c.b16.cont [6/8] 0, 128
        %1015 = vxpose.xlu0.c.b16.cont [7/8] 0, 128
        %1016 = vxpose.xlu0.c.b16.end [8/8] 0, 128
        %v1017 = vpop.trf.xlu0
        %v1018 = vpop.trf.xlu0
        %v1019 = vpop.trf.xlu0
        %v1020 = vpop.trf.xlu0
        %v1021 = vpop.trf.xlu0
        %v1022 = vpop.trf.xlu0
        %v1023 = vpop.trf.xlu0
        %v1024 = vpop.trf.xlu0
        %vm1025 = vcmask 261120
        %v1027 = vsel %vm1025, %v1017, 0
        %v1030 = vsel %vm1025, %v1018, 0
        %1032 = vmatprep.subr.bf16.mxu0 %v970
        %1033 = vmatpush1.bf16.msra.mxu0 %v969
        %1034 = vmatprep.subr.bf16.mxu0 %v972
        %1035 = vmatpush1.bf16.msra.mxu0 %v971
        %1036 = vmatprep.subr.bf16.mxu0 0
        %1037 = vmatpush1.bf16.msra.mxu0 0
        %1038 = vmatprep.subr.bf16.mxu0 0
        %1039 = vmatpush1.bf16.msra.mxu0 0
        %1040 = vmatprep.subr.bf16.mxu0 0
        %1041 = vmatpush1.bf16.msra.mxu0 0
        %1042 = vmatprep.subr.bf16.mxu0 0
        %1043 = vmatpush1.bf16.msra.mxu0 0
        %1044 = vmatprep.subr.bf16.mxu0 0
        %1045 = vmatpush1.bf16.msra.mxu0 0
        %1046 = vmatprep.subr.bf16.mxu0 0
        %1047 = vmatpush1.bf16.msra.mxu0 0
        %1048 = vmatprep.subr.bf16.mxu0 0
        %1049 = vmatpush1.bf16.msra.mxu0 0
        %1050 = vmatprep.subr.bf16.mxu0 0
        %1051 = vmatpush1.bf16.msra.mxu0 0
        %1052 = vmatprep.subr.bf16.mxu0 0
        %1053 = vmatpush1.bf16.msra.mxu0 0
        %1054 = vmatprep.subr.bf16.mxu0 0
        %1055 = vmatpush1.bf16.msra.mxu0 0
        %1056 = vmatprep.subr.bf16.mxu0 0
        %1057 = vmatpush1.bf16.msra.mxu0 0
        %1058 = vmatprep.subr.bf16.mxu0 0
        %1059 = vmatpush1.bf16.msra.mxu0 0
        %1060 = vmatprep.subr.bf16.mxu0 0
        %1061 = vmatpush1.bf16.msra.mxu0 0
        %1062 = vmatprep.subr.bf16.mxu0 0
        %1063 = vmatpush1.bf16.msra.mxu0 0
        %1064 = vmatprep.mubr.bf16.mxu0 0
        %1065 = vmatmul.mubr.bf16.gmra.mrb[0].mxu0 %v1027
        %v1066 = vpop.f32.mrb[0].mxu0
        %v1067 = vadd.f32 %v980, %v1066
        %v1068 = vpop.f32.mrb[0].mxu0
        %v1069 = vadd.f32 %v980, %v1068
        %v1070 = vpop.f32.mrb[0].mxu0
        %v1071 = vadd.f32 %v985, %v1070
        %v1072 = vpop.f32.mrb[0].mxu0
        %v1073 = vadd.f32 %v985, %v1072
        %1074 = vmatprep.mubr.bf16.mxu0 0
        %1075 = vmatmul.mubr.bf16.gmra.mrb[0].mxu0 %v1030
        %v1076 = vpop.f32.mrb[0].mxu0
        %v1077 = vadd.f32 %v990, %v1076
        %v1078 = vpop.f32.mrb[0].mxu0
        %v1079 = vadd.f32 %v990, %v1078
        %v1080 = vpop.f32.mrb[0].mxu0
        %v1081 = vadd.f32 %v995, %v1080
        %v1082 = vpop.f32.mrb[0].mxu0
        %v1083 = vadd.f32 %v995, %v1082
        %1084 = vdwg.mxu0
        %v1085 = vmax.f32 %v1067, 0.0
        %v1086 = vmax.f32 %v1069, 0.0
        %v1087 = vmax.f32 %v1071, 0.0
        %v1088 = vmax.f32 %v1073, 0.0
        %v1089 = vmax.f32 %v1077, 0.0
        %v1090 = vmax.f32 %v1079, 0.0
        %v1091 = vmax.f32 %v1081, 0.0
        %v1092 = vmax.f32 %v1083, 0.0
        %v1093 = vld [vmem:[%s658] sm:$0x3]
        %v1094 = vpack.c.bf16 %v1087, %v1085
        %v1095 = vpack.c.bf16 %v1088, %v1086
        %v1096 = vpack.c.bf16 %v1091, %v1089
        %v1097 = vpack.c.bf16 %v1092, %v1090
        %v1099 = vsel %vm1025, %v1093, 0
        %1101 = vmatprep.subr.bf16.mxu0 %v1095
        %1102 = vmatpush1.bf16.msra.mxu0 %v1094
        %1103 = vmatprep.subr.bf16.mxu0 %v1097
        %1104 = vmatpush1.bf16.msra.mxu0 %v1096
        %1105 = vmatprep.subr.bf16.mxu0 0
        %1106 = vmatpush1.bf16.msra.mxu0 0
        %1107 = vmatprep.subr.bf16.mxu0 0
        %1108 = vmatpush1.bf16.msra.mxu0 0
        %1109 = vmatprep.subr.bf16.mxu0 0
        %1110 = vmatpush1.bf16.msra.mxu0 0
        %1111 = vmatprep.subr.bf16.mxu0 0
        %1112 = vmatpush1.bf16.msra.mxu0 0
        %1113 = vmatprep.subr.bf16.mxu0 0
        %1114 = vmatpush1.bf16.msra.mxu0 0
        %1115 = vmatprep.subr.bf16.mxu0 0
        %1116 = vmatpush1.bf16.msra.mxu0 0
        %1117 = vmatprep.subr.bf16.mxu0 0
        %1118 = vmatpush1.bf16.msra.mxu0 0
        %1119 = vmatprep.subr.bf16.mxu0 0
        %1120 = vmatpush1.bf16.msra.mxu0 0
        %1121 = vmatprep.subr.bf16.mxu0 0
        %1122 = vmatpush1.bf16.msra.mxu0 0
        %1123 = vmatprep.subr.bf16.mxu0 0
        %1124 = vmatpush1.bf16.msra.mxu0 0
        %1125 = vmatprep.subr.bf16.mxu0 0
        %1126 = vmatpush1.bf16.msra.mxu0 0
        %1127 = vmatprep.subr.bf16.mxu0 0
        %1128 = vmatpush1.bf16.msra.mxu0 0
        %1129 = vmatprep.subr.bf16.mxu0 0
        %1130 = vmatpush1.bf16.msra.mxu0 0
        %1131 = vmatprep.subr.bf16.mxu0 0
        %1132 = vmatpush1.bf16.msra.mxu0 0
        %1133 = vmatprep.mubr.bf16.mxu0 0
        %1134 = vmatmul.mubr.bf16.gmra.mrb[0].mxu0 %v1099
        %v1135 = vpop.f32.mrb[0].mxu0
        %v1136 = vadd.f32 0.0, %v1135
        %v1137 = vpop.f32.mrb[0].mxu0
        %v1138 = vadd.f32 0.0, %v1137
        %v1139 = vpop.f32.mrb[0].mxu0
        %v1140 = vpop.f32.mrb[0].mxu0
        %1141 = vdwg.mxu0
        %vm1142 = vcmask 1043456
        %v1143 = vsel %vm1142, %v1136, -inf
        %v1144 = vrot.slane %v1143, 4
        %v1145 = vmax.f32 %v1143, %v1144
        %v1146 = vrot.slane %v1145, 2
        %v1147 = vmax.f32 %v1145, %v1146
        %v1148 = vrot.slane %v1147, 1
        %v1149 = vmax.f32 %v1147, %v1148
        %v1150 = vsel %vm1142, %v1138, -inf
        %v1151 = vrot.slane %v1150, 4
        %v1152 = vmax.f32 %v1150, %v1151
        %v1153 = vrot.slane %v1152, 2
        %v1154 = vmax.f32 %v1152, %v1153
        %v1155 = vrot.slane %v1154, 1
        %v1156 = vmax.f32 %v1154, %v1155
        %v1157 = vsub.f32 %v1136, %v1149
        %v1158 = vsub.f32 %v1138, %v1156
        %v1159 = vmul.f32 %v1157, 1.442695
        %v1160 = vpow.pop %v1159
        %v1161 = vmul.f32 %v1158, 1.442695
        %v1162 = vpow.pop %v1161
        %v1163 = vsel %vm1142, %v1160, 0.0
        %v1164 = vrot.slane %v1163, 4
        %v1165 = vadd.f32 %v1163, %v1164
        %v1166 = vrot.slane %v1165, 2
        %v1167 = vadd.f32 %v1165, %v1166
        %v1168 = vrot.slane %v1167, 1
        %v1169 = vadd.f32 %v1167, %v1168
        %v1170 = vsel %vm1142, %v1162, 0.0
        %v1171 = vrot.slane %v1170, 4
        %v1172 = vadd.f32 %v1170, %v1171
        %v1173 = vrot.slane %v1172, 2
        %v1174 = vadd.f32 %v1172, %v1173
        %v1175 = vrot.slane %v1174, 1
        %v1176 = vadd.f32 %v1174, %v1175
        %v1177 = vrcp.pop %v1169
        %v1178 = vrcp.pop %v1176
        %v1179 = vmul.f32 %v1160, %v1177
        %v1180 = vmul.f32 %v1162, %v1178
        %v1181 = vld [vmem:[%s667] sm:$0x3]
        %v1182 = vpack.c.bf16 %v1179, %v1179
        %v1183 = vpack.c.bf16 %v1180, %v1180
        %1184 = vxpose.xlu0.c.b16.start [1/8] %v1181, 128
        %1185 = vxpose.xlu0.c.b16.cont [2/8] 0, 128
        %1186 = vxpose.xlu0.c.b16.cont [3/8] 0, 128
        %1187 = vxpose.xlu0.c.b16.cont [4/8] 0, 128
        %1188 = vxpose.xlu0.c.b16.cont [5/8] 0, 128
        %1189 = vxpose.xlu0.c.b16.cont [6/8] 0, 128
        %1190 = vxpose.xlu0.c.b16.cont [7/8] 0, 128
        %1191 = vxpose.xlu0.c.b16.end [8/8] 0, 128
        %v1192 = vpop.trf.xlu0
        %v1193 = vpop.trf.xlu0
        %v1194 = vpop.trf.xlu0
        %v1195 = vpop.trf.xlu0
        %v1196 = vpop.trf.xlu0
        %v1197 = vpop.trf.xlu0
        %v1198 = vpop.trf.xlu0
        %v1199 = vpop.trf.xlu0
        %vm1200 = vcmask 31744
        %v1202 = vsel %vm1200, %v1192, 0
        %v1205 = vsel %vm1200, %v1193, 0
        %vm1207 = vcmask 1041408
        %v1209 = vsel %vm1207, %v1182, 0
        %v1212 = vsel %vm1207, %v1183, 0
        %1214 = vmatprep.subr.bf16.mxu0 %v1212
        %1215 = vmatpush1.bf16.msra.mxu0 %v1209
        %1216 = vmatprep.subr.bf16.mxu0 0
        %1217 = vmatpush1.bf16.msra.mxu0 0
        %1218 = vmatprep.subr.bf16.mxu0 0
        %1219 = vmatpush1.bf16.msra.mxu0 0
        %1220 = vmatprep.subr.bf16.mxu0 0
        %1221 = vmatpush1.bf16.msra.mxu0 0
        %1222 = vmatprep.subr.bf16.mxu0 0
        %1223 = vmatpush1.bf16.msra.mxu0 0
        %1224 = vmatprep.subr.bf16.mxu0 0
        %1225 = vmatpush1.bf16.msra.mxu0 0
        %1226 = vmatprep.subr.bf16.mxu0 0
        %1227 = vmatpush1.bf16.msra.mxu0 0
        %1228 = vmatprep.subr.bf16.mxu0 0
        %1229 = vmatpush1.bf16.msra.mxu0 0
        %1230 = vmatprep.subr.bf16.mxu0 0
        %1231 = vmatpush1.bf16.msra.mxu0 0
        %1232 = vmatprep.subr.bf16.mxu0 0
        %1233 = vmatpush1.bf16.msra.mxu0 0
        %1234 = vmatprep.subr.bf16.mxu0 0
        %1235 = vmatpush1.bf16.msra.mxu0 0
        %1236 = vmatprep.subr.bf16.mxu0 0
        %1237 = vmatpush1.bf16.msra.mxu0 0
        %1238 = vmatprep.subr.bf16.mxu0 0
        %1239 = vmatpush1.bf16.msra.mxu0 0
        %1240 = vmatprep.subr.bf16.mxu0 0
        %1241 = vmatpush1.bf16.msra.mxu0 0
        %1242 = vmatprep.subr.bf16.mxu0 0
        %1243 = vmatpush1.bf16.msra.mxu0 0
        %1244 = vmatprep.subr.bf16.mxu0 0
        %1245 = vmatpush1.bf16.msra.mxu0 0
        %1246 = vmatprep.mubr.bf16.mxu0 0
        %1247 = vmatmul.mubr.bf16.gmra.mrb[0].mxu0 %v1202
        %v1248 = vpop.f32.mrb[0].mxu0
        %v1249 = vadd.f32 0.0, %v1248
        %v1250 = vpop.f32.mrb[0].mxu0
        %v1251 = vadd.f32 0.0, %v1250
        %v1252 = vpop.f32.mrb[0].mxu0
        %v1253 = vadd.f32 0.0, %v1252
        %v1254 = vpop.f32.mrb[0].mxu0
        %v1255 = vadd.f32 0.0, %v1254
        %1256 = vmatprep.mubr.bf16.mxu0 0
        %1257 = vmatmul.mubr.bf16.gmra.mrb[0].mxu0 %v1205
        %v1258 = vpop.f32.mrb[0].mxu0
        %v1259 = vadd.f32 0.0, %v1258
        %v1260 = vpop.f32.mrb[0].mxu0
        %v1261 = vadd.f32 0.0, %v1260
        %v1262 = vpop.f32.mrb[0].mxu0
        %v1263 = vadd.f32 0.0, %v1262
        %v1264 = vpop.f32.mrb[0].mxu0
        %v1265 = vadd.f32 0.0, %v1264
        %1266 = vdwg.mxu0
        %v1267 = vld [vmem:[#allocation14] sm:$0xf]
        %v1268 = vld [vmem:[#allocation14 + $0x4] sm:$0xf]
        %v1269 = vld [vmem:[#allocation14 + $0x8] sm:$0xf]
        %v1270 = vld [vmem:[#allocation14 + $0xc] sm:$0xf]
        %v1271 = vpack.c.bf16 %v1253, %v1249
        %v1272 = vpack.c.bf16 %v1255, %v1251
        %v1273 = vpack.c.bf16 %v1263, %v1259
        %v1274 = vpack.c.bf16 %v1265, %v1261
        %v1275 = vld [vmem:[#allocation16] sm:$0xff]
        %v1276 = vld [vmem:[#allocation16 + $0x8] sm:$0xff]
        %v1277 = vld [vmem:[#allocation16 + $0x10] sm:$0xff]
        %v1278 = vld [vmem:[#allocation16 + $0x18] sm:$0xff]
        %v1279 = vld [vmem:[#allocation16 + $0x20] sm:$0xff]
        %v1280 = vld [vmem:[#allocation16 + $0x28] sm:$0xff]
        %v1281 = vld [vmem:[#allocation16 + $0x30] sm:$0xff]
        %v1282 = vld [vmem:[#allocation16 + $0x38] sm:$0xff]
        %1284 = vset.pattern.permute.xlu0 0
        %1285 = vperm.xlu0 %1284, %v1275
        %v1286 = vpop.permute.xlu0 %1285
        %1289 = vset.pattern.permute.xlu0 0
        %1290 = vperm.xlu0 %1289, %v1276
        %v1291 = vpop.permute.xlu0 %1290
        %1294 = vset.pattern.permute.xlu0 0
        %1295 = vperm.xlu0 %1294, %v1277
        %v1296 = vpop.permute.xlu0 %1295
        %1299 = vset.pattern.permute.xlu0 0
        %1300 = vperm.xlu0 %1299, %v1278
        %v1301 = vpop.permute.xlu0 %1300
        %1304 = vset.pattern.permute.xlu0 0
        %1305 = vperm.xlu0 %1304, %v1279
        %v1306 = vpop.permute.xlu0 %1305
        %1309 = vset.pattern.permute.xlu0 0
        %1310 = vperm.xlu0 %1309, %v1280
        %v1311 = vpop.permute.xlu0 %1310
        %1314 = vset.pattern.permute.xlu0 0
        %1315 = vperm.xlu0 %1314, %v1281
        %v1316 = vpop.permute.xlu0 %1315
        %1319 = vset.pattern.permute.xlu0 0
        %1320 = vperm.xlu0 %1319, %v1282
        %v1321 = vpop.permute.xlu0 %1320
        %v1327 = vunpack.c.l.b16 %v1267
        %v1328 = vunpack.c.l.b16 %v1268
        %v1329 = vunpack.c.l.b16 %v1269
        %v1330 = vunpack.c.l.b16 %v1270
        %v1331 = vpack.c.b16 %v1328, %v1327
        %v1332 = vpack.c.b16 %v1330, %v1329
        %1335 = vxpose.xlu0.c.b16.start [1/8] %v1331, 128
        %1336 = vxpose.xlu0.c.b16.cont [2/8] %v1332, 128
        %1337 = vxpose.xlu0.c.b16.cont [3/8] 0, 128
        %1338 = vxpose.xlu0.c.b16.cont [4/8] 0, 128
        %1339 = vxpose.xlu0.c.b16.cont [5/8] 0, 128
        %1340 = vxpose.xlu0.c.b16.cont [6/8] 0, 128
        %1341 = vxpose.xlu0.c.b16.cont [7/8] 0, 128
        %1342 = vxpose.xlu0.c.b16.end [8/8] 0, 128
        %v1343 = vpop.trf.xlu0
        %v1344 = vpop.trf.xlu0
        %v1345 = vpop.trf.xlu0
        %v1346 = vpop.trf.xlu0
        %v1347 = vpop.trf.xlu0
        %v1348 = vpop.trf.xlu0
        %v1349 = vpop.trf.xlu0
        %v1350 = vpop.trf.xlu0
        %v1352 = vsel %vm1025, %v1343, 0
        %v1355 = vsel %vm1025, %v1344, 0
        %v1358 = vsel %vm1025, %v1345, 0
        %v1361 = vsel %vm1025, %v1346, 0
        %1363 = vmatprep.subr.bf16.mxu0 %v1272
        %1364 = vmatpush1.bf16.msra.mxu0 %v1271
        %1365 = vmatprep.subr.bf16.mxu0 %v1274
        %1366 = vmatpush1.bf16.msra.mxu0 %v1273
        %1367 = vmatprep.subr.bf16.mxu0 0
        %1368 = vmatpush1.bf16.msra.mxu0 0
        %1369 = vmatprep.subr.bf16.mxu0 0
        %1370 = vmatpush1.bf16.msra.mxu0 0
        %1371 = vmatprep.subr.bf16.mxu0 0
        %1372 = vmatpush1.bf16.msra.mxu0 0
        %1373 = vmatprep.subr.bf16.mxu0 0
        %1374 = vmatpush1.bf16.msra.mxu0 0
        %1375 = vmatprep.subr.bf16.mxu0 0
        %1376 = vmatpush1.bf16.msra.mxu0 0
        %1377 = vmatprep.subr.bf16.mxu0 0
        %1378 = vmatpush1.bf16.msra.mxu0 0
        %1379 = vmatprep.subr.bf16.mxu0 0
        %1380 = vmatpush1.bf16.msra.mxu0 0
        %1381 = vmatprep.subr.bf16.mxu0 0
        %1382 = vmatpush1.bf16.msra.mxu0 0
        %1383 = vmatprep.subr.bf16.mxu0 0
        %1384 = vmatpush1.bf16.msra.mxu0 0
        %1385 = vmatprep.subr.bf16.mxu0 0
        %1386 = vmatpush1.bf16.msra.mxu0 0
        %1387 = vmatprep.subr.bf16.mxu0 0
        %1388 = vmatpush1.bf16.msra.mxu0 0
        %1389 = vmatprep.subr.bf16.mxu0 0
        %1390 = vmatpush1.bf16.msra.mxu0 0
        %1391 = vmatprep.subr.bf16.mxu0 0
        %1392 = vmatpush1.bf16.msra.mxu0 0
        %1393 = vmatprep.subr.bf16.mxu0 0
        %1394 = vmatpush1.bf16.msra.mxu0 0
        %1395 = vmatprep.mubr.bf16.mxu0 0
        %1396 = vmatmul.mubr.bf16.gmra.mrb[0].mxu0 %v1352
        %v1397 = vpop.f32.mrb[0].mxu0
        %v1398 = vadd.f32 %v1286, %v1397
        %v1399 = vpop.f32.mrb[0].mxu0
        %v1400 = vadd.f32 %v1286, %v1399
        %v1401 = vpop.f32.mrb[0].mxu0
        %v1402 = vadd.f32 %v1291, %v1401
        %v1403 = vpop.f32.mrb[0].mxu0
        %v1404 = vadd.f32 %v1291, %v1403
        %1405 = vmatprep.mubr.bf16.mxu0 0
        %1406 = vmatmul.mubr.bf16.gmra.mrb[0].mxu0 %v1355
        %v1407 = vpop.f32.mrb[0].mxu0
        %v1408 = vadd.f32 %v1296, %v1407
        %v1409 = vpop.f32.mrb[0].mxu0
        %v1410 = vadd.f32 %v1296, %v1409
        %v1411 = vpop.f32.mrb[0].mxu0
        %v1412 = vadd.f32 %v1301, %v1411
        %v1413 = vpop.f32.mrb[0].mxu0
        %v1414 = vadd.f32 %v1301, %v1413
        %1415 = vmatprep.mubr.bf16.mxu0 0
        %1416 = vmatmul.mubr.bf16.gmra.mrb[0].mxu0 %v1358
        %v1417 = vpop.f32.mrb[0].mxu0
        %v1418 = vadd.f32 %v1306, %v1417
        %v1419 = vpop.f32.mrb[0].mxu0
        %v1420 = vadd.f32 %v1306, %v1419
        %v1421 = vpop.f32.mrb[0].mxu0
        %v1422 = vadd.f32 %v1311, %v1421
        %v1423 = vpop.f32.mrb[0].mxu0
        %v1424 = vadd.f32 %v1311, %v1423
        %1425 = vmatprep.mubr.bf16.mxu0 0
        %1426 = vmatmul.mubr.bf16.gmra.mrb[0].mxu0 %v1361
        %v1427 = vpop.f32.mrb[0].mxu0
        %v1428 = vadd.f32 %v1316, %v1427
        %v1429 = vpop.f32.mrb[0].mxu0
        %v1430 = vadd.f32 %v1316, %v1429
        %v1431 = vpop.f32.mrb[0].mxu0
        %v1432 = vadd.f32 %v1321, %v1431
        %v1433 = vpop.f32.mrb[0].mxu0
        %v1434 = vadd.f32 %v1321, %v1433
        %1435 = vdwg.mxu0
        %v1436 = vmax.f32 %v1398, 0.0
        %v1437 = vmax.f32 %v1400, 0.0
        %v1438 = vmax.f32 %v1402, 0.0
        %v1439 = vmax.f32 %v1404, 0.0
        %v1440 = vmax.f32 %v1408, 0.0
        %v1441 = vmax.f32 %v1410, 0.0
        %v1442 = vmax.f32 %v1412, 0.0
        %v1443 = vmax.f32 %v1414, 0.0
        %v1444 = vmax.f32 %v1418, 0.0
        %v1445 = vmax.f32 %v1420, 0.0
        %v1446 = vmax.f32 %v1422, 0.0
        %v1447 = vmax.f32 %v1424, 0.0
        %v1448 = vmax.f32 %v1428, 0.0
        %v1449 = vmax.f32 %v1430, 0.0
        %v1450 = vmax.f32 %v1432, 0.0
        %v1451 = vmax.f32 %v1434, 0.0
        %v1452 = vld [vmem:[#allocation17] sm:$0xf]
        %v1453 = vld [vmem:[#allocation17 + $0x4] sm:$0xf]
        %v1454 = vld [vmem:[#allocation17 + $0x8] sm:$0xf]
        %v1455 = vld [vmem:[#allocation17 + $0xc] sm:$0xf]
        %v1456 = vld [vmem:[#allocation17 + $0x10] sm:$0xf]
        %v1457 = vld [vmem:[#allocation17 + $0x14] sm:$0xf]
        %v1458 = vld [vmem:[#allocation17 + $0x18] sm:$0xf]
        %v1459 = vld [vmem:[#allocation17 + $0x1c] sm:$0xf]
        %v1460 = vpack.c.bf16 %v1438, %v1436
        %v1461 = vpack.c.bf16 %v1439, %v1437
        %v1462 = vpack.c.bf16 %v1442, %v1440
        %v1463 = vpack.c.bf16 %v1443, %v1441
        %v1464 = vpack.c.bf16 %v1446, %v1444
        %v1465 = vpack.c.bf16 %v1447, %v1445
        %v1466 = vpack.c.bf16 %v1450, %v1448
        %v1467 = vpack.c.bf16 %v1451, %v1449
        %v1468 = vld [vmem:[#allocation19] sm:$0xf]
        %v1469 = vld [vmem:[#allocation19 + $0x4] sm:$0xf]
        %v1470 = vld [vmem:[#allocation19 + $0x8] sm:$0xf]
        %v1471 = vld [vmem:[#allocation19 + $0xc] sm:$0xf]
        %v1472 = vld [vmem:[#allocation19 + $0x10] sm:$0xf]
        %v1473 = vld [vmem:[#allocation19 + $0x14] sm:$0xf]
        %v1474 = vld [vmem:[#allocation19 + $0x18] sm:$0xf]
        %v1475 = vld [vmem:[#allocation19 + $0x1c] sm:$0xf]
        %v1484 = vunpack.c.l.b16 %v1468
        %v1485 = vunpack.c.l.b16 %v1469
        %v1486 = vunpack.c.l.b16 %v1470
        %v1487 = vunpack.c.l.b16 %v1471
        %v1488 = vunpack.c.l.b16 %v1472
        %v1489 = vunpack.c.l.b16 %v1473
        %v1490 = vunpack.c.l.b16 %v1474
        %v1491 = vunpack.c.l.b16 %v1475
        %v1492 = vpack.c.b16 %v1485, %v1484
        %v1493 = vpack.c.b16 %v1487, %v1486
        %v1494 = vpack.c.b16 %v1489, %v1488
        %v1495 = vpack.c.b16 %v1491, %v1490
        %1500 = vxpose.xlu0.c.b16.start [1/8] %v1492, 128
        %1501 = vxpose.xlu0.c.b16.cont [2/8] %v1493, 128
        %1502 = vxpose.xlu0.c.b16.cont [3/8] %v1494, 128
        %1503 = vxpose.xlu0.c.b16.cont [4/8] %v1495, 128
        %1504 = vxpose.xlu0.c.b16.cont [5/8] 0, 128
        %1505 = vxpose.xlu0.c.b16.cont [6/8] 0, 128
        %1506 = vxpose.xlu0.c.b16.cont [7/8] 0, 128
        %1507 = vxpose.xlu0.c.b16.end [8/8] 0, 128
        %v1508 = vpop.trf.xlu0
        %v1509 = vpop.trf.xlu0
        %v1510 = vpop.trf.xlu0
        %v1511 = vpop.trf.xlu0
        %v1512 = vpop.trf.xlu0
        %v1513 = vpop.trf.xlu0
        %v1514 = vpop.trf.xlu0
        %v1515 = vpop.trf.xlu0
        %v1517 = vsel %vm897, %v1508, 0
        %v1520 = vsel %vm897, %v1509, 0
        %v1523 = vsel %vm897, %v1510, 0
        %v1526 = vsel %vm897, %v1511, 0
        %1528 = vmatprep.subr.bf16.mxu0 %v882
        %1529 = vmatpush1.bf16.msra.mxu0 %v881
        %1530 = vmatprep.subr.bf16.mxu0 %v884
        %1531 = vmatpush1.bf16.msra.mxu0 %v883
        %1532 = vmatprep.subr.bf16.mxu0 %v886
        %1533 = vmatpush1.bf16.msra.mxu0 %v885
        %1534 = vmatprep.subr.bf16.mxu0 %v888
        %1535 = vmatpush1.bf16.msra.mxu0 %v887
        %1536 = vmatprep.subr.bf16.mxu0 0
        %1537 = vmatpush1.bf16.msra.mxu0 0
        %1538 = vmatprep.subr.bf16.mxu0 0
        %1539 = vmatpush1.bf16.msra.mxu0 0
        %1540 = vmatprep.subr.bf16.mxu0 0
        %1541 = vmatpush1.bf16.msra.mxu0 0
        %1542 = vmatprep.subr.bf16.mxu0 0
        %1543 = vmatpush1.bf16.msra.mxu0 0
        %1544 = vmatprep.subr.bf16.mxu0 0
        %1545 = vmatpush1.bf16.msra.mxu0 0
        %1546 = vmatprep.subr.bf16.mxu0 0
        %1547 = vmatpush1.bf16.msra.mxu0 0
        %1548 = vmatprep.subr.bf16.mxu0 0
        %1549 = vmatpush1.bf16.msra.mxu0 0
        %1550 = vmatprep.subr.bf16.mxu0 0
        %1551 = vmatpush1.bf16.msra.mxu0 0
        %1552 = vmatprep.subr.bf16.mxu0 0
        %1553 = vmatpush1.bf16.msra.mxu0 0
        %1554 = vmatprep.subr.bf16.mxu0 0
        %1555 = vmatpush1.bf16.msra.mxu0 0
        %1556 = vmatprep.subr.bf16.mxu0 0
        %1557 = vmatpush1.bf16.msra.mxu0 0
        %1558 = vmatprep.subr.bf16.mxu0 0
        %1559 = vmatpush1.bf16.msra.mxu0 0
        %1560 = vmatprep.mubr.bf16.mxu0 0
        %1561 = vmatmul.mubr.bf16.gmra.mrb[0].mxu0 %v1517
        %v1562 = vpop.f32.mrb[0].mxu0
        %v1563 = vadd.f32 0.0, %v1562
        %v1564 = vpop.f32.mrb[0].mxu0
        %v1565 = vadd.f32 0.0, %v1564
        %v1566 = vpop.f32.mrb[0].mxu0
        %v1567 = vadd.f32 0.0, %v1566
        %v1568 = vpop.f32.mrb[0].mxu0
        %v1569 = vadd.f32 0.0, %v1568
        %1570 = vmatprep.mubr.bf16.mxu0 0
        %1571 = vmatmul.mubr.bf16.gmra.mrb[0].mxu0 %v1520
        %v1572 = vpop.f32.mrb[0].mxu0
        %v1573 = vadd.f32 0.0, %v1572
        %v1574 = vpop.f32.mrb[0].mxu0
        %v1575 = vadd.f32 0.0, %v1574
        %v1576 = vpop.f32.mrb[0].mxu0
        %v1577 = vadd.f32 0.0, %v1576
        %v1578 = vpop.f32.mrb[0].mxu0
        %v1579 = vadd.f32 0.0, %v1578
        %1580 = vmatprep.mubr.bf16.mxu0 0
        %1581 = vmatmul.mubr.bf16.gmra.mrb[0].mxu0 %v1523
        %v1582 = vpop.f32.mrb[0].mxu0
        %v1583 = vadd.f32 0.0, %v1582
        %v1584 = vpop.f32.mrb[0].mxu0
        %v1585 = vadd.f32 0.0, %v1584
        %v1586 = vpop.f32.mrb[0].mxu0
        %v1587 = vadd.f32 0.0, %v1586
        %v1588 = vpop.f32.mrb[0].mxu0
        %v1589 = vadd.f32 0.0, %v1588
        %1590 = vmatprep.mubr.bf16.mxu0 0
        %1591 = vmatmul.mubr.bf16.gmra.mrb[0].mxu0 %v1526
        %v1592 = vpop.f32.mrb[0].mxu0
        %v1593 = vadd.f32 0.0, %v1592
        %v1594 = vpop.f32.mrb[0].mxu0
        %v1595 = vadd.f32 0.0, %v1594
        %v1596 = vpop.f32.mrb[0].mxu0
        %v1597 = vadd.f32 0.0, %v1596
        %v1598 = vpop.f32.mrb[0].mxu0
        %v1599 = vadd.f32 0.0, %v1598
        %1600 = vdwg.mxu0
        %v1609 = vunpack.c.l.b16 %v1452
        %v1610 = vunpack.c.l.b16 %v1453
        %v1611 = vunpack.c.l.b16 %v1454
        %v1612 = vunpack.c.l.b16 %v1455
        %v1613 = vunpack.c.l.b16 %v1456
        %v1614 = vunpack.c.l.b16 %v1457
        %v1615 = vunpack.c.l.b16 %v1458
        %v1616 = vunpack.c.l.b16 %v1459
        %v1617 = vpack.c.b16 %v1610, %v1609
        %v1618 = vpack.c.b16 %v1612, %v1611
        %v1619 = vpack.c.b16 %v1614, %v1613
        %v1620 = vpack.c.b16 %v1616, %v1615
        %1625 = vxpose.xlu0.c.b16.start [1/8] %v1617, 128
        %1626 = vxpose.xlu0.c.b16.cont [2/8] %v1618, 128
        %1627 = vxpose.xlu0.c.b16.cont [3/8] %v1619, 128
        %1628 = vxpose.xlu0.c.b16.cont [4/8] %v1620, 128
        %1629 = vxpose.xlu0.c.b16.cont [5/8] 0, 128
        %1630 = vxpose.xlu0.c.b16.cont [6/8] 0, 128
        %1631 = vxpose.xlu0.c.b16.cont [7/8] 0, 128
        %1632 = vxpose.xlu0.c.b16.end [8/8] 0, 128
        %v1633 = vpop.trf.xlu0
        %v1634 = vpop.trf.xlu0
        %v1635 = vpop.trf.xlu0
        %v1636 = vpop.trf.xlu0
        %v1637 = vpop.trf.xlu0
        %v1638 = vpop.trf.xlu0
        %v1639 = vpop.trf.xlu0
        %v1640 = vpop.trf.xlu0
        %v1642 = vsel %vm897, %v1633, 0
        %v1645 = vsel %vm897, %v1634, 0
        %v1648 = vsel %vm897, %v1635, 0
        %v1651 = vsel %vm897, %v1636, 0
        %1653 = vmatprep.subr.bf16.mxu0 %v1461
        %1654 = vmatpush1.bf16.msra.mxu0 %v1460
        %1655 = vmatprep.subr.bf16.mxu0 %v1463
        %1656 = vmatpush1.bf16.msra.mxu0 %v1462
        %1657 = vmatprep.subr.bf16.mxu0 %v1465
        %1658 = vmatpush1.bf16.msra.mxu0 %v1464
        %1659 = vmatprep.subr.bf16.mxu0 %v1467
        %1660 = vmatpush1.bf16.msra.mxu0 %v1466
        %1661 = vmatprep.subr.bf16.mxu0 0
        %1662 = vmatpush1.bf16.msra.mxu0 0
        %1663 = vmatprep.subr.bf16.mxu0 0
        %1664 = vmatpush1.bf16.msra.mxu0 0
        %1665 = vmatprep.subr.bf16.mxu0 0
        %1666 = vmatpush1.bf16.msra.mxu0 0
        %1667 = vmatprep.subr.bf16.mxu0 0
        %1668 = vmatpush1.bf16.msra.mxu0 0
        %1669 = vmatprep.subr.bf16.mxu0 0
        %1670 = vmatpush1.bf16.msra.mxu0 0
        %1671 = vmatprep.subr.bf16.mxu0 0
        %1672 = vmatpush1.bf16.msra.mxu0 0
        %1673 = vmatprep.subr.bf16.mxu0 0
        %1674 = vmatpush1.bf16.msra.mxu0 0
        %1675 = vmatprep.subr.bf16.mxu0 0
        %1676 = vmatpush1.bf16.msra.mxu0 0
        %1677 = vmatprep.subr.bf16.mxu0 0
        %1678 = vmatpush1.bf16.msra.mxu0 0
        %1679 = vmatprep.subr.bf16.mxu0 0
        %1680 = vmatpush1.bf16.msra.mxu0 0
        %1681 = vmatprep.subr.bf16.mxu0 0
        %1682 = vmatpush1.bf16.msra.mxu0 0
        %1683 = vmatprep.subr.bf16.mxu0 0
        %1684 = vmatpush1.bf16.msra.mxu0 0
        %1685 = vmatprep.mubr.bf16.mxu0 0
        %1686 = vmatmul.mubr.bf16.gmra.mrb[0].mxu0 %v1642
        %v1687 = vpop.f32.mrb[0].mxu0
        %v1688 = vadd.f32 %v1563, %v1687
        %v1689 = vpop.f32.mrb[0].mxu0
        %v1690 = vadd.f32 %v1565, %v1689
        %v1691 = vpop.f32.mrb[0].mxu0
        %v1692 = vadd.f32 %v1567, %v1691
        %v1693 = vpop.f32.mrb[0].mxu0
        %v1694 = vadd.f32 %v1569, %v1693
        %1695 = vmatprep.mubr.bf16.mxu0 0
        %1696 = vmatmul.mubr.bf16.gmra.mrb[0].mxu0 %v1645
        %v1697 = vpop.f32.mrb[0].mxu0
        %v1698 = vadd.f32 %v1573, %v1697
        %v1699 = vpop.f32.mrb[0].mxu0
        %v1700 = vadd.f32 %v1575, %v1699
        %v1701 = vpop.f32.mrb[0].mxu0
        %v1702 = vadd.f32 %v1577, %v1701
        %v1703 = vpop.f32.mrb[0].mxu0
        %v1704 = vadd.f32 %v1579, %v1703
        %1705 = vmatprep.mubr.bf16.mxu0 0
        %1706 = vmatmul.mubr.bf16.gmra.mrb[0].mxu0 %v1648
        %v1707 = vpop.f32.mrb[0].mxu0
        %v1708 = vadd.f32 %v1583, %v1707
        %v1709 = vpop.f32.mrb[0].mxu0
        %v1710 = vadd.f32 %v1585, %v1709
        %v1711 = vpop.f32.mrb[0].mxu0
        %v1712 = vadd.f32 %v1587, %v1711
        %v1713 = vpop.f32.mrb[0].mxu0
        %v1714 = vadd.f32 %v1589, %v1713
        %1715 = vmatprep.mubr.bf16.mxu0 0
        %1716 = vmatmul.mubr.bf16.gmra.mrb[0].mxu0 %v1651
        %v1717 = vpop.f32.mrb[0].mxu0
        %v1718 = vadd.f32 %v1593, %v1717
        %v1719 = vpop.f32.mrb[0].mxu0
        %v1720 = vadd.f32 %v1595, %v1719
        %v1721 = vpop.f32.mrb[0].mxu0
        %v1722 = vadd.f32 %v1597, %v1721
        %v1723 = vpop.f32.mrb[0].mxu0
        %v1724 = vadd.f32 %v1599, %v1723
        %1725 = vdwg.mxu0
        %v1726 = vld [vmem:[#allocation20] sm:$0xff]
        %v1727 = vld [vmem:[#allocation20 + $0x8] sm:$0xff]
        %v1728 = vld [vmem:[#allocation20 + $0x10] sm:$0xff]
        %v1729 = vld [vmem:[#allocation20 + $0x18] sm:$0xff]
        %v1730 = vld [vmem:[#allocation20 + $0x20] sm:$0xff]
        %v1731 = vld [vmem:[#allocation20 + $0x28] sm:$0xff]
        %v1732 = vld [vmem:[#allocation20 + $0x30] sm:$0xff]
        %v1733 = vld [vmem:[#allocation20 + $0x38] sm:$0xff]
        %1735 = vset.pattern.permute.xlu0 0
        %1736 = vperm.xlu0 %1735, %v1726
        %v1737 = vpop.permute.xlu0 %1736
        %1740 = vset.pattern.permute.xlu0 0
        %1741 = vperm.xlu0 %1740, %v1727
        %v1742 = vpop.permute.xlu0 %1741
        %1745 = vset.pattern.permute.xlu0 0
        %1746 = vperm.xlu0 %1745, %v1728
        %v1747 = vpop.permute.xlu0 %1746
        %1750 = vset.pattern.permute.xlu0 0
        %1751 = vperm.xlu0 %1750, %v1729
        %v1752 = vpop.permute.xlu0 %1751
        %1755 = vset.pattern.permute.xlu0 0
        %1756 = vperm.xlu0 %1755, %v1730
        %v1757 = vpop.permute.xlu0 %1756
        %1760 = vset.pattern.permute.xlu0 0
        %1761 = vperm.xlu0 %1760, %v1731
        %v1762 = vpop.permute.xlu0 %1761
        %1765 = vset.pattern.permute.xlu0 0
        %1766 = vperm.xlu0 %1765, %v1732
        %v1767 = vpop.permute.xlu0 %1766
        %1770 = vset.pattern.permute.xlu0 0
        %1771 = vperm.xlu0 %1770, %v1733
        %v1772 = vpop.permute.xlu0 %1771
        %v1774 = vadd.f32 %v1688, %v1737
        %v1775 = vadd.f32 %v1690, %v1737
        %v1776 = vadd.f32 %v1692, %v1742
        %v1777 = vadd.f32 %v1694, %v1742
        %v1778 = vadd.f32 %v1698, %v1747
        %v1779 = vadd.f32 %v1700, %v1747
        %v1780 = vadd.f32 %v1702, %v1752
        %v1781 = vadd.f32 %v1704, %v1752
        %v1782 = vadd.f32 %v1708, %v1757
        %v1783 = vadd.f32 %v1710, %v1757
        %v1784 = vadd.f32 %v1712, %v1762
        %v1785 = vadd.f32 %v1714, %v1762
        %v1786 = vadd.f32 %v1718, %v1767
        %v1787 = vadd.f32 %v1720, %v1767
        %v1788 = vadd.f32 %v1722, %v1772
        %v1789 = vadd.f32 %v1724, %v1772
        %v1790 = vmax.f32 %v1774, 0.0
        %v1791 = vmax.f32 %v1775, 0.0
        %v1792 = vmax.f32 %v1776, 0.0
        %v1793 = vmax.f32 %v1777, 0.0
        %v1794 = vmax.f32 %v1778, 0.0
        %v1795 = vmax.f32 %v1779, 0.0
        %v1796 = vmax.f32 %v1780, 0.0
        %v1797 = vmax.f32 %v1781, 0.0
        %v1798 = vmax.f32 %v1782, 0.0
        %v1799 = vmax.f32 %v1783, 0.0
        %v1800 = vmax.f32 %v1784, 0.0
        %v1801 = vmax.f32 %v1785, 0.0
        %v1802 = vmax.f32 %v1786, 0.0
        %v1803 = vmax.f32 %v1787, 0.0
        %v1804 = vmax.f32 %v1788, 0.0
        %v1805 = vmax.f32 %v1789, 0.0
        %v1806 = vpack.c.bf16 %v1792, %v1790
        %v1807 = vpack.c.bf16 %v1793, %v1791
        %v1808 = vpack.c.bf16 %v1796, %v1794
        %v1809 = vpack.c.bf16 %v1797, %v1795
        %v1810 = vpack.c.bf16 %v1800, %v1798
        %v1811 = vpack.c.bf16 %v1801, %v1799
        %v1812 = vpack.c.bf16 %v1804, %v1802
        %v1813 = vpack.c.bf16 %v1805, %v1803
        %v1822 = vunpack.c.l.b16 %v1806
        %v1823 = vunpack.c.l.b16 %v1807
        %v1824 = vunpack.c.h.b16 %v1806
        %v1825 = vunpack.c.h.b16 %v1807
        %v1826 = vunpack.c.l.b16 %v1808
        %v1827 = vunpack.c.l.b16 %v1809
        %v1828 = vunpack.c.h.b16 %v1808
        %v1829 = vunpack.c.h.b16 %v1809
        %v1830 = vunpack.c.l.b16 %v1810
        %v1831 = vunpack.c.l.b16 %v1811
        %v1832 = vunpack.c.h.b16 %v1810
        %v1833 = vunpack.c.h.b16 %v1811
        %v1834 = vunpack.c.l.b16 %v1812
        %v1835 = vunpack.c.l.b16 %v1813
        %v1836 = vunpack.c.h.b16 %v1812
        %v1837 = vunpack.c.h.b16 %v1813
        %v1838 = vpack.c.b16 %v1823, %v1822
        %v1839 = vpack.c.b16 %v1825, %v1824
        %v1840 = vpack.c.b16 %v1827, %v1826
        %v1841 = vpack.c.b16 %v1829, %v1828
        %v1842 = vpack.c.b16 %v1831, %v1830
        %v1843 = vpack.c.b16 %v1833, %v1832
        %v1844 = vpack.c.b16 %v1835, %v1834
        %v1845 = vpack.c.b16 %v1837, %v1836
        %1854 = vst [vmem:[%s765] sm:$0xff] %v1838
        %1855 = vst [vmem:[%s765 + $0x8] sm:$0xff] %v1839
        %1856 = vst [vmem:[%s765 + $0x10] sm:$0xff] %v1840
        %1857 = vst [vmem:[%s765 + $0x18] sm:$0xff] %v1841
        %1858 = vst [vmem:[%s765 + $0x20] sm:$0xff] %v1842
        %1859 = vst [vmem:[%s765 + $0x28] sm:$0xff] %v1843
        %1860 = vst [vmem:[%s765 + $0x30] sm:$0xff] %v1844
        %1861 = vst [vmem:[%s765 + $0x38] sm:$0xff] %v1845
        %v1862 = vld [vmem:[#allocation22] sm:$0xf]
        %v1863 = vld [vmem:[#allocation22 + $0x4] sm:$0xf]
        %v1864 = vld [vmem:[#allocation22 + $0x8] sm:$0xf]
        %v1865 = vld [vmem:[#allocation22 + $0xc] sm:$0xf]
        %v1866 = vld [vmem:[#allocation22 + $0x10] sm:$0xf]
        %v1867 = vld [vmem:[#allocation22 + $0x14] sm:$0xf]
        %v1868 = vld [vmem:[#allocation22 + $0x18] sm:$0xf]
        %v1869 = vld [vmem:[#allocation22 + $0x1c] sm:$0xf]
        %v1870 = vld [vmem:[#allocation23] sm:$0xf]
        %1872 = vset.pattern.permute.xlu0 0
        %1873 = vperm.xlu0 %1872, %v1870
        %v1874 = vpop.permute.xlu0 %1873
        %v1884 = vunpack.c.l.b16 %v1862
        %v1885 = vunpack.c.l.b16 %v1863
        %v1886 = vunpack.c.l.b16 %v1864
        %v1887 = vunpack.c.l.b16 %v1865
        %v1888 = vunpack.c.l.b16 %v1866
        %v1889 = vunpack.c.l.b16 %v1867
        %v1890 = vunpack.c.l.b16 %v1868
        %v1891 = vunpack.c.l.b16 %v1869
        %v1892 = vpack.c.b16 %v1885, %v1884
        %v1893 = vpack.c.b16 %v1887, %v1886
        %v1894 = vpack.c.b16 %v1889, %v1888
        %v1895 = vpack.c.b16 %v1891, %v1890
        %1900 = vxpose.xlu0.c.b16.start [1/8] %v1892, 128
        %1901 = vxpose.xlu0.c.b16.cont [2/8] %v1893, 128
        %1902 = vxpose.xlu0.c.b16.cont [3/8] %v1894, 128
        %1903 = vxpose.xlu0.c.b16.cont [4/8] %v1895, 128
        %1904 = vxpose.xlu0.c.b16.cont [5/8] 0, 128
        %1905 = vxpose.xlu0.c.b16.cont [6/8] 0, 128
        %1906 = vxpose.xlu0.c.b16.cont [7/8] 0, 128
        %1907 = vxpose.xlu0.c.b16.end [8/8] 0, 128
        %v1908 = vpop.trf.xlu0
        %v1909 = vpop.trf.xlu0
        %v1910 = vpop.trf.xlu0
        %v1911 = vpop.trf.xlu0
        %v1912 = vpop.trf.xlu0
        %v1913 = vpop.trf.xlu0
        %v1914 = vpop.trf.xlu0
        %v1915 = vpop.trf.xlu0
        %v1917 = vsel %vm897, %v1908, 0
        %1919 = vmatprep.subr.bf16.mxu0 %v1807
        %1920 = vmatpush1.bf16.msra.mxu0 %v1806
        %1921 = vmatprep.subr.bf16.mxu0 %v1809
        %1922 = vmatpush1.bf16.msra.mxu0 %v1808
        %1923 = vmatprep.subr.bf16.mxu0 %v1811
        %1924 = vmatpush1.bf16.msra.mxu0 %v1810
        %1925 = vmatprep.subr.bf16.mxu0 %v1813
        %1926 = vmatpush1.bf16.msra.mxu0 %v1812
        %1927 = vmatprep.subr.bf16.mxu0 0
        %1928 = vmatpush1.bf16.msra.mxu0 0
        %1929 = vmatprep.subr.bf16.mxu0 0
        %1930 = vmatpush1.bf16.msra.mxu0 0
        %1931 = vmatprep.subr.bf16.mxu0 0
        %1932 = vmatpush1.bf16.msra.mxu0 0
        %1933 = vmatprep.subr.bf16.mxu0 0
        %1934 = vmatpush1.bf16.msra.mxu0 0
        %1935 = vmatprep.subr.bf16.mxu0 0
        %1936 = vmatpush1.bf16.msra.mxu0 0
        %1937 = vmatprep.subr.bf16.mxu0 0
        %1938 = vmatpush1.bf16.msra.mxu0 0
        %1939 = vmatprep.subr.bf16.mxu0 0
        %1940 = vmatpush1.bf16.msra.mxu0 0
        %1941 = vmatprep.subr.bf16.mxu0 0
        %1942 = vmatpush1.bf16.msra.mxu0 0
        %1943 = vmatprep.subr.bf16.mxu0 0
        %1944 = vmatpush1.bf16.msra.mxu0 0
        %1945 = vmatprep.subr.bf16.mxu0 0
        %1946 = vmatpush1.bf16.msra.mxu0 0
        %1947 = vmatprep.subr.bf16.mxu0 0
        %1948 = vmatpush1.bf16.msra.mxu0 0
        %1949 = vmatprep.subr.bf16.mxu0 0
        %1950 = vmatpush1.bf16.msra.mxu0 0
        %1951 = vmatprep.mubr.bf16.mxu0 0
        %1952 = vmatmul.mubr.bf16.gmra.mrb[0].mxu0 %v1917
        %v1953 = vpop.f32.mrb[0].mxu0
        %v1954 = vadd.f32 %v1874, %v1953
        %v1955 = vpop.f32.mrb[0].mxu0
        %v1956 = vadd.f32 %v1874, %v1955
        %v1957 = vpop.f32.mrb[0].mxu0
        %v1958 = vpop.f32.mrb[0].mxu0
        %1959 = vdwg.mxu0
        %v1962 = vcombine.low %v1954, %v1956
        %1964 = vst [vmem:[%s772] sm:$0xff] %v1962
        %s1965 = sand.u32 %s378, 1
        %s1966 = scalar_lea.sflag [#allocation4], %s1965
        %s1967 = sand.u32 %s378, 1
        %s1968 = smul.addr %s1967, 64
        %s1969 = scalar_lea.vmem [#allocation25], %s1968
        %s1970 = sand.u32 %s406, 1
        %s1971 = scalar_lea.sflag [#allocation27], %s1970
        %s1972 = sand.u32 %s406, 1
        %s1973 = smul.addr %s1972, 8
        %s1974 = scalar_lea.vmem [#allocation26], %s1973
        // Predicated region
        $region133: #{ocr_block_forward.3} parent=75 // pred_check
          %p1975 = pneg %p388
        $region134: #{ocr_block_forward.3} parent=75 // pred_check_branch
          %1977 = sbr.rel (%p1975) target = $region136
        $region135: #{ocr_block_forward.3} parent=75 // pred_region
          %s1978 = smul.u32 2, %s49
          %s1980 = ssub.s32 1024, 1024
          %1981 = vsyncadd %s1966, %s1980
          %s1982 = smul.addr %s50, 16
          %s1983 = sadd.s32 %s1978, %s1982
          %s1984 = smul.addr %s1983, 64
          %s1985 = scalar_lea.hbm %s14, %s1984
          %s1986 = sshll.u32 %s1969, 4
          %s1987 = int_to_ptr.vmem [resolvable:$true] %s1986
          %1992 = dma.vmem_to_hbm [thread:$0]  %s1987, 1024, %s1985, %s1966, 128, 128, 8
        $region136: #{ocr_block_forward.3} parent=75 // pred_fallthru
          _
        // Predicated region
        $region137: #{ocr_block_forward.3} parent=75 // pred_check
          %p1993 = pneg %p416
        $region138: #{ocr_block_forward.3} parent=75 // pred_check_branch
          %1995 = sbr.rel (%p1993) target = $region140
        $region139: #{ocr_block_forward.3} parent=75 // pred_region
          %s1996 = smul.u32 2, %s49
          %s1998 = ssub.s32 128, 128
          %1999 = vsyncadd %s1971, %s1998
          %s2000 = smul.addr %s50, 2
          %s2001 = sadd.s32 %s1996, %s2000
          %s2002 = smul.addr %s2001, 64
          %s2003 = scalar_lea.hbm %s15, %s2002
          %s2005 = sshll.u32 %s1974, 4
          %s2006 = int_to_ptr.vmem [resolvable:$true] %s2005
          %2008 = dma.vmem_to_hbm [thread:$0]  %s2006, 128, %s2003, %s1971
        $region140: #{ocr_block_forward.3} parent=75 // pred_fallthru
          _
      $region76: #{ocr_block_forward.3} parent=5 // pred_fallthru
        _
      %p2009 = scmp.le.s32.totalorder 2, %s40
      // Predicated region
      $region141: #{ocr_block_forward.3} parent=5 // pred_check
        %p2010 = pneg %p2009
      $region142: #{ocr_block_forward.3} parent=5 // pred_check_branch
        %2012 = sbr.rel (%p2010) target = $region144
      $region143: #{ocr_block_forward.3} parent=5 // pred_region
        %s2013 = ssub.s32 %s40, 2
        // Predicated region
        $region145: #{ocr_block_forward.3} parent=143 // pred_check
          %p2014 = pneg %p394
        $region146: #{ocr_block_forward.3} parent=143 // pred_check_branch
          %2016 = sbr.rel (%p2014) target = $region148
        $region147: #{ocr_block_forward.3} parent=143 // pred_region
          %s2017 = sand.u32 %s379, 1
          %s2018 = scalar_lea.sflag [#allocation4], %s2017
          %s2019 = sand.u32 %s379, 1
          %s2020 = smul.addr %s2019, 64
          %s2021 = scalar_lea.vmem [#allocation25], %s2020
          %2022 = dma.done %s2018, 1024
        $region148: #{ocr_block_forward.3} parent=143 // pred_fallthru
          _
        // Predicated region
        $region149: #{ocr_block_forward.3} parent=143 // pred_check
          %p2023 = pneg %p422
        $region150: #{ocr_block_forward.3} parent=143 // pred_check_branch
          %2025 = sbr.rel (%p2023) target = $region152
        $region151: #{ocr_block_forward.3} parent=143 // pred_region
          %s2026 = sand.u32 %s407, 1
          %s2027 = scalar_lea.sflag [#allocation27], %s2026
          %s2028 = sand.u32 %s407, 1
          %s2029 = smul.addr %s2028, 8
          %s2030 = scalar_lea.vmem [#allocation26], %s2029
          %2031 = dma.done %s2027, 128
        $region152: #{ocr_block_forward.3} parent=143 // pred_fallthru
          _
      $region144: #{ocr_block_forward.3} parent=5 // pred_fallthru
        _
    $region6: #{ocr_block_forward.3} parent=1 // loop_footer
      %s44 = sadd.s32 1, %s40
    $region7: #{ocr_block_forward.3} parent=1 // loop_footer_branch
      %39 = sbr.rel target = $region3
    $region8: #{ocr_block_forward.3} parent=1 // loop_exit
      _
    %2032 = vsyncpa [#allocation3], 1
    %s2033 = scalar_lea.sflag [#allocation3], 1
    %2034 = vsyncpa %s2033, 1
    %2035 = vsyncpa [#allocation6], 1
    %s2036 = scalar_lea.sflag [#allocation6], 1
    %2037 = vsyncpa %s2036, 1
    %2038 = vsyncpa [#allocation9], 1
    %2039 = vsyncpa [#allocation12], 1
    %2040 = vsyncpa [#allocation15], 1
    %2041 = vsyncpa [#allocation18], 1
    %2042 = vsyncpa [#allocation21], 1
    %2043 = vsyncpa [#allocation24], 1
    %2044 = vsyncpa [#allocation4], 1
    %s2045 = scalar_lea.sflag [#allocation4], 1
    %2046 = vsyncpa %s2045, 1
    %2047 = vsyncpa [#allocation27], 1
    %s2048 = scalar_lea.sflag [#allocation27], 1
    %2049 = vsyncpa %s2048, 1

// kernel: ocr_block_forward.2
$region0: #{ocr_block_forward.2}
  #allocation0 [shape = 'u32[]', space=smem, size = 0x4, offset = 0x4, fixed_abs, tag = 'smem constant byte address 0x4 - core index']
  #allocation1 [shape = 'u32[144,128]{1,0:T(1,128)}', space=vmem, size = 0x12000, scoped, tag = 'internal scratch']
  #allocation2 [shape = 'bf16[256,576]{1,0:T(16,128)(2,1)}', space=vmem, size = 0x50000, scoped, tag = 'scratch operand']
  %s0 = inlined_call_operand.hbm [shape: bf16[2,18,18,64], index: 0, kind: input, shape index: {}]
  %s1 = inlined_call_operand.hbm [shape: bf16[128,576], index: 1, kind: input, shape index: {}]
  %s2 = inlined_call_operand.hbm [shape: f32[128,1], index: 2, kind: input, shape index: {}]
  %s3 = inlined_call_operand.hbm [shape: bf16[64,4], index: 3, kind: input, shape index: {}]
  %s4 = inlined_call_operand.hbm [shape: f32[4,1], index: 4, kind: input, shape index: {}]
  %s5 = inlined_call_operand.hbm [shape: bf16[64,32], index: 5, kind: input, shape index: {}]
  %s6 = inlined_call_operand.hbm [shape: f32[1,32], index: 6, kind: input, shape index: {}]
  %s7 = inlined_call_operand.hbm [shape: bf16[32,32], index: 7, kind: input, shape index: {}]
  %s8 = inlined_call_operand.hbm [shape: f32[1,32], index: 8, kind: input, shape index: {}]
  %s9 = inlined_call_operand.hbm [shape: bf16[64,32], index: 9, kind: input, shape index: {}]
  %s10 = inlined_call_operand.hbm [shape: f32[1,32], index: 10, kind: input, shape index: {}]
  %s11 = inlined_call_operand.hbm [shape: bf16[2,64,256], index: 11, kind: output, shape index: {0}]
  %s12 = inlined_call_operand.hbm [shape: f32[2,4,256], index: 12, kind: output, shape index: {1}]
  %s13 = inlined_call_operand.hbm [shape: bf16[2,4,32], index: 13, kind: output, shape index: {2}]
  %s14 = inlined_call_operand.hbm [shape: bf16[2,4,32], index: 14, kind: output, shape index: {3}]
  %15 = xla_tuple %s11, %s12, %s13, %s14
  %s16 = sld [smem:[#allocation0]]
  $region145: #{ocr_block_forward.2} parent=0
    _
  %s18 = ssub.s32 1, %s16
  %s19 = scalar_select 0, %s18, %s16
  $region1: #{ocr_block_forward.2} parent=0
    #allocation3 [shape = 'u8[221184]{0}', space=vmem, size = 0x36000, scoped, tag = 'input window, operand 0']
    #allocation4 [shape = 's32[2]{0}', space=sflag, size = 0x8, scoped, tag = 'scoped memory for ocr_block_forward.2']
    #allocation5 [shape = 's32[2]{0}', space=sflag, size = 0x8, scoped, tag = 'scoped memory for ocr_block_forward.2']
    #allocation6 [shape = 'u8[163840]{0}', space=vmem, size = 0x28000, scoped, tag = 'input window, operand 1, single buffered']
    #allocation7 [shape = 's32[1]{0}', space=sflag, size = 0x4, scoped, tag = 'scoped memory for ocr_block_forward.2']
    #allocation8 [shape = 'u8[65536]{0}', space=vmem, size = 0x10000, scoped, tag = 'input window, operand 2, single buffered']
    #allocation9 [shape = 'u8[16384]{0}', space=vmem, size = 0x4000, scoped, tag = 'input window, operand 3, single buffered']
    #allocation10 [shape = 's32[1]{0}', space=sflag, size = 0x4, scoped, tag = 'scoped memory for ocr_block_forward.2']
    #allocation11 [shape = 'u8[2048]{0}', space=vmem, size = 0x800, scoped, tag = 'input window, operand 4, single buffered']
    #allocation12 [shape = 'u8[16384]{0}', space=vmem, size = 0x4000, scoped, tag = 'input window, operand 5, single buffered']
    #allocation13 [shape = 's32[1]{0}', space=sflag, size = 0x4, scoped, tag = 'scoped memory for ocr_block_forward.2']
    #allocation14 [shape = 'u8[512]{0}', space=vmem, size = 0x400, scoped, tag = 'input window, operand 6, single buffered']
    #allocation15 [shape = 'u8[8192]{0}', space=vmem, size = 0x2000, scoped, tag = 'input window, operand 7, single buffered']
    #allocation16 [shape = 's32[1]{0}', space=sflag, size = 0x4, scoped, tag = 'scoped memory for ocr_block_forward.2']
    #allocation17 [shape = 'u8[512]{0}', space=vmem, size = 0x400, scoped, tag = 'input window, operand 8, single buffered']
    #allocation18 [shape = 'u8[16384]{0}', space=vmem, size = 0x4000, scoped, tag = 'input window, operand 9, single buffered']
    #allocation19 [shape = 's32[1]{0}', space=sflag, size = 0x4, scoped, tag = 'scoped memory for ocr_block_forward.2']
    #allocation20 [shape = 'u8[512]{0}', space=vmem, size = 0x400, scoped, tag = 'input window, operand 10, single buffered']
    #allocation21 [shape = 'u8[65536]{0}', space=vmem, size = 0x10000, scoped, tag = 'output window, operand 0']
    #allocation22 [shape = 'u8[8192]{0}', space=vmem, size = 0x2000, scoped, tag = 'output window, operand 1']
    #allocation23 [shape = 's32[2]{0}', space=sflag, size = 0x8, scoped, tag = 'scoped memory for ocr_block_forward.2']
    #allocation24 [shape = 'u8[2048]{0}', space=vmem, size = 0x800, scoped, tag = 'output window, operand 2']
    #allocation25 [shape = 'u8[2048]{0}', space=vmem, size = 0x800, scoped, tag = 'output window, operand 3']
    #allocation26 [shape = 's32[2]{0}', space=sflag, size = 0x8, scoped, tag = 'scoped memory for ocr_block_forward.2']
    %20 = vsyncpa [#allocation4], 0
    %s21 = scalar_lea.sflag [#allocation4], 1
    %22 = vsyncpa %s21, 0
    %23 = vsyncpa [#allocation7], 0
    %24 = vsyncpa [#allocation10], 0
    %25 = vsyncpa [#allocation13], 0
    %26 = vsyncpa [#allocation16], 0
    %27 = vsyncpa [#allocation19], 0
    %28 = vsyncpa [#allocation5], 0
    %s29 = scalar_lea.sflag [#allocation5], 1
    %30 = vsyncpa %s29, 0
    %31 = vsyncpa [#allocation23], 0
    %s32 = scalar_lea.sflag [#allocation23], 1
    %33 = vsyncpa %s32, 0
    %34 = vsyncpa [#allocation26], 0
    %s35 = scalar_lea.sflag [#allocation26], 1
    %36 = vsyncpa %s35, 0
    loop: start=0, step=1, limit=4
    $region2: #{ocr_block_forward.2} parent=1 // loop_pre_header
      _
    $region3: #{ocr_block_forward.2} parent=1 // loop_header
      %s38 = sphi 0, %s42
      %p39 = scmp.ge.s32.totalorder %s38, 4
      %s48 = sphi 0, %s50
      %s51 = sphi 0, %s48
      %s52 = sphi 0, %s51
      %s68 = sphi 0, %s52
      %s72 = sphi 0, %s72
      %s74 = sphi 0, %s72
      %s75 = sphi 0, %s74
      %s89 = sphi 0, %s75
      %s93 = sphi 0, %s93
      %s95 = sphi 0, %s93
      %s96 = sphi 0, %s95
      %s110 = sphi 0, %s96
      %s114 = sphi 0, %s114
      %s116 = sphi 0, %s114
      %s117 = sphi 0, %s116
      %s131 = sphi 0, %s117
      %s135 = sphi 0, %s135
      %s137 = sphi 0, %s135
      %s138 = sphi 0, %s137
      %s152 = sphi 0, %s138
      %s156 = sphi 0, %s156
      %s158 = sphi 0, %s156
      %s159 = sphi 0, %s158
      %s173 = sphi 0, %s159
      %s177 = sphi 0, %s177
      %s179 = sphi 0, %s177
      %s180 = sphi 0, %s179
      %s194 = sphi 0, %s180
      %s198 = sphi 0, %s198
      %s200 = sphi 0, %s198
      %s201 = sphi 0, %s200
      %s215 = sphi 0, %s201
      %s219 = sphi 0, %s219
      %s221 = sphi 0, %s219
      %s222 = sphi 0, %s221
      %s236 = sphi 0, %s222
      %s240 = sphi 0, %s240
      %s242 = sphi 0, %s240
      %s243 = sphi 0, %s242
      %s257 = sphi 0, %s243
      %s261 = sphi 0, %s261
      %s263 = sphi 0, %s261
      %s264 = sphi 0, %s263
      %s278 = sphi 0, %s264
      %s284 = sphi 0, %s286
      %s287 = sphi 0, %s284
      %s288 = sphi 0, %s287
      %s304 = sphi 0, %s288
      %s310 = sphi 0, %s312
      %s313 = sphi 0, %s310
      %s314 = sphi 0, %s313
      %s330 = sphi 0, %s314
      %s336 = sphi 0, %s338
      %s339 = sphi 0, %s336
      %s340 = sphi 0, %s339
      %s356 = sphi 0, %s340
      %s362 = sphi 0, %s364
      %s365 = sphi 0, %s362
      %s366 = sphi 0, %s365
      %s382 = sphi 0, %s366
    $region4: #{ocr_block_forward.2} parent=1 // loop_header_branch
      %41 = sbr.rel (%p39) target = $region8
    $region5: #{ocr_block_forward.2} parent=1 // loop_body
      %s43 = ssub.s32 %s38, 1
      %s44 = ssub.s32 %s38, 2
      %s45 = sadd.s32 %s38, 1
      %s46 = ssub.s32 %s38, %s45
      %p47 = scmp.eq.s32.totalorder %s46, 0
      %s49 = sadd.s32 %s48, 1
      %s50 = scalar_select %p47, %s48, %s49
      %p53 = pneg %p47
      %p54 = scmp.eq.s32.totalorder %s38, 1
      %p55 = por %p53, %p54
      %p56 = scmp.ne.s32.totalorder %s48, %s51
      %p57 = scmp.eq.s32.totalorder %s38, 0
      %p58 = por %p56, %p57
      %p59 = scmp.ne.s32.totalorder %s48, %s51
      %p60 = scmp.eq.s32.totalorder %s43, 1
      %p61 = por %p59, %p60
      %p62 = scmp.ne.s32.totalorder %s51, %s52
      %p63 = scmp.eq.s32.totalorder %s43, 0
      %p64 = por %p62, %p63
      %p65 = scmp.ne.s32.totalorder %s51, %s52
      %p66 = scmp.eq.s32.totalorder %s44, 1
      %p67 = por %p65, %p66
      %p69 = scmp.ne.s32.totalorder %s52, %s68
      %p70 = scmp.eq.s32.totalorder %s44, 0
      %p71 = por %p69, %p70
      %s73 = sadd.s32 %s72, 1
      %p76 = scmp.eq.s32.totalorder %s38, 1
      %p77 = scmp.ne.s32.totalorder %s72, %s74
      %p78 = scmp.eq.s32.totalorder %s38, 0
      %p79 = por %p77, %p78
      %p80 = scmp.ne.s32.totalorder %s72, %s74
      %p81 = scmp.eq.s32.totalorder %s43, 1
      %p82 = por %p80, %p81
      %p83 = scmp.ne.s32.totalorder %s74, %s75
      %p84 = scmp.eq.s32.totalorder %s43, 0
      %p85 = por %p83, %p84
      %p86 = scmp.ne.s32.totalorder %s74, %s75
      %p87 = scmp.eq.s32.totalorder %s44, 1
      %p88 = por %p86, %p87
      %p90 = scmp.ne.s32.totalorder %s75, %s89
      %p91 = scmp.eq.s32.totalorder %s44, 0
      %p92 = por %p90, %p91
      %s94 = sadd.s32 %s93, 1
      %p97 = scmp.eq.s32.totalorder %s38, 1
      %p98 = scmp.ne.s32.totalorder %s93, %s95
      %p99 = scmp.eq.s32.totalorder %s38, 0
      %p100 = por %p98, %p99
      %p101 = scmp.ne.s32.totalorder %s93, %s95
      %p102 = scmp.eq.s32.totalorder %s43, 1
      %p103 = por %p101, %p102
      %p104 = scmp.ne.s32.totalorder %s95, %s96
      %p105 = scmp.eq.s32.totalorder %s43, 0
      %p106 = por %p104, %p105
      %p107 = scmp.ne.s32.totalorder %s95, %s96
      %p108 = scmp.eq.s32.totalorder %s44, 1
      %p109 = por %p107, %p108
      %p111 = scmp.ne.s32.totalorder %s96, %s110
      %p112 = scmp.eq.s32.totalorder %s44, 0
      %p113 = por %p111, %p112
      %s115 = sadd.s32 %s114, 1
      %p118 = scmp.eq.s32.totalorder %s38, 1
      %p119 = scmp.ne.s32.totalorder %s114, %s116
      %p120 = scmp.eq.s32.totalorder %s38, 0
      %p121 = por %p119, %p120
      %p122 = scmp.ne.s32.totalorder %s114, %s116
      %p123 = scmp.eq.s32.totalorder %s43, 1
      %p124 = por %p122, %p123
      %p125 = scmp.ne.s32.totalorder %s116, %s117
      %p126 = scmp.eq.s32.totalorder %s43, 0
      %p127 = por %p125, %p126
      %p128 = scmp.ne.s32.totalorder %s116, %s117
      %p129 = scmp.eq.s32.totalorder %s44, 1
      %p130 = por %p128, %p129
      %p132 = scmp.ne.s32.totalorder %s117, %s131
      %p133 = scmp.eq.s32.totalorder %s44, 0
      %p134 = por %p132, %p133
      %s136 = sadd.s32 %s135, 1
      %p139 = scmp.eq.s32.totalorder %s38, 1
      %p140 = scmp.ne.s32.totalorder %s135, %s137
      %p141 = scmp.eq.s32.totalorder %s38, 0
      %p142 = por %p140, %p141
      %p143 = scmp.ne.s32.totalorder %s135, %s137
      %p144 = scmp.eq.s32.totalorder %s43, 1
      %p145 = por %p143, %p144
      %p146 = scmp.ne.s32.totalorder %s137, %s138
      %p147 = scmp.eq.s32.totalorder %s43, 0
      %p148 = por %p146, %p147
      %p149 = scmp.ne.s32.totalorder %s137, %s138
      %p150 = scmp.eq.s32.totalorder %s44, 1
      %p151 = por %p149, %p150
      %p153 = scmp.ne.s32.totalorder %s138, %s152
      %p154 = scmp.eq.s32.totalorder %s44, 0
      %p155 = por %p153, %p154
      %s157 = sadd.s32 %s156, 1
      %p160 = scmp.eq.s32.totalorder %s38, 1
      %p161 = scmp.ne.s32.totalorder %s156, %s158
      %p162 = scmp.eq.s32.totalorder %s38, 0
      %p163 = por %p161, %p162
      %p164 = scmp.ne.s32.totalorder %s156, %s158
      %p165 = scmp.eq.s32.totalorder %s43, 1
      %p166 = por %p164, %p165
      %p167 = scmp.ne.s32.totalorder %s158, %s159
      %p168 = scmp.eq.s32.totalorder %s43, 0
      %p169 = por %p167, %p168
      %p170 = scmp.ne.s32.totalorder %s158, %s159
      %p171 = scmp.eq.s32.totalorder %s44, 1
      %p172 = por %p170, %p171
      %p174 = scmp.ne.s32.totalorder %s159, %s173
      %p175 = scmp.eq.s32.totalorder %s44, 0
      %p176 = por %p174, %p175
      %s178 = sadd.s32 %s177, 1
      %p181 = scmp.eq.s32.totalorder %s38, 1
      %p182 = scmp.ne.s32.totalorder %s177, %s179
      %p183 = scmp.eq.s32.totalorder %s38, 0
      %p184 = por %p182, %p183
      %p185 = scmp.ne.s32.totalorder %s177, %s179
      %p186 = scmp.eq.s32.totalorder %s43, 1
      %p187 = por %p185, %p186
      %p188 = scmp.ne.s32.totalorder %s179, %s180
      %p189 = scmp.eq.s32.totalorder %s43, 0
      %p190 = por %p188, %p189
      %p191 = scmp.ne.s32.totalorder %s179, %s180
      %p192 = scmp.eq.s32.totalorder %s44, 1
      %p193 = por %p191, %p192
      %p195 = scmp.ne.s32.totalorder %s180, %s194
      %p196 = scmp.eq.s32.totalorder %s44, 0
      %p197 = por %p195, %p196
      %s199 = sadd.s32 %s198, 1
      %p202 = scmp.eq.s32.totalorder %s38, 1
      %p203 = scmp.ne.s32.totalorder %s198, %s200
      %p204 = scmp.eq.s32.totalorder %s38, 0
      %p205 = por %p203, %p204
      %p206 = scmp.ne.s32.totalorder %s198, %s200
      %p207 = scmp.eq.s32.totalorder %s43, 1
      %p208 = por %p206, %p207
      %p209 = scmp.ne.s32.totalorder %s200, %s201
      %p210 = scmp.eq.s32.totalorder %s43, 0
      %p211 = por %p209, %p210
      %p212 = scmp.ne.s32.totalorder %s200, %s201
      %p213 = scmp.eq.s32.totalorder %s44, 1
      %p214 = por %p212, %p213
      %p216 = scmp.ne.s32.totalorder %s201, %s215
      %p217 = scmp.eq.s32.totalorder %s44, 0
      %p218 = por %p216, %p217
      %s220 = sadd.s32 %s219, 1
      %p223 = scmp.eq.s32.totalorder %s38, 1
      %p224 = scmp.ne.s32.totalorder %s219, %s221
      %p225 = scmp.eq.s32.totalorder %s38, 0
      %p226 = por %p224, %p225
      %p227 = scmp.ne.s32.totalorder %s219, %s221
      %p228 = scmp.eq.s32.totalorder %s43, 1
      %p229 = por %p227, %p228
      %p230 = scmp.ne.s32.totalorder %s221, %s222
      %p231 = scmp.eq.s32.totalorder %s43, 0
      %p232 = por %p230, %p231
      %p233 = scmp.ne.s32.totalorder %s221, %s222
      %p234 = scmp.eq.s32.totalorder %s44, 1
      %p235 = por %p233, %p234
      %p237 = scmp.ne.s32.totalorder %s222, %s236
      %p238 = scmp.eq.s32.totalorder %s44, 0
      %p239 = por %p237, %p238
      %s241 = sadd.s32 %s240, 1
      %p244 = scmp.eq.s32.totalorder %s38, 1
      %p245 = scmp.ne.s32.totalorder %s240, %s242
      %p246 = scmp.eq.s32.totalorder %s38, 0
      %p247 = por %p245, %p246
      %p248 = scmp.ne.s32.totalorder %s240, %s242
      %p249 = scmp.eq.s32.totalorder %s43, 1
      %p250 = por %p248, %p249
      %p251 = scmp.ne.s32.totalorder %s242, %s243
      %p252 = scmp.eq.s32.totalorder %s43, 0
      %p253 = por %p251, %p252
      %p254 = scmp.ne.s32.totalorder %s242, %s243
      %p255 = scmp.eq.s32.totalorder %s44, 1
      %p256 = por %p254, %p255
      %p258 = scmp.ne.s32.totalorder %s243, %s257
      %p259 = scmp.eq.s32.totalorder %s44, 0
      %p260 = por %p258, %p259
      %s262 = sadd.s32 %s261, 1
      %p265 = scmp.eq.s32.totalorder %s38, 1
      %p266 = scmp.ne.s32.totalorder %s261, %s263
      %p267 = scmp.eq.s32.totalorder %s38, 0
      %p268 = por %p266, %p267
      %p269 = scmp.ne.s32.totalorder %s261, %s263
      %p270 = scmp.eq.s32.totalorder %s43, 1
      %p271 = por %p269, %p270
      %p272 = scmp.ne.s32.totalorder %s263, %s264
      %p273 = scmp.eq.s32.totalorder %s43, 0
      %p274 = por %p272, %p273
      %p275 = scmp.ne.s32.totalorder %s263, %s264
      %p276 = scmp.eq.s32.totalorder %s44, 1
      %p277 = por %p275, %p276
      %p279 = scmp.ne.s32.totalorder %s264, %s278
      %p280 = scmp.eq.s32.totalorder %s44, 0
      %p281 = por %p279, %p280
      %s282 = ssub.s32 %s38, %s45
      %p283 = scmp.eq.s32.totalorder %s282, 0
      %s285 = sadd.s32 %s284, 1
      %s286 = scalar_select %p283, %s284, %s285
      %p289 = pneg %p283
      %p290 = scmp.eq.s32.totalorder %s38, 1
      %p291 = por %p289, %p290
      %p292 = scmp.ne.s32.totalorder %s284, %s287
      %p293 = scmp.eq.s32.totalorder %s38, 0
      %p294 = por %p292, %p293
      %p295 = scmp.ne.s32.totalorder %s284, %s287
      %p296 = scmp.eq.s32.totalorder %s43, 1
      %p297 = por %p295, %p296
      %p298 = scmp.ne.s32.totalorder %s287, %s288
      %p299 = scmp.eq.s32.totalorder %s43, 0
      %p300 = por %p298, %p299
      %p301 = scmp.ne.s32.totalorder %s287, %s288
      %p302 = scmp.eq.s32.totalorder %s44, 1
      %p303 = por %p301, %p302
      %p305 = scmp.ne.s32.totalorder %s288, %s304
      %p306 = scmp.eq.s32.totalorder %s44, 0
      %p307 = por %p305, %p306
      %s308 = ssub.s32 %s38, %s45
      %p309 = scmp.eq.s32.totalorder %s308, 0
      %s311 = sadd.s32 %s310, 1
      %s312 = scalar_select %p309, %s310, %s311
      %p315 = pneg %p309
      %p316 = scmp.eq.s32.totalorder %s38, 1
      %p317 = por %p315, %p316
      %p318 = scmp.ne.s32.totalorder %s310, %s313
      %p319 = scmp.eq.s32.totalorder %s38, 0
      %p320 = por %p318, %p319
      %p321 = scmp.ne.s32.totalorder %s310, %s313
      %p322 = scmp.eq.s32.totalorder %s43, 1
      %p323 = por %p321, %p322
      %p324 = scmp.ne.s32.totalorder %s313, %s314
      %p325 = scmp.eq.s32.totalorder %s43, 0
      %p326 = por %p324, %p325
      %p327 = scmp.ne.s32.totalorder %s313, %s314
      %p328 = scmp.eq.s32.totalorder %s44, 1
      %p329 = por %p327, %p328
      %p331 = scmp.ne.s32.totalorder %s314, %s330
      %p332 = scmp.eq.s32.totalorder %s44, 0
      %p333 = por %p331, %p332
      %s334 = ssub.s32 %s38, %s45
      %p335 = scmp.eq.s32.totalorder %s334, 0
      %s337 = sadd.s32 %s336, 1
      %s338 = scalar_select %p335, %s336, %s337
      %p341 = pneg %p335
      %p342 = scmp.eq.s32.totalorder %s38, 1
      %p343 = por %p341, %p342
      %p344 = scmp.ne.s32.totalorder %s336, %s339
      %p345 = scmp.eq.s32.totalorder %s38, 0
      %p346 = por %p344, %p345
      %p347 = scmp.ne.s32.totalorder %s336, %s339
      %p348 = scmp.eq.s32.totalorder %s43, 1
      %p349 = por %p347, %p348
      %p350 = scmp.ne.s32.totalorder %s339, %s340
      %p351 = scmp.eq.s32.totalorder %s43, 0
      %p352 = por %p350, %p351
      %p353 = scmp.ne.s32.totalorder %s339, %s340
      %p354 = scmp.eq.s32.totalorder %s44, 1
      %p355 = por %p353, %p354
      %p357 = scmp.ne.s32.totalorder %s340, %s356
      %p358 = scmp.eq.s32.totalorder %s44, 0
      %p359 = por %p357, %p358
      %s360 = ssub.s32 %s38, %s45
      %p361 = scmp.eq.s32.totalorder %s360, 0
      %s363 = sadd.s32 %s362, 1
      %s364 = scalar_select %p361, %s362, %s363
      %p367 = pneg %p361
      %p368 = scmp.eq.s32.totalorder %s38, 1
      %p369 = por %p367, %p368
      %p370 = scmp.ne.s32.totalorder %s362, %s365
      %p371 = scmp.eq.s32.totalorder %s38, 0
      %p372 = por %p370, %p371
      %p373 = scmp.ne.s32.totalorder %s362, %s365
      %p374 = scmp.eq.s32.totalorder %s43, 1
      %p375 = por %p373, %p374
      %p376 = scmp.ne.s32.totalorder %s365, %s366
      %p377 = scmp.eq.s32.totalorder %s43, 0
      %p378 = por %p376, %p377
      %p379 = scmp.ne.s32.totalorder %s365, %s366
      %p380 = scmp.eq.s32.totalorder %s44, 1
      %p381 = por %p379, %p380
      %p383 = scmp.ne.s32.totalorder %s366, %s382
      %p384 = scmp.eq.s32.totalorder %s44, 0
      %p385 = por %p383, %p384
      %p386 = scmp.le.s32.totalorder 1, %s38
      %p387 = scmp.lt.s32.totalorder %s38, 3
      %p388 = pnand %p386, %p387
      %p389 = pneg %p388
      // Predicated region
      $region9: #{ocr_block_forward.2} parent=5 // pred_check
        _
      $region10: #{ocr_block_forward.2} parent=5 // pred_check_branch
        %391 = sbr.rel (%p388) target = $region12
      $region11: #{ocr_block_forward.2} parent=5 // pred_region
        %s392 = ssub.s32 %s38, 1
        // Predicated region
        $region13: #{ocr_block_forward.2} parent=11 // pred_check
          %p393 = pneg %p85
        $region14: #{ocr_block_forward.2} parent=11 // pred_check_branch
          %395 = sbr.rel (%p393) target = $region16
        $region15: #{ocr_block_forward.2} parent=11 // pred_region
          %s397 = ssub.s32 5120, 5120
          %398 = vsyncadd [#allocation7], %s397
          %s399 = sshll.u32 [#allocation6], 4
          %s400 = int_to_ptr.vmem [resolvable:$true] %s399
          %405 = dma.hbm_to_vmem [thread:$0]  %s1, 5120, %s400, [#allocation7], 320, 320, 20
        $region16: #{ocr_block_forward.2} parent=11 // pred_fallthru
          _
        // Predicated region
        $region17: #{ocr_block_forward.2} parent=11 // pred_check
          %p406 = pneg %p106
        $region18: #{ocr_block_forward.2} parent=11 // pred_check_branch
          %408 = sbr.rel (%p406) target = $region20
        $region19: #{ocr_block_forward.2} parent=11 // pred_region
          %s410 = ssub.s32 2048, 2048
          %411 = vsyncadd [#allocation7], %s410
          %s412 = sshll.u32 [#allocation8], 4
          %s413 = int_to_ptr.vmem [resolvable:$true] %s412
          %418 = dma.hbm_to_vmem [thread:$0]  %s2, 2048, %s413, [#allocation7], 128, 128, 8
        $region20: #{ocr_block_forward.2} parent=11 // pred_fallthru
          _
        // Predicated region
        $region21: #{ocr_block_forward.2} parent=11 // pred_check
          %p419 = pneg %p127
        $region22: #{ocr_block_forward.2} parent=11 // pred_check_branch
          %421 = sbr.rel (%p419) target = $region24
        $region23: #{ocr_block_forward.2} parent=11 // pred_region
          %s423 = ssub.s32 512, 512
          %424 = vsyncadd [#allocation10], %s423
          %s425 = sshll.u32 [#allocation9], 4
          %s426 = int_to_ptr.vmem [resolvable:$true] %s425
          %431 = dma.hbm_to_vmem [thread:$0]  %s3, 512, %s426, [#allocation10], 64, 64, 4
        $region24: #{ocr_block_forward.2} parent=11 // pred_fallthru
          _
        // Predicated region
        $region25: #{ocr_block_forward.2} parent=11 // pred_check
          %p432 = pneg %p148
        $region26: #{ocr_block_forward.2} parent=11 // pred_check_branch
          %434 = sbr.rel (%p432) target = $region28
        $region27: #{ocr_block_forward.2} parent=11 // pred_region
          %s436 = ssub.s32 64, 64
          %437 = vsyncadd [#allocation10], %s436
          %s439 = sshll.u32 [#allocation11], 4
          %s440 = int_to_ptr.vmem [resolvable:$true] %s439
          %442 = dma.hbm_to_vmem [thread:$0]  %s4, 64, %s440, [#allocation10]
        $region28: #{ocr_block_forward.2} parent=11 // pred_fallthru
          _
        // Predicated region
        $region29: #{ocr_block_forward.2} parent=11 // pred_check
          %p443 = pneg %p169
        $region30: #{ocr_block_forward.2} parent=11 // pred_check_branch
          %445 = sbr.rel (%p443) target = $region32
        $region31: #{ocr_block_forward.2} parent=11 // pred_region
          %s447 = ssub.s32 512, 512
          %448 = vsyncadd [#allocation13], %s447
          %s449 = sshll.u32 [#allocation12], 4
          %s450 = int_to_ptr.vmem [resolvable:$true] %s449
          %455 = dma.hbm_to_vmem [thread:$0]  %s5, 512, %s450, [#allocation13], 64, 64, 4
        $region32: #{ocr_block_forward.2} parent=11 // pred_fallthru
          _
        // Predicated region
        $region33: #{ocr_block_forward.2} parent=11 // pred_check
          %p456 = pneg %p190
        $region34: #{ocr_block_forward.2} parent=11 // pred_check_branch
          %458 = sbr.rel (%p456) target = $region36
        $region35: #{ocr_block_forward.2} parent=11 // pred_region
          %s460 = ssub.s32 16, 16
          %461 = vsyncadd [#allocation13], %s460
          %s463 = sshll.u32 [#allocation14], 4
          %s464 = int_to_ptr.vmem [resolvable:$true] %s463
          %466 = dma.hbm_to_vmem [thread:$0]  %s6, 16, %s464, [#allocation13]
        $region36: #{ocr_block_forward.2} parent=11 // pred_fallthru
          _
        // Predicated region
        $region37: #{ocr_block_forward.2} parent=11 // pred_check
          %p467 = pneg %p211
        $region38: #{ocr_block_forward.2} parent=11 // pred_check_branch
          %469 = sbr.rel (%p467) target = $region40
        $region39: #{ocr_block_forward.2} parent=11 // pred_region
          %s471 = ssub.s32 256, 256
          %472 = vsyncadd [#allocation16], %s471
          %s473 = sshll.u32 [#allocation15], 4
          %s474 = int_to_ptr.vmem [resolvable:$true] %s473
          %479 = dma.hbm_to_vmem [thread:$0]  %s7, 256, %s474, [#allocation16], 64, 64, 4
        $region40: #{ocr_block_forward.2} parent=11 // pred_fallthru
          _
        // Predicated region
        $region41: #{ocr_block_forward.2} parent=11 // pred_check
          %p480 = pneg %p232
        $region42: #{ocr_block_forward.2} parent=11 // pred_check_branch
          %482 = sbr.rel (%p480) target = $region44
        $region43: #{ocr_block_forward.2} parent=11 // pred_region
          %s484 = ssub.s32 16, 16
          %485 = vsyncadd [#allocation16], %s484
          %s487 = sshll.u32 [#allocation17], 4
          %s488 = int_to_ptr.vmem [resolvable:$true] %s487
          %490 = dma.hbm_to_vmem [thread:$0]  %s8, 16, %s488, [#allocation16]
        $region44: #{ocr_block_forward.2} parent=11 // pred_fallthru
          _
        // Predicated region
        $region45: #{ocr_block_forward.2} parent=11 // pred_check
          %p491 = pneg %p253
        $region46: #{ocr_block_forward.2} parent=11 // pred_check_branch
          %493 = sbr.rel (%p491) target = $region48
        $region47: #{ocr_block_forward.2} parent=11 // pred_region
          %s495 = ssub.s32 512, 512
          %496 = vsyncadd [#allocation19], %s495
          %s497 = sshll.u32 [#allocation18], 4
          %s498 = int_to_ptr.vmem [resolvable:$true] %s497
          %503 = dma.hbm_to_vmem [thread:$0]  %s9, 512, %s498, [#allocation19], 64, 64, 4
        $region48: #{ocr_block_forward.2} parent=11 // pred_fallthru
          _
        // Predicated region
        $region49: #{ocr_block_forward.2} parent=11 // pred_check
          %p504 = pneg %p274
        $region50: #{ocr_block_forward.2} parent=11 // pred_check_branch
          %506 = sbr.rel (%p504) target = $region52
        $region51: #{ocr_block_forward.2} parent=11 // pred_region
          %s508 = ssub.s32 16, 16
          %509 = vsyncadd [#allocation19], %s508
          %s511 = sshll.u32 [#allocation20], 4
          %s512 = int_to_ptr.vmem [resolvable:$true] %s511
          %514 = dma.hbm_to_vmem [thread:$0]  %s10, 16, %s512, [#allocation19]
        $region52: #{ocr_block_forward.2} parent=11 // pred_fallthru
          _
      $region12: #{ocr_block_forward.2} parent=5 // pred_fallthru
        _
      %p515 = scmp.lt.s32.totalorder %s38, 2
      // Predicated region
      $region53: #{ocr_block_forward.2} parent=5 // pred_check
        %p516 = pneg %p515
      $region54: #{ocr_block_forward.2} parent=5 // pred_check_branch
        %518 = sbr.rel (%p516) target = $region56
      $region55: #{ocr_block_forward.2} parent=5 // pred_region
        // Predicated region
        $region57: #{ocr_block_forward.2} parent=55 // pred_check
          %p519 = pneg %p58
        $region58: #{ocr_block_forward.2} parent=55 // pred_check_branch
          %521 = sbr.rel (%p519) target = $region60
        $region59: #{ocr_block_forward.2} parent=55 // pred_region
          %s522 = sand.u32 %s48, 1
          %s523 = scalar_lea.sflag [#allocation4], %s522
          %s524 = sand.u32 %s48, 1
          %s525 = smul.addr %s524, 216
          %s526 = scalar_lea.vmem [#allocation3], %s525
          %s528 = ssub.s32 3456, 3456
          %529 = vsyncadd %s523, %s528
          %s530 = smul.addr %s38, 54
          %s531 = smul.addr %s530, 64
          %s532 = scalar_lea.hbm %s0, %s531
          %s533 = sshll.u32 %s526, 4
          %s534 = int_to_ptr.vmem [resolvable:$true] %s533
          %539 = dma.hbm_to_vmem [thread:$0]  %s532, 3456, %s534, %s523, 64, 64, 4
        $region60: #{ocr_block_forward.2} parent=55 // pred_fallthru
          _
      $region56: #{ocr_block_forward.2} parent=5 // pred_fallthru
        _
      %p540 = scmp.le.s32.totalorder 1, %s38
      %p541 = scmp.lt.s32.totalorder %s38, 3
      %p542 = pnand %p540, %p541
      %p543 = pneg %p542
      // Predicated region
      $region61: #{ocr_block_forward.2} parent=5 // pred_check
        _
      $region62: #{ocr_block_forward.2} parent=5 // pred_check_branch
        %545 = sbr.rel (%p542) target = $region64
      $region63: #{ocr_block_forward.2} parent=5 // pred_region
        %s546 = ssub.s32 %s38, 1
        %s547 = sand.u32 %s51, 1
        %s548 = scalar_lea.sflag [#allocation4], %s547
        %s549 = sand.u32 %s51, 1
        %s550 = smul.addr %s549, 216
        %s551 = scalar_lea.vmem [#allocation3], %s550
        // Predicated region
        $region65: #{ocr_block_forward.2} parent=63 // pred_check
          %p552 = pneg %p64
        $region66: #{ocr_block_forward.2} parent=63 // pred_check_branch
          %554 = sbr.rel (%p552) target = $region68
        $region67: #{ocr_block_forward.2} parent=63 // pred_region
          %555 = dma.done %s548, 3456
        $region68: #{ocr_block_forward.2} parent=63 // pred_fallthru
          _
        // Predicated region
        $region69: #{ocr_block_forward.2} parent=63 // pred_check
          %p556 = pneg %p85
        $region70: #{ocr_block_forward.2} parent=63 // pred_check_branch
          %558 = sbr.rel (%p556) target = $region72
        $region71: #{ocr_block_forward.2} parent=63 // pred_region
          %559 = dma.done [#allocation7], 5120
        $region72: #{ocr_block_forward.2} parent=63 // pred_fallthru
          _
        // Predicated region
        $region73: #{ocr_block_forward.2} parent=63 // pred_check
          %p560 = pneg %p106
        $region74: #{ocr_block_forward.2} parent=63 // pred_check_branch
          %562 = sbr.rel (%p560) target = $region76
        $region75: #{ocr_block_forward.2} parent=63 // pred_region
          %563 = dma.done [#allocation7], 2048
        $region76: #{ocr_block_forward.2} parent=63 // pred_fallthru
          _
        // Predicated region
        $region77: #{ocr_block_forward.2} parent=63 // pred_check
          %p564 = pneg %p127
        $region78: #{ocr_block_forward.2} parent=63 // pred_check_branch
          %566 = sbr.rel (%p564) target = $region80
        $region79: #{ocr_block_forward.2} parent=63 // pred_region
          %567 = dma.done [#allocation10], 512
        $region80: #{ocr_block_forward.2} parent=63 // pred_fallthru
          _
        // Predicated region
        $region81: #{ocr_block_forward.2} parent=63 // pred_check
          %p568 = pneg %p148
        $region82: #{ocr_block_forward.2} parent=63 // pred_check_branch
          %570 = sbr.rel (%p568) target = $region84
        $region83: #{ocr_block_forward.2} parent=63 // pred_region
          %571 = dma.done [#allocation10], 64
        $region84: #{ocr_block_forward.2} parent=63 // pred_fallthru
          _
        // Predicated region
        $region85: #{ocr_block_forward.2} parent=63 // pred_check
          %p572 = pneg %p169
        $region86: #{ocr_block_forward.2} parent=63 // pred_check_branch
          %574 = sbr.rel (%p572) target = $region88
        $region87: #{ocr_block_forward.2} parent=63 // pred_region
          %575 = dma.done [#allocation13], 512
        $region88: #{ocr_block_forward.2} parent=63 // pred_fallthru
          _
        // Predicated region
        $region89: #{ocr_block_forward.2} parent=63 // pred_check
          %p576 = pneg %p190
        $region90: #{ocr_block_forward.2} parent=63 // pred_check_branch
          %578 = sbr.rel (%p576) target = $region92
        $region91: #{ocr_block_forward.2} parent=63 // pred_region
          %579 = dma.done [#allocation13], 16
        $region92: #{ocr_block_forward.2} parent=63 // pred_fallthru
          _
        // Predicated region
        $region93: #{ocr_block_forward.2} parent=63 // pred_check
          %p580 = pneg %p211
        $region94: #{ocr_block_forward.2} parent=63 // pred_check_branch
          %582 = sbr.rel (%p580) target = $region96
        $region95: #{ocr_block_forward.2} parent=63 // pred_region
          %583 = dma.done [#allocation16], 256
        $region96: #{ocr_block_forward.2} parent=63 // pred_fallthru
          _
        // Predicated region
        $region97: #{ocr_block_forward.2} parent=63 // pred_check
          %p584 = pneg %p232
        $region98: #{ocr_block_forward.2} parent=63 // pred_check_branch
          %586 = sbr.rel (%p584) target = $region100
        $region99: #{ocr_block_forward.2} parent=63 // pred_region
          %587 = dma.done [#allocation16], 16
        $region100: #{ocr_block_forward.2} parent=63 // pred_fallthru
          _
        // Predicated region
        $region101: #{ocr_block_forward.2} parent=63 // pred_check
          %p588 = pneg %p253
        $region102: #{ocr_block_forward.2} parent=63 // pred_check_branch
          %590 = sbr.rel (%p588) target = $region104
        $region103: #{ocr_block_forward.2} parent=63 // pred_region
          %591 = dma.done [#allocation19], 512
        $region104: #{ocr_block_forward.2} parent=63 // pred_fallthru
          _
        // Predicated region
        $region105: #{ocr_block_forward.2} parent=63 // pred_check
          %p592 = pneg %p274
        $region106: #{ocr_block_forward.2} parent=63 // pred_check_branch
          %594 = sbr.rel (%p592) target = $region108
        $region107: #{ocr_block_forward.2} parent=63 // pred_region
          %595 = dma.done [#allocation19], 16
        $region108: #{ocr_block_forward.2} parent=63 // pred_fallthru
          _
        %s596 = sand.u32 %s51, 1
        %s597 = scalar_lea.sflag [#allocation4], %s596
        %s598 = sand.u32 %s51, 1
        %s599 = smul.addr %s598, 216
        %s600 = scalar_lea.vmem [#allocation3], %s599
        %p601 = pneg %p64
        %p602 = pneg %p61
        %p603 = pneg %p85
        %p604 = pneg %p82
        %p605 = pneg %p106
        %p606 = pneg %p103
        %p607 = pneg %p127
        %p608 = pneg %p124
        %p609 = pneg %p148
        %p610 = pneg %p145
        %p611 = pneg %p169
        %p612 = pneg %p166
        %p613 = pneg %p190
        %p614 = pneg %p187
        %p615 = pneg %p211
        %p616 = pneg %p208
        %p617 = pneg %p232
        %p618 = pneg %p229
        %p619 = pneg %p253
        %p620 = pneg %p250
        %p621 = pneg %p274
        %p622 = pneg %p271
        %p623 = pneg %p300
        %p624 = pneg %p297
        %s625 = sand.u32 %s287, 1
        %s626 = scalar_lea.sflag [#allocation5], %s625
        %s627 = sand.u32 %s287, 1
        %s628 = smul.addr %s627, 64
        %s629 = scalar_lea.vmem [#allocation21], %s628
        %p630 = pneg %p326
        %p631 = pneg %p323
        %s632 = sand.u32 %s43, 1
        %s633 = scalar_lea.sflag [#allocation23], %s632
        %s634 = sand.u32 %s313, 1
        %s635 = smul.addr %s634, 8
        %s636 = scalar_lea.vmem [#allocation22], %s635
        %p637 = pneg %p352
        %p638 = pneg %p349
        %s639 = sand.u32 %s43, 1
        %s640 = scalar_lea.sflag [#allocation23], %s639
        %s641 = sand.u32 %s339, 1
        %s642 = smul.addr %s641, 2
        %s643 = scalar_lea.vmem [#allocation24], %s642
        %p644 = pneg %p378
        %p645 = pneg %p375
        %s646 = sand.u32 %s365, 1
        %s647 = scalar_lea.sflag [#allocation26], %s646
        %s648 = sand.u32 %s365, 1
        %s649 = smul.addr %s648, 2
        %s650 = scalar_lea.vmem [#allocation25], %s649
        %v652 = vld [vmem:[%s551] sm:$0xf]
        %v653 = vld [vmem:[%s551 + $0x4] sm:$0xf]
        %v654 = vld [vmem:[%s551 + $0x8] sm:$0x1]
        %v655 = vld [vmem:[%s551 + $0xc] sm:$0xf]
        %v656 = vld [vmem:[%s551 + $0x10] sm:$0xf]
        %v657 = vld [vmem:[%s551 + $0x14] sm:$0x1]
        %v658 = vld [vmem:[%s551 + $0x18] sm:$0xf]
        %v659 = vld [vmem:[%s551 + $0x1c] sm:$0xf]
        %v660 = vld [vmem:[%s551 + $0x20] sm:$0x1]
        %v661 = vld [vmem:[%s551 + $0x24] sm:$0xf]
        %v662 = vld [vmem:[%s551 + $0x28] sm:$0xf]
        %v663 = vld [vmem:[%s551 + $0x2c] sm:$0x1]
        %v664 = vld [vmem:[%s551 + $0x30] sm:$0xf]
        %v665 = vld [vmem:[%s551 + $0x34] sm:$0xf]
        %v666 = vld [vmem:[%s551 + $0x38] sm:$0x1]
        %v667 = vld [vmem:[%s551 + $0x3c] sm:$0xf]
        %v668 = vld [vmem:[%s551 + $0x40] sm:$0xf]
        %v669 = vld [vmem:[%s551 + $0x44] sm:$0x1]
        %v670 = vld [vmem:[%s551 + $0x48] sm:$0xf]
        %v671 = vld [vmem:[%s551 + $0x4c] sm:$0xf]
        %v672 = vld [vmem:[%s551 + $0x50] sm:$0x1]
        %v673 = vld [vmem:[%s551 + $0x54] sm:$0xf]
        %v674 = vld [vmem:[%s551 + $0x58] sm:$0xf]
        %v675 = vld [vmem:[%s551 + $0x5c] sm:$0x1]
        %v676 = vld [vmem:[%s551 + $0x60] sm:$0xf]
        %v677 = vld [vmem:[%s551 + $0x64] sm:$0xf]
        %v678 = vld [vmem:[%s551 + $0x68] sm:$0x1]
        %v679 = vld [vmem:[%s551 + $0x6c] sm:$0xf]
        %v680 = vld [vmem:[%s551 + $0x70] sm:$0xf]
        %v681 = vld [vmem:[%s551 + $0x74] sm:$0x1]
        %v682 = vld [vmem:[%s551 + $0x78] sm:$0xf]
        %v683 = vld [vmem:[%s551 + $0x7c] sm:$0xf]
        %v684 = vld [vmem:[%s551 + $0x80] sm:$0x1]
        %v685 = vld [vmem:[%s551 + $0x84] sm:$0xf]
        %v686 = vld [vmem:[%s551 + $0x88] sm:$0xf]
        %v687 = vld [vmem:[%s551 + $0x8c] sm:$0x1]
        %v688 = vld [vmem:[%s551 + $0x90] sm:$0xf]
        %v689 = vld [vmem:[%s551 + $0x94] sm:$0xf]
        %v690 = vld [vmem:[%s551 + $0x98] sm:$0x1]
        %v691 = vld [vmem:[%s551 + $0x9c] sm:$0xf]
        %v692 = vld [vmem:[%s551 + $0xa0] sm:$0xf]
        %v693 = vld [vmem:[%s551 + $0xa4] sm:$0x1]
        %v694 = vld [vmem:[%s551 + $0xa8] sm:$0xf]
        %v695 = vld [vmem:[%s551 + $0xac] sm:$0xf]
        %v696 = vld [vmem:[%s551 + $0xb0] sm:$0x1]
        %v697 = vld [vmem:[%s551 + $0xb4] sm:$0xf]
        %v698 = vld [vmem:[%s551 + $0xb8] sm:$0xf]
        %v699 = vld [vmem:[%s551 + $0xbc] sm:$0x1]
        %v700 = vld [vmem:[%s551 + $0xc0] sm:$0xf]
        %v701 = vld [vmem:[%s551 + $0xc4] sm:$0xf]
        %v702 = vld [vmem:[%s551 + $0xc8] sm:$0x1]
        %v703 = vld [vmem:[%s551 + $0xcc] sm:$0xf]
        %v704 = vld [vmem:[%s551 + $0xd0] sm:$0xf]
        %v705 = vld [vmem:[%s551 + $0xd4] sm:$0x1]
        %v706 = vunpack.c.l.bf16 %v652
        %v707 = vunpack.c.l.bf16 %v653
        %v708 = vunpack.c.l.bf16 %v654
        %v709 = vunpack.c.l.bf16 %v655
        %v710 = vunpack.c.l.bf16 %v656
        %v711 = vunpack.c.l.bf16 %v657
        %v712 = vunpack.c.l.bf16 %v658
        %v713 = vunpack.c.l.bf16 %v659
        %v714 = vunpack.c.l.bf16 %v660
        %v715 = vunpack.c.l.bf16 %v661
        %v716 = vunpack.c.l.bf16 %v662
        %v717 = vunpack.c.l.bf16 %v663
        %v718 = vunpack.c.l.bf16 %v664
        %v719 = vunpack.c.l.bf16 %v665
        %v720 = vunpack.c.l.bf16 %v666
        %v721 = vunpack.c.l.bf16 %v667
        %v722 = vunpack.c.l.bf16 %v668
        %v723 = vunpack.c.l.bf16 %v669
        %v724 = vunpack.c.l.bf16 %v670
        %v725 = vunpack.c.l.bf16 %v671
        %v726 = vunpack.c.l.bf16 %v672
        %v727 = vunpack.c.l.bf16 %v673
        %v728 = vunpack.c.l.bf16 %v674
        %v729 = vunpack.c.l.bf16 %v675
        %v730 = vunpack.c.l.bf16 %v676
        %v731 = vunpack.c.l.bf16 %v677
        %v732 = vunpack.c.l.bf16 %v678
        %v733 = vunpack.c.l.bf16 %v679
        %v734 = vunpack.c.l.bf16 %v680
        %v735 = vunpack.c.l.bf16 %v681
        %v736 = vunpack.c.l.bf16 %v682
        %v737 = vunpack.c.l.bf16 %v683
        %v738 = vunpack.c.l.bf16 %v684
        %v739 = vunpack.c.l.bf16 %v685
        %v740 = vunpack.c.l.bf16 %v686
        %v741 = vunpack.c.l.bf16 %v687
        %v742 = vunpack.c.l.bf16 %v688
        %v743 = vunpack.c.l.bf16 %v689
        %v744 = vunpack.c.l.bf16 %v690
        %v745 = vunpack.c.l.bf16 %v691
        %v746 = vunpack.c.l.bf16 %v692
        %v747 = vunpack.c.l.bf16 %v693
        %v748 = vunpack.c.l.bf16 %v694
        %v749 = vunpack.c.l.bf16 %v695
        %v750 = vunpack.c.l.bf16 %v696
        %v751 = vunpack.c.l.bf16 %v697
        %v752 = vunpack.c.l.bf16 %v698
        %v753 = vunpack.c.l.bf16 %v699
        %v754 = vunpack.c.l.bf16 %v700
        %v755 = vunpack.c.l.bf16 %v701
        %v756 = vunpack.c.l.bf16 %v702
        %v757 = vunpack.c.l.bf16 %v703
        %v758 = vunpack.c.l.bf16 %v704
        %v759 = vunpack.c.l.bf16 %v705
        %v760 = vpack.c.bf16 %v707, %v706
        %v761 = vpack.c.bf16 %v710, %v709
        %v762 = vpack.c.bf16 %v713, %v712
        %v763 = vpack.c.bf16 %v716, %v715
        %v764 = vpack.c.bf16 %v719, %v718
        %v765 = vpack.c.bf16 %v722, %v721
        %v766 = vpack.c.bf16 %v725, %v724
        %v767 = vpack.c.bf16 %v728, %v727
        %v768 = vpack.c.bf16 %v731, %v730
        %v769 = vpack.c.bf16 %v734, %v733
        %v770 = vpack.c.bf16 %v737, %v736
        %v771 = vpack.c.bf16 %v740, %v739
        %v772 = vpack.c.bf16 %v743, %v742
        %v773 = vpack.c.bf16 %v746, %v745
        %v774 = vpack.c.bf16 %v749, %v748
        %v775 = vpack.c.bf16 %v752, %v751
        %vm776 = vcmask 523264
        %777 = vst.msk [vmem:[#allocation2] sm:$0xff] %vm776, %v760
        %778 = vst.msk [vmem:[#allocation2 + $0x28] sm:$0xff] %vm776, %v761
        %779 = vst.msk [vmem:[#allocation2 + $0x50] sm:$0xff] %vm776, %v762
        %780 = vst.msk [vmem:[#allocation2 + $0x78] sm:$0xff] %vm776, %v763
        %781 = vst.msk [vmem:[#allocation2 + $0xa0] sm:$0xff] %vm776, %v764
        %782 = vst.msk [vmem:[#allocation2 + $0xc8] sm:$0xff] %vm776, %v765
        %783 = vst.msk [vmem:[#allocation2 + $0xf0] sm:$0xff] %vm776, %v766
        %784 = vst.msk [vmem:[#allocation2 + $0x118] sm:$0xff] %vm776, %v767
        %785 = vst.msk [vmem:[#allocation2 + $0x140] sm:$0xff] %vm776, %v768
        %786 = vst.msk [vmem:[#allocation2 + $0x168] sm:$0xff] %vm776, %v769
        %787 = vst.msk [vmem:[#allocation2 + $0x190] sm:$0xff] %vm776, %v770
        %788 = vst.msk [vmem:[#allocation2 + $0x1b8] sm:$0xff] %vm776, %v771
        %789 = vst.msk [vmem:[#allocation2 + $0x1e0] sm:$0xff] %vm776, %v772
        %790 = vst.msk [vmem:[#allocation2 + $0x208] sm:$0xff] %vm776, %v773
        %791 = vst.msk [vmem:[#allocation2 + $0x230] sm:$0xff] %vm776, %v774
        %792 = vst.msk [vmem:[#allocation2 + $0x258] sm:$0xff] %vm776, %v775
        %vm841 = vcmask 1046528
        %v842 = vrot.slane %v706, 1
        %v843 = vrot.slane %v707, 1
        %v844 = vsel %vm841, %v842, %v843
        %v845 = vrot.slane %v708, 1
        %v846 = vsel %vm841, %v843, %v845
        %v847 = vrot.slane %v709, 1
        %v848 = vrot.slane %v710, 1
        %v849 = vsel %vm841, %v847, %v848
        %v850 = vrot.slane %v711, 1
        %v851 = vsel %vm841, %v848, %v850
        %v852 = vrot.slane %v712, 1
        %v853 = vrot.slane %v713, 1
        %v854 = vsel %vm841, %v852, %v853
        %v855 = vrot.slane %v714, 1
        %v856 = vsel %vm841, %v853, %v855
        %v857 = vrot.slane %v715, 1
        %v858 = vrot.slane %v716, 1
        %v859 = vsel %vm841, %v857, %v858
        %v860 = vrot.slane %v717, 1
        %v861 = vsel %vm841, %v858, %v860
        %v862 = vrot.slane %v718, 1
        %v863 = vrot.slane %v719, 1
        %v864 = vsel %vm841, %v862, %v863
        %v865 = vrot.slane %v720, 1
        %v866 = vsel %vm841, %v863, %v865
        %v867 = vrot.slane %v721, 1
        %v868 = vrot.slane %v722, 1
        %v869 = vsel %vm841, %v867, %v868
        %v870 = vrot.slane %v723, 1
        %v871 = vsel %vm841, %v868, %v870
        %v872 = vrot.slane %v724, 1
        %v873 = vrot.slane %v725, 1
        %v874 = vsel %vm841, %v872, %v873
        %v875 = vrot.slane %v726, 1
        %v876 = vsel %vm841, %v873, %v875
        %v877 = vrot.slane %v727, 1
        %v878 = vrot.slane %v728, 1
        %v879 = vsel %vm841, %v877, %v878
        %v880 = vrot.slane %v729, 1
        %v881 = vsel %vm841, %v878, %v880
        %v882 = vrot.slane %v730, 1
        %v883 = vrot.slane %v731, 1
        %v884 = vsel %vm841, %v882, %v883
        %v885 = vrot.slane %v732, 1
        %v886 = vsel %vm841, %v883, %v885
        %v887 = vrot.slane %v733, 1
        %v888 = vrot.slane %v734, 1
        %v889 = vsel %vm841, %v887, %v888
        %v890 = vrot.slane %v735, 1
        %v891 = vsel %vm841, %v888, %v890
        %v892 = vrot.slane %v736, 1
        %v893 = vrot.slane %v737, 1
        %v894 = vsel %vm841, %v892, %v893
        %v895 = vrot.slane %v738, 1
        %v896 = vsel %vm841, %v893, %v895
        %v897 = vrot.slane %v739, 1
        %v898 = vrot.slane %v740, 1
        %v899 = vsel %vm841, %v897, %v898
        %v900 = vrot.slane %v741, 1
        %v901 = vsel %vm841, %v898, %v900
        %v902 = vrot.slane %v742, 1
        %v903 = vrot.slane %v743, 1
        %v904 = vsel %vm841, %v902, %v903
        %v905 = vrot.slane %v744, 1
        %v906 = vsel %vm841, %v903, %v905
        %v907 = vrot.slane %v745, 1
        %v908 = vrot.slane %v746, 1
        %v909 = vsel %vm841, %v907, %v908
        %v910 = vrot.slane %v747, 1
        %v911 = vsel %vm841, %v908, %v910
        %v912 = vrot.slane %v748, 1
        %v913 = vrot.slane %v749, 1
        %v914 = vsel %vm841, %v912, %v913
        %v915 = vrot.slane %v750, 1
        %v916 = vsel %vm841, %v913, %v915
        %v917 = vrot.slane %v751, 1
        %v918 = vrot.slane %v752, 1
        %v919 = vsel %vm841, %v917, %v918
        %v920 = vrot.slane %v753, 1
        %v921 = vsel %vm841, %v918, %v920
        %v954 = vpack.c.bf16 %v846, %v844
        %v955 = vpack.c.bf16 %v851, %v849
        %v956 = vpack.c.bf16 %v856, %v854
        %v957 = vpack.c.bf16 %v861, %v859
        %v958 = vpack.c.bf16 %v866, %v864
        %v959 = vpack.c.bf16 %v871, %v869
        %v960 = vpack.c.bf16 %v876, %v874
        %v961 = vpack.c.bf16 %v881, %v879
        %v962 = vpack.c.bf16 %v886, %v884
        %v963 = vpack.c.bf16 %v891, %v889
        %v964 = vpack.c.bf16 %v896, %v894
        %v965 = vpack.c.bf16 %v901, %v899
        %v966 = vpack.c.bf16 %v906, %v904
        %v967 = vpack.c.bf16 %v911, %v909
        %v968 = vpack.c.bf16 %v916, %v914
        %v969 = vpack.c.bf16 %v921, %v919
        %986 = vrot.lane.b32.xlu0 %v954, 64
        %v987 = vpop.permute.xlu0 %986
        %988 = vrot.lane.b32.xlu0 %v955, 64
        %v989 = vpop.permute.xlu0 %988
        %990 = vrot.lane.b32.xlu0 %v956, 64
        %v991 = vpop.permute.xlu0 %990
        %992 = vrot.lane.b32.xlu0 %v957, 64
        %v993 = vpop.permute.xlu0 %992
        %994 = vrot.lane.b32.xlu0 %v958, 64
        %v995 = vpop.permute.xlu0 %994
        %996 = vrot.lane.b32.xlu0 %v959, 64
        %v997 = vpop.permute.xlu0 %996
        %998 = vrot.lane.b32.xlu0 %v960, 64
        %v999 = vpop.permute.xlu0 %998
        %1000 = vrot.lane.b32.xlu0 %v961, 64
        %v1001 = vpop.permute.xlu0 %1000
        %1002 = vrot.lane.b32.xlu0 %v962, 64
        %v1003 = vpop.permute.xlu0 %1002
        %1004 = vrot.lane.b32.xlu0 %v963, 64
        %v1005 = vpop.permute.xlu0 %1004
        %1006 = vrot.lane.b32.xlu0 %v964, 64
        %v1007 = vpop.permute.xlu0 %1006
        %1008 = vrot.lane.b32.xlu0 %v965, 64
        %v1009 = vpop.permute.xlu0 %1008
        %1010 = vrot.lane.b32.xlu0 %v966, 64
        %v1011 = vpop.permute.xlu0 %1010
        %1012 = vrot.lane.b32.xlu0 %v967, 64
        %v1013 = vpop.permute.xlu0 %1012
        %1014 = vrot.lane.b32.xlu0 %v968, 64
        %v1015 = vpop.permute.xlu0 %1014
        %1016 = vrot.lane.b32.xlu0 %v969, 64
        %v1017 = vpop.permute.xlu0 %1016
        %vm1034 = vcmask 1048064
        %1035 = vst.msk [vmem:[#allocation2] sm:$0xff] %vm1034, %v987
        %1036 = vst.msk [vmem:[#allocation2 + $0x28] sm:$0xff] %vm1034, %v989
        %1037 = vst.msk [vmem:[#allocation2 + $0x50] sm:$0xff] %vm1034, %v991
        %1038 = vst.msk [vmem:[#allocation2 + $0x78] sm:$0xff] %vm1034, %v993
        %1039 = vst.msk [vmem:[#allocation2 + $0xa0] sm:$0xff] %vm1034, %v995
        %1040 = vst.msk [vmem:[#allocation2 + $0xc8] sm:$0xff] %vm1034, %v997
        %1041 = vst.msk [vmem:[#allocation2 + $0xf0] sm:$0xff] %vm1034, %v999
        %1042 = vst.msk [vmem:[#allocation2 + $0x118] sm:$0xff] %vm1034, %v1001
        %1043 = vst.msk [vmem:[#allocation2 + $0x140] sm:$0xff] %vm1034, %v1003
        %1044 = vst.msk [vmem:[#allocation2 + $0x168] sm:$0xff] %vm1034, %v1005
        %1045 = vst.msk [vmem:[#allocation2 + $0x190] sm:$0xff] %vm1034, %v1007
        %1046 = vst.msk [vmem:[#allocation2 + $0x1b8] sm:$0xff] %vm1034, %v1009
        %1047 = vst.msk [vmem:[#allocation2 + $0x1e0] sm:$0xff] %vm1034, %v1011
        %1048 = vst.msk [vmem:[#allocation2 + $0x208] sm:$0xff] %vm1034, %v1013
        %1049 = vst.msk [vmem:[#allocation2 + $0x230] sm:$0xff] %vm1034, %v1015
        %1050 = vst.msk [vmem:[#allocation2 + $0x258] sm:$0xff] %vm1034, %v1017
        %vm1051 = vcmask 1045504
        %v1052 = vrot.slane %v706, 2
        %v1053 = vrot.slane %v707, 2
        %v1054 = vsel %vm1051, %v1052, %v1053
        %v1055 = vrot.slane %v708, 2
        %v1056 = vsel %vm1051, %v1053, %v1055
        %v1057 = vrot.slane %v709, 2
        %v1058 = vrot.slane %v710, 2
        %v1059 = vsel %vm1051, %v1057, %v1058
        %v1060 = vrot.slane %v711, 2
        %v1061 = vsel %vm1051, %v1058, %v1060
        %v1062 = vrot.slane %v712, 2
        %v1063 = vrot.slane %v713, 2
        %v1064 = vsel %vm1051, %v1062, %v1063
        %v1065 = vrot.slane %v714, 2
        %v1066 = vsel %vm1051, %v1063, %v1065
        %v1067 = vrot.slane %v715, 2
        %v1068 = vrot.slane %v716, 2
        %v1069 = vsel %vm1051, %v1067, %v1068
        %v1070 = vrot.slane %v717, 2
        %v1071 = vsel %vm1051, %v1068, %v1070
        %v1072 = vrot.slane %v718, 2
        %v1073 = vrot.slane %v719, 2
        %v1074 = vsel %vm1051, %v1072, %v1073
        %v1075 = vrot.slane %v720, 2
        %v1076 = vsel %vm1051, %v1073, %v1075
        %v1077 = vrot.slane %v721, 2
        %v1078 = vrot.slane %v722, 2
        %v1079 = vsel %vm1051, %v1077, %v1078
        %v1080 = vrot.slane %v723, 2
        %v1081 = vsel %vm1051, %v1078, %v1080
        %v1082 = vrot.slane %v724, 2
        %v1083 = vrot.slane %v725, 2
        %v1084 = vsel %vm1051, %v1082, %v1083
        %v1085 = vrot.slane %v726, 2
        %v1086 = vsel %vm1051, %v1083, %v1085
        %v1087 = vrot.slane %v727, 2
        %v1088 = vrot.slane %v728, 2
        %v1089 = vsel %vm1051, %v1087, %v1088
        %v1090 = vrot.slane %v729, 2
        %v1091 = vsel %vm1051, %v1088, %v1090
        %v1092 = vrot.slane %v730, 2
        %v1093 = vrot.slane %v731, 2
        %v1094 = vsel %vm1051, %v1092, %v1093
        %v1095 = vrot.slane %v732, 2
        %v1096 = vsel %vm1051, %v1093, %v1095
        %v1097 = vrot.slane %v733, 2
        %v1098 = vrot.slane %v734, 2
        %v1099 = vsel %vm1051, %v1097, %v1098
        %v1100 = vrot.slane %v735, 2
        %v1101 = vsel %vm1051, %v1098, %v1100
        %v1102 = vrot.slane %v736, 2
        %v1103 = vrot.slane %v737, 2
        %v1104 = vsel %vm1051, %v1102, %v1103
        %v1105 = vrot.slane %v738, 2
        %v1106 = vsel %vm1051, %v1103, %v1105
        %v1107 = vrot.slane %v739, 2
        %v1108 = vrot.slane %v740, 2
        %v1109 = vsel %vm1051, %v1107, %v1108
        %v1110 = vrot.slane %v741, 2
        %v1111 = vsel %vm1051, %v1108, %v1110
        %v1112 = vrot.slane %v742, 2
        %v1113 = vrot.slane %v743, 2
        %v1114 = vsel %vm1051, %v1112, %v1113
        %v1115 = vrot.slane %v744, 2
        %v1116 = vsel %vm1051, %v1113, %v1115
        %v1117 = vrot.slane %v745, 2
        %v1118 = vrot.slane %v746, 2
        %v1119 = vsel %vm1051, %v1117, %v1118
        %v1120 = vrot.slane %v747, 2
        %v1121 = vsel %vm1051, %v1118, %v1120
        %v1122 = vrot.slane %v748, 2
        %v1123 = vrot.slane %v749, 2
        %v1124 = vsel %vm1051, %v1122, %v1123
        %v1125 = vrot.slane %v750, 2
        %v1126 = vsel %vm1051, %v1123, %v1125
        %v1127 = vrot.slane %v751, 2
        %v1128 = vrot.slane %v752, 2
        %v1129 = vsel %vm1051, %v1127, %v1128
        %v1130 = vrot.slane %v753, 2
        %v1131 = vsel %vm1051, %v1128, %v1130
        %v1164 = vpack.c.bf16 %v1056, %v1054
        %v1165 = vpack.c.bf16 %v1061, %v1059
        %v1166 = vpack.c.bf16 %v1066, %v1064
        %v1167 = vpack.c.bf16 %v1071, %v1069
        %v1168 = vpack.c.bf16 %v1076, %v1074
        %v1169 = vpack.c.bf16 %v1081, %v1079
        %v1170 = vpack.c.bf16 %v1086, %v1084
        %v1171 = vpack.c.bf16 %v1091, %v1089
        %v1172 = vpack.c.bf16 %v1096, %v1094
        %v1173 = vpack.c.bf16 %v1101, %v1099
        %v1174 = vpack.c.bf16 %v1106, %v1104
        %v1175 = vpack.c.bf16 %v1111, %v1109
        %v1176 = vpack.c.bf16 %v1116, %v1114
        %v1177 = vpack.c.bf16 %v1121, %v1119
        %v1178 = vpack.c.bf16 %v1126, %v1124
        %v1179 = vpack.c.bf16 %v1131, %v1129
        %1180 = vst.msk [vmem:[#allocation2 + $0x8] sm:$0xff] %vm776, %v1164
        %1181 = vst.msk [vmem:[#allocation2 + $0x30] sm:$0xff] %vm776, %v1165
        %1182 = vst.msk [vmem:[#allocation2 + $0x58] sm:$0xff] %vm776, %v1166
        %1183 = vst.msk [vmem:[#allocation2 + $0x80] sm:$0xff] %vm776, %v1167
        %1184 = vst.msk [vmem:[#allocation2 + $0xa8] sm:$0xff] %vm776, %v1168
        %1185 = vst.msk [vmem:[#allocation2 + $0xd0] sm:$0xff] %vm776, %v1169
        %1186 = vst.msk [vmem:[#allocation2 + $0xf8] sm:$0xff] %vm776, %v1170
        %1187 = vst.msk [vmem:[#allocation2 + $0x120] sm:$0xff] %vm776, %v1171
        %1188 = vst.msk [vmem:[#allocation2 + $0x148] sm:$0xff] %vm776, %v1172
        %1189 = vst.msk [vmem:[#allocation2 + $0x170] sm:$0xff] %vm776, %v1173
        %1190 = vst.msk [vmem:[#allocation2 + $0x198] sm:$0xff] %vm776, %v1174
        %1191 = vst.msk [vmem:[#allocation2 + $0x1c0] sm:$0xff] %vm776, %v1175
        %1192 = vst.msk [vmem:[#allocation2 + $0x1e8] sm:$0xff] %vm776, %v1176
        %1193 = vst.msk [vmem:[#allocation2 + $0x210] sm:$0xff] %vm776, %v1177
        %1194 = vst.msk [vmem:[#allocation2 + $0x238] sm:$0xff] %vm776, %v1178
        %1195 = vst.msk [vmem:[#allocation2 + $0x260] sm:$0xff] %vm776, %v1179
        %v1196 = vpack.c.bf16 %v755, %v754
        %1213 = vrot.lane.b32.xlu0 %v761, 64
        %v1214 = vpop.permute.xlu0 %1213
        %1215 = vrot.lane.b32.xlu0 %v762, 64
        %v1216 = vpop.permute.xlu0 %1215
        %1217 = vrot.lane.b32.xlu0 %v763, 64
        %v1218 = vpop.permute.xlu0 %1217
        %1219 = vrot.lane.b32.xlu0 %v764, 64
        %v1220 = vpop.permute.xlu0 %1219
        %1221 = vrot.lane.b32.xlu0 %v765, 64
        %v1222 = vpop.permute.xlu0 %1221
        %1223 = vrot.lane.b32.xlu0 %v766, 64
        %v1224 = vpop.permute.xlu0 %1223
        %1225 = vrot.lane.b32.xlu0 %v767, 64
        %v1226 = vpop.permute.xlu0 %1225
        %1227 = vrot.lane.b32.xlu0 %v768, 64
        %v1228 = vpop.permute.xlu0 %1227
        %1229 = vrot.lane.b32.xlu0 %v769, 64
        %v1230 = vpop.permute.xlu0 %1229
        %1231 = vrot.lane.b32.xlu0 %v770, 64
        %v1232 = vpop.permute.xlu0 %1231
        %1233 = vrot.lane.b32.xlu0 %v771, 64
        %v1234 = vpop.permute.xlu0 %1233
        %1235 = vrot.lane.b32.xlu0 %v772, 64
        %v1236 = vpop.permute.xlu0 %1235
        %1237 = vrot.lane.b32.xlu0 %v773, 64
        %v1238 = vpop.permute.xlu0 %1237
        %1239 = vrot.lane.b32.xlu0 %v774, 64
        %v1240 = vpop.permute.xlu0 %1239
        %1241 = vrot.lane.b32.xlu0 %v775, 64
        %v1242 = vpop.permute.xlu0 %1241
        %1243 = vrot.lane.b32.xlu0 %v1196, 64
        %v1244 = vpop.permute.xlu0 %1243
        %1261 = vst.msk [vmem:[#allocation2 + $0x8] sm:$0xff] %vm1034, %v1214
        %1262 = vst.msk [vmem:[#allocation2 + $0x30] sm:$0xff] %vm1034, %v1216
        %1263 = vst.msk [vmem:[#allocation2 + $0x58] sm:$0xff] %vm1034, %v1218
        %1264 = vst.msk [vmem:[#allocation2 + $0x80] sm:$0xff] %vm1034, %v1220
        %1265 = vst.msk [vmem:[#allocation2 + $0xa8] sm:$0xff] %vm1034, %v1222
        %1266 = vst.msk [vmem:[#allocation2 + $0xd0] sm:$0xff] %vm1034, %v1224
        %1267 = vst.msk [vmem:[#allocation2 + $0xf8] sm:$0xff] %vm1034, %v1226
        %1268 = vst.msk [vmem:[#allocation2 + $0x120] sm:$0xff] %vm1034, %v1228
        %1269 = vst.msk [vmem:[#allocation2 + $0x148] sm:$0xff] %vm1034, %v1230
        %1270 = vst.msk [vmem:[#allocation2 + $0x170] sm:$0xff] %vm1034, %v1232
        %1271 = vst.msk [vmem:[#allocation2 + $0x198] sm:$0xff] %vm1034, %v1234
        %1272 = vst.msk [vmem:[#allocation2 + $0x1c0] sm:$0xff] %vm1034, %v1236
        %1273 = vst.msk [vmem:[#allocation2 + $0x1e8] sm:$0xff] %vm1034, %v1238
        %1274 = vst.msk [vmem:[#allocation2 + $0x210] sm:$0xff] %vm1034, %v1240
        %1275 = vst.msk [vmem:[#allocation2 + $0x238] sm:$0xff] %vm1034, %v1242
        %1276 = vst.msk [vmem:[#allocation2 + $0x260] sm:$0xff] %vm1034, %v1244
        %v1280 = vrot.slane %v754, 1
        %v1281 = vrot.slane %v755, 1
        %v1282 = vsel %vm841, %v1280, %v1281
        %v1283 = vrot.slane %v756, 1
        %v1284 = vsel %vm841, %v1281, %v1283
        %v1287 = vpack.c.bf16 %v1284, %v1282
        %1288 = vst.msk [vmem:[#allocation2 + $0x10] sm:$0xff] %vm776, %v955
        %1289 = vst.msk [vmem:[#allocation2 + $0x38] sm:$0xff] %vm776, %v956
        %1290 = vst.msk [vmem:[#allocation2 + $0x60] sm:$0xff] %vm776, %v957
        %1291 = vst.msk [vmem:[#allocation2 + $0x88] sm:$0xff] %vm776, %v958
        %1292 = vst.msk [vmem:[#allocation2 + $0xb0] sm:$0xff] %vm776, %v959
        %1293 = vst.msk [vmem:[#allocation2 + $0xd8] sm:$0xff] %vm776, %v960
        %1294 = vst.msk [vmem:[#allocation2 + $0x100] sm:$0xff] %vm776, %v961
        %1295 = vst.msk [vmem:[#allocation2 + $0x128] sm:$0xff] %vm776, %v962
        %1296 = vst.msk [vmem:[#allocation2 + $0x150] sm:$0xff] %vm776, %v963
        %1297 = vst.msk [vmem:[#allocation2 + $0x178] sm:$0xff] %vm776, %v964
        %1298 = vst.msk [vmem:[#allocation2 + $0x1a0] sm:$0xff] %vm776, %v965
        %1299 = vst.msk [vmem:[#allocation2 + $0x1c8] sm:$0xff] %vm776, %v966
        %1300 = vst.msk [vmem:[#allocation2 + $0x1f0] sm:$0xff] %vm776, %v967
        %1301 = vst.msk [vmem:[#allocation2 + $0x218] sm:$0xff] %vm776, %v968
        %1302 = vst.msk [vmem:[#allocation2 + $0x240] sm:$0xff] %vm776, %v969
        %1303 = vst.msk [vmem:[#allocation2 + $0x268] sm:$0xff] %vm776, %v1287
        %v1304 = vrot.slane %v754, 2
        %v1305 = vrot.slane %v755, 2
        %v1306 = vsel %vm1051, %v1304, %v1305
        %v1307 = vrot.slane %v756, 2
        %v1308 = vsel %vm1051, %v1305, %v1307
        %v1311 = vpack.c.bf16 %v1308, %v1306
        %1328 = vrot.lane.b32.xlu0 %v1165, 64
        %v1329 = vpop.permute.xlu0 %1328
        %1330 = vrot.lane.b32.xlu0 %v1166, 64
        %v1331 = vpop.permute.xlu0 %1330
        %1332 = vrot.lane.b32.xlu0 %v1167, 64
        %v1333 = vpop.permute.xlu0 %1332
        %1334 = vrot.lane.b32.xlu0 %v1168, 64
        %v1335 = vpop.permute.xlu0 %1334
        %1336 = vrot.lane.b32.xlu0 %v1169, 64
        %v1337 = vpop.permute.xlu0 %1336
        %1338 = vrot.lane.b32.xlu0 %v1170, 64
        %v1339 = vpop.permute.xlu0 %1338
        %1340 = vrot.lane.b32.xlu0 %v1171, 64
        %v1341 = vpop.permute.xlu0 %1340
        %1342 = vrot.lane.b32.xlu0 %v1172, 64
        %v1343 = vpop.permute.xlu0 %1342
        %1344 = vrot.lane.b32.xlu0 %v1173, 64
        %v1345 = vpop.permute.xlu0 %1344
        %1346 = vrot.lane.b32.xlu0 %v1174, 64
        %v1347 = vpop.permute.xlu0 %1346
        %1348 = vrot.lane.b32.xlu0 %v1175, 64
        %v1349 = vpop.permute.xlu0 %1348
        %1350 = vrot.lane.b32.xlu0 %v1176, 64
        %v1351 = vpop.permute.xlu0 %1350
        %1352 = vrot.lane.b32.xlu0 %v1177, 64
        %v1353 = vpop.permute.xlu0 %1352
        %1354 = vrot.lane.b32.xlu0 %v1178, 64
        %v1355 = vpop.permute.xlu0 %1354
        %1356 = vrot.lane.b32.xlu0 %v1179, 64
        %v1357 = vpop.permute.xlu0 %1356
        %1358 = vrot.lane.b32.xlu0 %v1311, 64
        %v1359 = vpop.permute.xlu0 %1358
        %1376 = vst.msk [vmem:[#allocation2 + $0x10] sm:$0xff] %vm1034, %v1329
        %1377 = vst.msk [vmem:[#allocation2 + $0x38] sm:$0xff] %vm1034, %v1331
        %1378 = vst.msk [vmem:[#allocation2 + $0x60] sm:$0xff] %vm1034, %v1333
        %1379 = vst.msk [vmem:[#allocation2 + $0x88] sm:$0xff] %vm1034, %v1335
        %1380 = vst.msk [vmem:[#allocation2 + $0xb0] sm:$0xff] %vm1034, %v1337
        %1381 = vst.msk [vmem:[#allocation2 + $0xd8] sm:$0xff] %vm1034, %v1339
        %1382 = vst.msk [vmem:[#allocation2 + $0x100] sm:$0xff] %vm1034, %v1341
        %1383 = vst.msk [vmem:[#allocation2 + $0x128] sm:$0xff] %vm1034, %v1343
        %1384 = vst.msk [vmem:[#allocation2 + $0x150] sm:$0xff] %vm1034, %v1345
        %1385 = vst.msk [vmem:[#allocation2 + $0x178] sm:$0xff] %vm1034, %v1347
        %1386 = vst.msk [vmem:[#allocation2 + $0x1a0] sm:$0xff] %vm1034, %v1349
        %1387 = vst.msk [vmem:[#allocation2 + $0x1c8] sm:$0xff] %vm1034, %v1351
        %1388 = vst.msk [vmem:[#allocation2 + $0x1f0] sm:$0xff] %vm1034, %v1353
        %1389 = vst.msk [vmem:[#allocation2 + $0x218] sm:$0xff] %vm1034, %v1355
        %1390 = vst.msk [vmem:[#allocation2 + $0x240] sm:$0xff] %vm1034, %v1357
        %1391 = vst.msk [vmem:[#allocation2 + $0x268] sm:$0xff] %vm1034, %v1359
        %v1392 = vpack.c.bf16 %v758, %v757
        %1393 = vst.msk [vmem:[#allocation2 + $0x18] sm:$0xff] %vm776, %v762
        %1394 = vst.msk [vmem:[#allocation2 + $0x40] sm:$0xff] %vm776, %v763
        %1395 = vst.msk [vmem:[#allocation2 + $0x68] sm:$0xff] %vm776, %v764
        %1396 = vst.msk [vmem:[#allocation2 + $0x90] sm:$0xff] %vm776, %v765
        %1397 = vst.msk [vmem:[#allocation2 + $0xb8] sm:$0xff] %vm776, %v766
        %1398 = vst.msk [vmem:[#allocation2 + $0xe0] sm:$0xff] %vm776, %v767
        %1399 = vst.msk [vmem:[#allocation2 + $0x108] sm:$0xff] %vm776, %v768
        %1400 = vst.msk [vmem:[#allocation2 + $0x130] sm:$0xff] %vm776, %v769
        %1401 = vst.msk [vmem:[#allocation2 + $0x158] sm:$0xff] %vm776, %v770
        %1402 = vst.msk [vmem:[#allocation2 + $0x180] sm:$0xff] %vm776, %v771
        %1403 = vst.msk [vmem:[#allocation2 + $0x1a8] sm:$0xff] %vm776, %v772
        %1404 = vst.msk [vmem:[#allocation2 + $0x1d0] sm:$0xff] %vm776, %v773
        %1405 = vst.msk [vmem:[#allocation2 + $0x1f8] sm:$0xff] %vm776, %v774
        %1406 = vst.msk [vmem:[#allocation2 + $0x220] sm:$0xff] %vm776, %v775
        %1407 = vst.msk [vmem:[#allocation2 + $0x248] sm:$0xff] %vm776, %v1196
        %1408 = vst.msk [vmem:[#allocation2 + $0x270] sm:$0xff] %vm776, %v1392
        %v1412 = vrot.slane %v757, 1
        %v1413 = vrot.slane %v758, 1
        %v1414 = vsel %vm841, %v1412, %v1413
        %v1415 = vrot.slane %v759, 1
        %v1416 = vsel %vm841, %v1413, %v1415
        %v1419 = vpack.c.bf16 %v1416, %v1414
        %1422 = vrot.lane.b32.xlu0 %v1287, 64
        %v1423 = vpop.permute.xlu0 %1422
        %1424 = vrot.lane.b32.xlu0 %v1419, 64
        %v1425 = vpop.permute.xlu0 %1424
        %1428 = vst.msk [vmem:[#allocation2 + $0x18] sm:$0xff] %vm1034, %v991
        %1429 = vst.msk [vmem:[#allocation2 + $0x40] sm:$0xff] %vm1034, %v993
        %1430 = vst.msk [vmem:[#allocation2 + $0x68] sm:$0xff] %vm1034, %v995
        %1431 = vst.msk [vmem:[#allocation2 + $0x90] sm:$0xff] %vm1034, %v997
        %1432 = vst.msk [vmem:[#allocation2 + $0xb8] sm:$0xff] %vm1034, %v999
        %1433 = vst.msk [vmem:[#allocation2 + $0xe0] sm:$0xff] %vm1034, %v1001
        %1434 = vst.msk [vmem:[#allocation2 + $0x108] sm:$0xff] %vm1034, %v1003
        %1435 = vst.msk [vmem:[#allocation2 + $0x130] sm:$0xff] %vm1034, %v1005
        %1436 = vst.msk [vmem:[#allocation2 + $0x158] sm:$0xff] %vm1034, %v1007
        %1437 = vst.msk [vmem:[#allocation2 + $0x180] sm:$0xff] %vm1034, %v1009
        %1438 = vst.msk [vmem:[#allocation2 + $0x1a8] sm:$0xff] %vm1034, %v1011
        %1439 = vst.msk [vmem:[#allocation2 + $0x1d0] sm:$0xff] %vm1034, %v1013
        %1440 = vst.msk [vmem:[#allocation2 + $0x1f8] sm:$0xff] %vm1034, %v1015
        %1441 = vst.msk [vmem:[#allocation2 + $0x220] sm:$0xff] %vm1034, %v1017
        %1442 = vst.msk [vmem:[#allocation2 + $0x248] sm:$0xff] %vm1034, %v1423
        %1443 = vst.msk [vmem:[#allocation2 + $0x270] sm:$0xff] %vm1034, %v1425
        %v1444 = vrot.slane %v757, 2
        %v1445 = vrot.slane %v758, 2
        %v1446 = vsel %vm1051, %v1444, %v1445
        %v1447 = vrot.slane %v759, 2
        %v1448 = vsel %vm1051, %v1445, %v1447
        %v1451 = vpack.c.bf16 %v1448, %v1446
        %1452 = vst.msk [vmem:[#allocation2 + $0x20] sm:$0xff] %vm776, %v1166
        %1453 = vst.msk [vmem:[#allocation2 + $0x48] sm:$0xff] %vm776, %v1167
        %1454 = vst.msk [vmem:[#allocation2 + $0x70] sm:$0xff] %vm776, %v1168
        %1455 = vst.msk [vmem:[#allocation2 + $0x98] sm:$0xff] %vm776, %v1169
        %1456 = vst.msk [vmem:[#allocation2 + $0xc0] sm:$0xff] %vm776, %v1170
        %1457 = vst.msk [vmem:[#allocation2 + $0xe8] sm:$0xff] %vm776, %v1171
        %1458 = vst.msk [vmem:[#allocation2 + $0x110] sm:$0xff] %vm776, %v1172
        %1459 = vst.msk [vmem:[#allocation2 + $0x138] sm:$0xff] %vm776, %v1173
        %1460 = vst.msk [vmem:[#allocation2 + $0x160] sm:$0xff] %vm776, %v1174
        %1461 = vst.msk [vmem:[#allocation2 + $0x188] sm:$0xff] %vm776, %v1175
        %1462 = vst.msk [vmem:[#allocation2 + $0x1b0] sm:$0xff] %vm776, %v1176
        %1463 = vst.msk [vmem:[#allocation2 + $0x1d8] sm:$0xff] %vm776, %v1177
        %1464 = vst.msk [vmem:[#allocation2 + $0x200] sm:$0xff] %vm776, %v1178
        %1465 = vst.msk [vmem:[#allocation2 + $0x228] sm:$0xff] %vm776, %v1179
        %1466 = vst.msk [vmem:[#allocation2 + $0x250] sm:$0xff] %vm776, %v1311
        %1467 = vst.msk [vmem:[#allocation2 + $0x278] sm:$0xff] %vm776, %v1451
        %v1468 = vld [vmem:[#allocation2] sm:$0xff]
        %v1469 = vld [vmem:[#allocation2 + $0x8] sm:$0xff]
        %v1470 = vld [vmem:[#allocation2 + $0x10] sm:$0xff]
        %v1471 = vld [vmem:[#allocation2 + $0x18] sm:$0xff]
        %v1472 = vld [vmem:[#allocation2 + $0x20] sm:$0xff]
        %v1473 = vld [vmem:[#allocation2 + $0x28] sm:$0xff]
        %v1474 = vld [vmem:[#allocation2 + $0x30] sm:$0xff]
        %v1475 = vld [vmem:[#allocation2 + $0x38] sm:$0xff]
        %v1476 = vld [vmem:[#allocation2 + $0x40] sm:$0xff]
        %v1477 = vld [vmem:[#allocation2 + $0x48] sm:$0xff]
        %v1478 = vld [vmem:[#allocation2 + $0x50] sm:$0xff]
        %v1479 = vld [vmem:[#allocation2 + $0x58] sm:$0xff]
        %v1480 = vld [vmem:[#allocation2 + $0x60] sm:$0xff]
        %v1481 = vld [vmem:[#allocation2 + $0x68] sm:$0xff]
        %v1482 = vld [vmem:[#allocation2 + $0x70] sm:$0xff]
        %v1483 = vld [vmem:[#allocation2 + $0x78] sm:$0xff]
        %v1484 = vld [vmem:[#allocation2 + $0x80] sm:$0xff]
        %v1485 = vld [vmem:[#allocation2 + $0x88] sm:$0xff]
        %v1486 = vld [vmem:[#allocation2 + $0x90] sm:$0xff]
        %v1487 = vld [vmem:[#allocation2 + $0x98] sm:$0xff]
        %v1488 = vld [vmem:[#allocation2 + $0xa0] sm:$0xff]
        %v1489 = vld [vmem:[#allocation2 + $0xa8] sm:$0xff]
        %v1490 = vld [vmem:[#allocation2 + $0xb0] sm:$0xff]
        %v1491 = vld [vmem:[#allocation2 + $0xb8] sm:$0xff]
        %v1492 = vld [vmem:[#allocation2 + $0xc0] sm:$0xff]
        %v1493 = vld [vmem:[#allocation2 + $0xc8] sm:$0xff]
        %v1494 = vld [vmem:[#allocation2 + $0xd0] sm:$0xff]
        %v1495 = vld [vmem:[#allocation2 + $0xd8] sm:$0xff]
        %v1496 = vld [vmem:[#allocation2 + $0xe0] sm:$0xff]
        %v1497 = vld [vmem:[#allocation2 + $0xe8] sm:$0xff]
        %v1498 = vld [vmem:[#allocation2 + $0xf0] sm:$0xff]
        %v1499 = vld [vmem:[#allocation2 + $0xf8] sm:$0xff]
        %v1500 = vld [vmem:[#allocation2 + $0x100] sm:$0xff]
        %v1501 = vld [vmem:[#allocation2 + $0x108] sm:$0xff]
        %v1502 = vld [vmem:[#allocation2 + $0x110] sm:$0xff]
        %v1503 = vld [vmem:[#allocation2 + $0x118] sm:$0xff]
        %v1504 = vld [vmem:[#allocation2 + $0x120] sm:$0xff]
        %v1505 = vld [vmem:[#allocation2 + $0x128] sm:$0xff]
        %v1506 = vld [vmem:[#allocation2 + $0x130] sm:$0xff]
        %v1507 = vld [vmem:[#allocation2 + $0x138] sm:$0xff]
        %v1508 = vld [vmem:[#allocation2 + $0x140] sm:$0xff]
        %v1509 = vld [vmem:[#allocation2 + $0x148] sm:$0xff]
        %v1510 = vld [vmem:[#allocation2 + $0x150] sm:$0xff]
        %v1511 = vld [vmem:[#allocation2 + $0x158] sm:$0xff]
        %v1512 = vld [vmem:[#allocation2 + $0x160] sm:$0xff]
        %v1513 = vld [vmem:[#allocation2 + $0x168] sm:$0xff]
        %v1514 = vld [vmem:[#allocation2 + $0x170] sm:$0xff]
        %v1515 = vld [vmem:[#allocation2 + $0x178] sm:$0xff]
        %v1516 = vld [vmem:[#allocation2 + $0x180] sm:$0xff]
        %v1517 = vld [vmem:[#allocation2 + $0x188] sm:$0xff]
        %v1518 = vld [vmem:[#allocation2 + $0x190] sm:$0xff]
        %v1519 = vld [vmem:[#allocation2 + $0x198] sm:$0xff]
        %v1520 = vld [vmem:[#allocation2 + $0x1a0] sm:$0xff]
        %v1521 = vld [vmem:[#allocation2 + $0x1a8] sm:$0xff]
        %v1522 = vld [vmem:[#allocation2 + $0x1b0] sm:$0xff]
        %v1523 = vld [vmem:[#allocation2 + $0x1b8] sm:$0xff]
        %v1524 = vld [vmem:[#allocation2 + $0x1c0] sm:$0xff]
        %v1525 = vld [vmem:[#allocation2 + $0x1c8] sm:$0xff]
        %v1526 = vld [vmem:[#allocation2 + $0x1d0] sm:$0xff]
        %v1527 = vld [vmem:[#allocation2 + $0x1d8] sm:$0xff]
        %v1528 = vld [vmem:[#allocation2 + $0x1e0] sm:$0xff]
        %v1529 = vld [vmem:[#allocation2 + $0x1e8] sm:$0xff]
        %v1530 = vld [vmem:[#allocation2 + $0x1f0] sm:$0xff]
        %v1531 = vld [vmem:[#allocation2 + $0x1f8] sm:$0xff]
        %v1532 = vld [vmem:[#allocation2 + $0x200] sm:$0xff]
        %v1533 = vld [vmem:[#allocation2 + $0x208] sm:$0xff]
        %v1534 = vld [vmem:[#allocation2 + $0x210] sm:$0xff]
        %v1535 = vld [vmem:[#allocation2 + $0x218] sm:$0xff]
        %v1536 = vld [vmem:[#allocation2 + $0x220] sm:$0xff]
        %v1537 = vld [vmem:[#allocation2 + $0x228] sm:$0xff]
        %v1538 = vld [vmem:[#allocation2 + $0x230] sm:$0xff]
        %v1539 = vld [vmem:[#allocation2 + $0x238] sm:$0xff]
        %v1540 = vld [vmem:[#allocation2 + $0x240] sm:$0xff]
        %v1541 = vld [vmem:[#allocation2 + $0x248] sm:$0xff]
        %v1542 = vld [vmem:[#allocation2 + $0x250] sm:$0xff]
        %v1543 = vld [vmem:[#allocation2 + $0x258] sm:$0xff]
        %v1544 = vld [vmem:[#allocation2 + $0x260] sm:$0xff]
        %v1545 = vld [vmem:[#allocation2 + $0x268] sm:$0xff]
        %v1546 = vld [vmem:[#allocation2 + $0x270] sm:$0xff]
        %v1547 = vld [vmem:[#allocation2 + $0x278] sm:$0xff]
        %v1548 = vld [vmem:[#allocation6] sm:$0xff]
        %v1549 = vld [vmem:[#allocation6 + $0x8] sm:$0xff]
        %v1550 = vld [vmem:[#allocation6 + $0x10] sm:$0xf]
        %v1551 = vld [vmem:[#allocation6 + $0x14] sm:$0xff]
        %v1552 = vld [vmem:[#allocation6 + $0x1c] sm:$0xff]
        %v1553 = vld [vmem:[#allocation6 + $0x24] sm:$0xf]
        %v1554 = vld [vmem:[#allocation6 + $0x28] sm:$0xff]
        %v1555 = vld [vmem:[#allocation6 + $0x30] sm:$0xff]
        %v1556 = vld [vmem:[#allocation6 + $0x38] sm:$0xf]
        %v1557 = vld [vmem:[#allocation6 + $0x3c] sm:$0xff]
        %v1558 = vld [vmem:[#allocation6 + $0x44] sm:$0xff]
        %v1559 = vld [vmem:[#allocation6 + $0x4c] sm:$0xf]
        %v1560 = vld [vmem:[#allocation6 + $0x50] sm:$0xff]
        %v1561 = vld [vmem:[#allocation6 + $0x58] sm:$0xff]
        %v1562 = vld [vmem:[#allocation6 + $0x60] sm:$0xf]
        %v1563 = vld [vmem:[#allocation6 + $0x64] sm:$0xff]
        %v1564 = vld [vmem:[#allocation6 + $0x6c] sm:$0xff]
        %v1565 = vld [vmem:[#allocation6 + $0x74] sm:$0xf]
        %v1566 = vld [vmem:[#allocation6 + $0x78] sm:$0xff]
        %v1567 = vld [vmem:[#allocation6 + $0x80] sm:$0xff]
        %v1568 = vld [vmem:[#allocation6 + $0x88] sm:$0xf]
        %v1569 = vld [vmem:[#allocation6 + $0x8c] sm:$0xff]
        %v1570 = vld [vmem:[#allocation6 + $0x94] sm:$0xff]
        %v1571 = vld [vmem:[#allocation6 + $0x9c] sm:$0xf]
        %v1572 = vld [vmem:[#allocation6 + $0xa0] sm:$0xff]
        %v1573 = vld [vmem:[#allocation6 + $0xa8] sm:$0xff]
        %v1574 = vld [vmem:[#allocation6 + $0xb0] sm:$0xf]
        %v1575 = vld [vmem:[#allocation6 + $0xb4] sm:$0xff]
        %v1576 = vld [vmem:[#allocation6 + $0xbc] sm:$0xff]
        %v1577 = vld [vmem:[#allocation6 + $0xc4] sm:$0xf]
        %v1578 = vld [vmem:[#allocation6 + $0xc8] sm:$0xff]
        %v1579 = vld [vmem:[#allocation6 + $0xd0] sm:$0xff]
        %v1580 = vld [vmem:[#allocation6 + $0xd8] sm:$0xf]
        %v1581 = vld [vmem:[#allocation6 + $0xdc] sm:$0xff]
        %v1582 = vld [vmem:[#allocation6 + $0xe4] sm:$0xff]
        %v1583 = vld [vmem:[#allocation6 + $0xec] sm:$0xf]
        %v1584 = vld [vmem:[#allocation6 + $0xf0] sm:$0xff]
        %v1585 = vld [vmem:[#allocation6 + $0xf8] sm:$0xff]
        %v1586 = vld [vmem:[#allocation6 + $0x100] sm:$0xf]
        %v1587 = vld [vmem:[#allocation6 + $0x104] sm:$0xff]
        %v1588 = vld [vmem:[#allocation6 + $0x10c] sm:$0xff]
        %v1589 = vld [vmem:[#allocation6 + $0x114] sm:$0xf]
        %v1590 = vld [vmem:[#allocation6 + $0x118] sm:$0xff]
        %v1591 = vld [vmem:[#allocation6 + $0x120] sm:$0xff]
        %v1592 = vld [vmem:[#allocation6 + $0x128] sm:$0xf]
        %v1593 = vld [vmem:[#allocation6 + $0x12c] sm:$0xff]
        %v1594 = vld [vmem:[#allocation6 + $0x134] sm:$0xff]
        %v1595 = vld [vmem:[#allocation6 + $0x13c] sm:$0xf]
        %v1596 = vld [vmem:[#allocation8] sm:$0xff]
        %v1597 = vld [vmem:[#allocation8 + $0x8] sm:$0xff]
        %v1598 = vld [vmem:[#allocation8 + $0x10] sm:$0xff]
        %v1599 = vld [vmem:[#allocation8 + $0x18] sm:$0xff]
        %v1600 = vld [vmem:[#allocation8 + $0x20] sm:$0xff]
        %v1601 = vld [vmem:[#allocation8 + $0x28] sm:$0xff]
        %v1602 = vld [vmem:[#allocation8 + $0x30] sm:$0xff]
        %v1603 = vld [vmem:[#allocation8 + $0x38] sm:$0xff]
        %v1604 = vld [vmem:[#allocation8 + $0x40] sm:$0xff]
        %v1605 = vld [vmem:[#allocation8 + $0x48] sm:$0xff]
        %v1606 = vld [vmem:[#allocation8 + $0x50] sm:$0xff]
        %v1607 = vld [vmem:[#allocation8 + $0x58] sm:$0xff]
        %v1608 = vld [vmem:[#allocation8 + $0x60] sm:$0xff]
        %v1609 = vld [vmem:[#allocation8 + $0x68] sm:$0xff]
        %v1610 = vld [vmem:[#allocation8 + $0x70] sm:$0xff]
        %v1611 = vld [vmem:[#allocation8 + $0x78] sm:$0xff]
        %1613 = vset.pattern.permute.xlu0 0
        %1614 = vperm.xlu0 %1613, %v1596
        %v1615 = vpop.permute.xlu0 %1614
        %1618 = vset.pattern.permute.xlu0 0
        %1619 = vperm.xlu0 %1618, %v1597
        %v1620 = vpop.permute.xlu0 %1619
        %1623 = vset.pattern.permute.xlu0 0
        %1624 = vperm.xlu0 %1623, %v1598
        %v1625 = vpop.permute.xlu0 %1624
        %1628 = vset.pattern.permute.xlu0 0
        %1629 = vperm.xlu0 %1628, %v1599
        %v1630 = vpop.permute.xlu0 %1629
        %1633 = vset.pattern.permute.xlu0 0
        %1634 = vperm.xlu0 %1633, %v1600
        %v1635 = vpop.permute.xlu0 %1634
        %1638 = vset.pattern.permute.xlu0 0
        %1639 = vperm.xlu0 %1638, %v1601
        %v1640 = vpop.permute.xlu0 %1639
        %1643 = vset.pattern.permute.xlu0 0
        %1644 = vperm.xlu0 %1643, %v1602
        %v1645 = vpop.permute.xlu0 %1644
        %1648 = vset.pattern.permute.xlu0 0
        %1649 = vperm.xlu0 %1648, %v1603
        %v1650 = vpop.permute.xlu0 %1649
        %1653 = vset.pattern.permute.xlu0 0
        %1654 = vperm.xlu0 %1653, %v1604
        %v1655 = vpop.permute.xlu0 %1654
        %1658 = vset.pattern.permute.xlu0 0
        %1659 = vperm.xlu0 %1658, %v1605
        %v1660 = vpop.permute.xlu0 %1659
        %1663 = vset.pattern.permute.xlu0 0
        %1664 = vperm.xlu0 %1663, %v1606
        %v1665 = vpop.permute.xlu0 %1664
        %1668 = vset.pattern.permute.xlu0 0
        %1669 = vperm.xlu0 %1668, %v1607
        %v1670 = vpop.permute.xlu0 %1669
        %1673 = vset.pattern.permute.xlu0 0
        %1674 = vperm.xlu0 %1673, %v1608
        %v1675 = vpop.permute.xlu0 %1674
        %1678 = vset.pattern.permute.xlu0 0
        %1679 = vperm.xlu0 %1678, %v1609
        %v1680 = vpop.permute.xlu0 %1679
        %1683 = vset.pattern.permute.xlu0 0
        %1684 = vperm.xlu0 %1683, %v1610
        %v1685 = vpop.permute.xlu0 %1684
        %1688 = vset.pattern.permute.xlu0 0
        %1689 = vperm.xlu0 %1688, %v1611
        %v1690 = vpop.permute.xlu0 %1689
        %v1740 = vunpack.c.l.b16 %v1548
        %v1741 = vunpack.c.h.b16 %v1548
        %v1742 = vunpack.c.l.b16 %v1549
        %v1743 = vunpack.c.h.b16 %v1549
        %v1744 = vunpack.c.l.b16 %v1550
        %v1745 = vunpack.c.l.b16 %v1551
        %v1746 = vunpack.c.h.b16 %v1551
        %v1747 = vunpack.c.l.b16 %v1552
        %v1748 = vunpack.c.h.b16 %v1552
        %v1749 = vunpack.c.l.b16 %v1553
        %v1750 = vunpack.c.l.b16 %v1554
        %v1751 = vunpack.c.h.b16 %v1554
        %v1752 = vunpack.c.l.b16 %v1555
        %v1753 = vunpack.c.h.b16 %v1555
        %v1754 = vunpack.c.l.b16 %v1556
        %v1755 = vunpack.c.l.b16 %v1557
        %v1756 = vunpack.c.h.b16 %v1557
        %v1757 = vunpack.c.l.b16 %v1558
        %v1758 = vunpack.c.h.b16 %v1558
        %v1759 = vunpack.c.l.b16 %v1559
        %v1760 = vunpack.c.l.b16 %v1560
        %v1761 = vunpack.c.h.b16 %v1560
        %v1762 = vunpack.c.l.b16 %v1561
        %v1763 = vunpack.c.h.b16 %v1561
        %v1764 = vunpack.c.l.b16 %v1562
        %v1765 = vunpack.c.l.b16 %v1563
        %v1766 = vunpack.c.h.b16 %v1563
        %v1767 = vunpack.c.l.b16 %v1564
        %v1768 = vunpack.c.h.b16 %v1564
        %v1769 = vunpack.c.l.b16 %v1565
        %v1770 = vunpack.c.l.b16 %v1566
        %v1771 = vunpack.c.h.b16 %v1566
        %v1772 = vunpack.c.l.b16 %v1567
        %v1773 = vunpack.c.h.b16 %v1567
        %v1774 = vunpack.c.l.b16 %v1568
        %v1775 = vunpack.c.l.b16 %v1569
        %v1776 = vunpack.c.h.b16 %v1569
        %v1777 = vunpack.c.l.b16 %v1570
        %v1778 = vunpack.c.h.b16 %v1570
        %v1779 = vunpack.c.l.b16 %v1571
        %v1780 = vunpack.c.l.b16 %v1572
        %v1781 = vunpack.c.h.b16 %v1572
        %v1782 = vunpack.c.l.b16 %v1573
        %v1783 = vunpack.c.h.b16 %v1573
        %v1784 = vunpack.c.l.b16 %v1574
        %v1785 = vunpack.c.l.b16 %v1575
        %v1786 = vunpack.c.h.b16 %v1575
        %v1787 = vunpack.c.l.b16 %v1576
        %v1788 = vunpack.c.h.b16 %v1576
        %v1789 = vunpack.c.l.b16 %v1577
        %v1790 = vunpack.c.l.b16 %v1578
        %v1791 = vunpack.c.h.b16 %v1578
        %v1792 = vunpack.c.l.b16 %v1579
        %v1793 = vunpack.c.h.b16 %v1579
        %v1794 = vunpack.c.l.b16 %v1580
        %v1795 = vunpack.c.l.b16 %v1581
        %v1796 = vunpack.c.h.b16 %v1581
        %v1797 = vunpack.c.l.b16 %v1582
        %v1798 = vunpack.c.h.b16 %v1582
        %v1799 = vunpack.c.l.b16 %v1583
        %v1800 = vunpack.c.l.b16 %v1584
        %v1801 = vunpack.c.h.b16 %v1584
        %v1802 = vunpack.c.l.b16 %v1585
        %v1803 = vunpack.c.h.b16 %v1585
        %v1804 = vunpack.c.l.b16 %v1586
        %v1805 = vunpack.c.l.b16 %v1587
        %v1806 = vunpack.c.h.b16 %v1587
        %v1807 = vunpack.c.l.b16 %v1588
        %v1808 = vunpack.c.h.b16 %v1588
        %v1809 = vunpack.c.l.b16 %v1589
        %v1810 = vunpack.c.l.b16 %v1590
        %v1811 = vunpack.c.h.b16 %v1590
        %v1812 = vunpack.c.l.b16 %v1591
        %v1813 = vunpack.c.h.b16 %v1591
        %v1814 = vunpack.c.l.b16 %v1592
        %v1815 = vunpack.c.l.b16 %v1593
        %v1816 = vunpack.c.h.b16 %v1593
        %v1817 = vunpack.c.l.b16 %v1594
        %v1818 = vunpack.c.h.b16 %v1594
        %v1819 = vunpack.c.l.b16 %v1595
        %v1820 = vpack.c.b16 %v1745, %v1740
        %v1821 = vpack.c.b16 %v1746, %v1741
        %v1822 = vpack.c.b16 %v1747, %v1742
        %v1823 = vpack.c.b16 %v1748, %v1743
        %v1824 = vpack.c.b16 %v1749, %v1744
        %v1825 = vpack.c.b16 %v1755, %v1750
        %v1826 = vpack.c.b16 %v1756, %v1751
        %v1827 = vpack.c.b16 %v1757, %v1752
        %v1828 = vpack.c.b16 %v1758, %v1753
        %v1829 = vpack.c.b16 %v1759, %v1754
        %v1830 = vpack.c.b16 %v1765, %v1760
        %v1831 = vpack.c.b16 %v1766, %v1761
        %v1832 = vpack.c.b16 %v1767, %v1762
        %v1833 = vpack.c.b16 %v1768, %v1763
        %v1834 = vpack.c.b16 %v1769, %v1764
        %v1835 = vpack.c.b16 %v1775, %v1770
        %v1836 = vpack.c.b16 %v1776, %v1771
        %v1837 = vpack.c.b16 %v1777, %v1772
        %v1838 = vpack.c.b16 %v1778, %v1773
        %v1839 = vpack.c.b16 %v1779, %v1774
        %v1840 = vpack.c.b16 %v1785, %v1780
        %v1841 = vpack.c.b16 %v1786, %v1781
        %v1842 = vpack.c.b16 %v1787, %v1782
        %v1843 = vpack.c.b16 %v1788, %v1783
        %v1844 = vpack.c.b16 %v1789, %v1784
        %v1845 = vpack.c.b16 %v1795, %v1790
        %v1846 = vpack.c.b16 %v1796, %v1791
        %v1847 = vpack.c.b16 %v1797, %v1792
        %v1848 = vpack.c.b16 %v1798, %v1793
        %v1849 = vpack.c.b16 %v1799, %v1794
        %v1850 = vpack.c.b16 %v1805, %v1800
        %v1851 = vpack.c.b16 %v1806, %v1801
        %v1852 = vpack.c.b16 %v1807, %v1802
        %v1853 = vpack.c.b16 %v1808, %v1803
        %v1854 = vpack.c.b16 %v1809, %v1804
        %v1855 = vpack.c.b16 %v1815, %v1810
        %v1856 = vpack.c.b16 %v1816, %v1811
        %v1857 = vpack.c.b16 %v1817, %v1812
        %v1858 = vpack.c.b16 %v1818, %v1813
        %v1859 = vpack.c.b16 %v1819, %v1814
        %v1893 = vsel %vm776, %v1824, 0
        %v1896 = vsel %vm776, %v1829, 0
        %v1899 = vsel %vm776, %v1834, 0
        %v1902 = vsel %vm776, %v1839, 0
        %v1905 = vsel %vm776, %v1844, 0
        %v1908 = vsel %vm776, %v1849, 0
        %v1911 = vsel %vm776, %v1854, 0
        %v1914 = vsel %vm776, %v1859, 0
        %v1917 = vsel %vm776, %v1472, 0
        %v1920 = vsel %vm776, %v1477, 0
        %v1923 = vsel %vm776, %v1482, 0
        %v1926 = vsel %vm776, %v1487, 0
        %v1929 = vsel %vm776, %v1492, 0
        %v1932 = vsel %vm776, %v1497, 0
        %v1935 = vsel %vm776, %v1502, 0
        %v1938 = vsel %vm776, %v1507, 0
        %v1941 = vsel %vm776, %v1512, 0
        %v1944 = vsel %vm776, %v1517, 0
        %v1947 = vsel %vm776, %v1522, 0
        %v1950 = vsel %vm776, %v1527, 0
        %v1953 = vsel %vm776, %v1532, 0
        %v1956 = vsel %vm776, %v1537, 0
        %v1959 = vsel %vm776, %v1542, 0
        %v1962 = vsel %vm776, %v1547, 0
        %1964 = vmatprep.subr.bf16.mxu0 %v1469
        %1965 = vmatpush1.bf16.xpose.msra.mxu0 %v1468
        %1966 = vmatprep.subr.bf16.mxu0 %v1474
        %1967 = vmatpush1.bf16.xpose.msra.mxu0 %v1473
        %1968 = vmatprep.subr.bf16.mxu0 %v1479
        %1969 = vmatpush1.bf16.xpose.msra.mxu0 %v1478
        %1970 = vmatprep.subr.bf16.mxu0 %v1484
        %1971 = vmatpush1.bf16.xpose.msra.mxu0 %v1483
        %1972 = vmatprep.subr.bf16.mxu0 %v1489
        %1973 = vmatpush1.bf16.xpose.msra.mxu0 %v1488
        %1974 = vmatprep.subr.bf16.mxu0 %v1494
        %1975 = vmatpush1.bf16.xpose.msra.mxu0 %v1493
        %1976 = vmatprep.subr.bf16.mxu0 %v1499
        %1977 = vmatpush1.bf16.xpose.msra.mxu0 %v1498
        %1978 = vmatprep.subr.bf16.mxu0 %v1504
        %1979 = vmatpush1.bf16.xpose.msra.mxu0 %v1503
        %1980 = vmatprep.subr.bf16.mxu0 %v1509
        %1981 = vmatpush1.bf16.xpose.msra.mxu0 %v1508
        %1982 = vmatprep.subr.bf16.mxu0 %v1514
        %1983 = vmatpush1.bf16.xpose.msra.mxu0 %v1513
        %1984 = vmatprep.subr.bf16.mxu0 %v1519
        %1985 = vmatpush1.bf16.xpose.msra.mxu0 %v1518
        %1986 = vmatprep.subr.bf16.mxu0 %v1524
        %1987 = vmatpush1.bf16.xpose.msra.mxu0 %v1523
        %1988 = vmatprep.subr.bf16.mxu0 %v1529
        %1989 = vmatpush1.bf16.xpose.msra.mxu0 %v1528
        %1990 = vmatprep.subr.bf16.mxu0 %v1534
        %1991 = vmatpush1.bf16.xpose.msra.mxu0 %v1533
        %1992 = vmatprep.subr.bf16.mxu0 %v1539
        %1993 = vmatpush1.bf16.xpose.msra.mxu0 %v1538
        %1994 = vmatprep.subr.bf16.mxu0 %v1544
        %1995 = vmatpush1.bf16.xpose.msra.mxu0 %v1543
        %1996 = vmatprep.mubr.bf16.mxu0 %v1821
        %1997 = vmatmul.mubr.bf16.gmra.mrb[0].mxu0 %v1820
        %v1998 = vpop.f32.mrb[0].mxu0
        %v1999 = vadd.f32 %v1615, %v1998
        %v2000 = vpop.f32.mrb[0].mxu0
        %v2001 = vadd.f32 %v1615, %v2000
        %v2002 = vpop.f32.mrb[0].mxu0
        %v2003 = vadd.f32 %v1620, %v2002
        %v2004 = vpop.f32.mrb[0].mxu0
        %v2005 = vadd.f32 %v1620, %v2004
        %2006 = vmatprep.mubr.bf16.mxu0 %v1826
        %2007 = vmatmul.mubr.bf16.gmra.mrb[0].mxu0 %v1825
        %v2008 = vpop.f32.mrb[0].mxu0
        %v2009 = vadd.f32 %v1625, %v2008
        %v2010 = vpop.f32.mrb[0].mxu0
        %v2011 = vadd.f32 %v1625, %v2010
        %v2012 = vpop.f32.mrb[0].mxu0
        %v2013 = vadd.f32 %v1630, %v2012
        %v2014 = vpop.f32.mrb[0].mxu0
        %v2015 = vadd.f32 %v1630, %v2014
        %2016 = vmatprep.mubr.bf16.mxu0 %v1831
        %2017 = vmatmul.mubr.bf16.gmra.mrb[0].mxu0 %v1830
        %v2018 = vpop.f32.mrb[0].mxu0
        %v2019 = vadd.f32 %v1635, %v2018
        %v2020 = vpop.f32.mrb[0].mxu0
        %v2021 = vadd.f32 %v1635, %v2020
        %v2022 = vpop.f32.mrb[0].mxu0
        %v2023 = vadd.f32 %v1640, %v2022
        %v2024 = vpop.f32.mrb[0].mxu0
        %v2025 = vadd.f32 %v1640, %v2024
        %2026 = vmatprep.mubr.bf16.mxu0 %v1836
        %2027 = vmatmul.mubr.bf16.gmra.mrb[0].mxu0 %v1835
        %v2028 = vpop.f32.mrb[0].mxu0
        %v2029 = vadd.f32 %v1645, %v2028
        %v2030 = vpop.f32.mrb[0].mxu0
        %v2031 = vadd.f32 %v1645, %v2030
        %v2032 = vpop.f32.mrb[0].mxu0
        %v2033 = vadd.f32 %v1650, %v2032
        %v2034 = vpop.f32.mrb[0].mxu0
        %v2035 = vadd.f32 %v1650, %v2034
        %2036 = vmatprep.mubr.bf16.mxu0 %v1841
        %2037 = vmatmul.mubr.bf16.gmra.mrb[0].mxu0 %v1840
        %v2038 = vpop.f32.mrb[0].mxu0
        %v2039 = vadd.f32 %v1655, %v2038
        %v2040 = vpop.f32.mrb[0].mxu0
        %v2041 = vadd.f32 %v1655, %v2040
        %v2042 = vpop.f32.mrb[0].mxu0
        %v2043 = vadd.f32 %v1660, %v2042
        %v2044 = vpop.f32.mrb[0].mxu0
        %v2045 = vadd.f32 %v1660, %v2044
        %2046 = vmatprep.mubr.bf16.mxu0 %v1846
        %2047 = vmatmul.mubr.bf16.gmra.mrb[0].mxu0 %v1845
        %v2048 = vpop.f32.mrb[0].mxu0
        %v2049 = vadd.f32 %v1665, %v2048
        %v2050 = vpop.f32.mrb[0].mxu0
        %v2051 = vadd.f32 %v1665, %v2050
        %v2052 = vpop.f32.mrb[0].mxu0
        %v2053 = vadd.f32 %v1670, %v2052
        %v2054 = vpop.f32.mrb[0].mxu0
        %v2055 = vadd.f32 %v1670, %v2054
        %2056 = vmatprep.mubr.bf16.mxu0 %v1851
        %2057 = vmatmul.mubr.bf16.gmra.mrb[0].mxu0 %v1850
        %v2058 = vpop.f32.mrb[0].mxu0
        %v2059 = vadd.f32 %v1675, %v2058
        %v2060 = vpop.f32.mrb[0].mxu0
        %v2061 = vadd.f32 %v1675, %v2060
        %v2062 = vpop.f32.mrb[0].mxu0
        %v2063 = vadd.f32 %v1680, %v2062
        %v2064 = vpop.f32.mrb[0].mxu0
        %v2065 = vadd.f32 %v1680, %v2064
        %2066 = vmatprep.mubr.bf16.mxu0 %v1856
        %2067 = vmatmul.mubr.bf16.gmra.mrb[0].mxu0 %v1855
        %v2068 = vpop.f32.mrb[0].mxu0
        %v2069 = vadd.f32 %v1685, %v2068
        %v2070 = vpop.f32.mrb[0].mxu0
        %v2071 = vadd.f32 %v1685, %v2070
        %v2072 = vpop.f32.mrb[0].mxu0
        %v2073 = vadd.f32 %v1690, %v2072
        %v2074 = vpop.f32.mrb[0].mxu0
        %v2075 = vadd.f32 %v1690, %v2074
        %2076 = vdwg.mxu0
        %2077 = vmatprep.subr.bf16.mxu0 %v1471
        %2078 = vmatpush1.bf16.xpose.msra.mxu0 %v1470
        %2079 = vmatprep.subr.bf16.mxu0 %v1476
        %2080 = vmatpush1.bf16.xpose.msra.mxu0 %v1475
        %2081 = vmatprep.subr.bf16.mxu0 %v1481
        %2082 = vmatpush1.bf16.xpose.msra.mxu0 %v1480
        %2083 = vmatprep.subr.bf16.mxu0 %v1486
        %2084 = vmatpush1.bf16.xpose.msra.mxu0 %v1485
        %2085 = vmatprep.subr.bf16.mxu0 %v1491
        %2086 = vmatpush1.bf16.xpose.msra.mxu0 %v1490
        %2087 = vmatprep.subr.bf16.mxu0 %v1496
        %2088 = vmatpush1.bf16.xpose.msra.mxu0 %v1495
        %2089 = vmatprep.subr.bf16.mxu0 %v1501
        %2090 = vmatpush1.bf16.xpose.msra.mxu0 %v1500
        %2091 = vmatprep.subr.bf16.mxu0 %v1506
        %2092 = vmatpush1.bf16.xpose.msra.mxu0 %v1505
        %2093 = vmatprep.subr.bf16.mxu0 %v1511
        %2094 = vmatpush1.bf16.xpose.msra.mxu0 %v1510
        %2095 = vmatprep.subr.bf16.mxu0 %v1516
        %2096 = vmatpush1.bf16.xpose.msra.mxu0 %v1515
        %2097 = vmatprep.subr.bf16.mxu0 %v1521
        %2098 = vmatpush1.bf16.xpose.msra.mxu0 %v1520
        %2099 = vmatprep.subr.bf16.mxu0 %v1526
        %2100 = vmatpush1.bf16.xpose.msra.mxu0 %v1525
        %2101 = vmatprep.subr.bf16.mxu0 %v1531
        %2102 = vmatpush1.bf16.xpose.msra.mxu0 %v1530
        %2103 = vmatprep.subr.bf16.mxu0 %v1536
        %2104 = vmatpush1.bf16.xpose.msra.mxu0 %v1535
        %2105 = vmatprep.subr.bf16.mxu0 %v1541
        %2106 = vmatpush1.bf16.xpose.msra.mxu0 %v1540
        %2107 = vmatprep.subr.bf16.mxu0 %v1546
        %2108 = vmatpush1.bf16.xpose.msra.mxu0 %v1545
        %2109 = vmatprep.mubr.bf16.mxu0 %v1823
        %2110 = vmatmul.mubr.bf16.gmra.mrb[0].mxu0 %v1822
        %v2111 = vpop.f32.mrb[0].mxu0
        %v2112 = vadd.f32 %v1999, %v2111
        %v2113 = vpop.f32.mrb[0].mxu0
        %v2114 = vadd.f32 %v2001, %v2113
        %v2115 = vpop.f32.mrb[0].mxu0
        %v2116 = vadd.f32 %v2003, %v2115
        %v2117 = vpop.f32.mrb[0].mxu0
        %v2118 = vadd.f32 %v2005, %v2117
        %2119 = vmatprep.mubr.bf16.mxu0 %v1828
        %2120 = vmatmul.mubr.bf16.gmra.mrb[0].mxu0 %v1827
        %v2121 = vpop.f32.mrb[0].mxu0
        %v2122 = vadd.f32 %v2009, %v2121
        %v2123 = vpop.f32.mrb[0].mxu0
        %v2124 = vadd.f32 %v2011, %v2123
        %v2125 = vpop.f32.mrb[0].mxu0
        %v2126 = vadd.f32 %v2013, %v2125
        %v2127 = vpop.f32.mrb[0].mxu0
        %v2128 = vadd.f32 %v2015, %v2127
        %2129 = vmatprep.mubr.bf16.mxu0 %v1833
        %2130 = vmatmul.mubr.bf16.gmra.mrb[0].mxu0 %v1832
        %v2131 = vpop.f32.mrb[0].mxu0
        %v2132 = vadd.f32 %v2019, %v2131
        %v2133 = vpop.f32.mrb[0].mxu0
        %v2134 = vadd.f32 %v2021, %v2133
        %v2135 = vpop.f32.mrb[0].mxu0
        %v2136 = vadd.f32 %v2023, %v2135
        %v2137 = vpop.f32.mrb[0].mxu0
        %v2138 = vadd.f32 %v2025, %v2137
        %2139 = vmatprep.mubr.bf16.mxu0 %v1838
        %2140 = vmatmul.mubr.bf16.gmra.mrb[0].mxu0 %v1837
        %v2141 = vpop.f32.mrb[0].mxu0
        %v2142 = vadd.f32 %v2029, %v2141
        %v2143 = vpop.f32.mrb[0].mxu0
        %v2144 = vadd.f32 %v2031, %v2143
        %v2145 = vpop.f32.mrb[0].mxu0
        %v2146 = vadd.f32 %v2033, %v2145
        %v2147 = vpop.f32.mrb[0].mxu0
        %v2148 = vadd.f32 %v2035, %v2147
        %2149 = vmatprep.mubr.bf16.mxu0 %v1843
        %2150 = vmatmul.mubr.bf16.gmra.mrb[0].mxu0 %v1842
        %v2151 = vpop.f32.mrb[0].mxu0
        %v2152 = vadd.f32 %v2039, %v2151
        %v2153 = vpop.f32.mrb[0].mxu0
        %v2154 = vadd.f32 %v2041, %v2153
        %v2155 = vpop.f32.mrb[0].mxu0
        %v2156 = vadd.f32 %v2043, %v2155
        %v2157 = vpop.f32.mrb[0].mxu0
        %v2158 = vadd.f32 %v2045, %v2157
        %2159 = vmatprep.mubr.bf16.mxu0 %v1848
        %2160 = vmatmul.mubr.bf16.gmra.mrb[0].mxu0 %v1847
        %v2161 = vpop.f32.mrb[0].mxu0
        %v2162 = vadd.f32 %v2049, %v2161
        %v2163 = vpop.f32.mrb[0].mxu0
        %v2164 = vadd.f32 %v2051, %v2163
        %v2165 = vpop.f32.mrb[0].mxu0
        %v2166 = vadd.f32 %v2053, %v2165
        %v2167 = vpop.f32.mrb[0].mxu0
        %v2168 = vadd.f32 %v2055, %v2167
        %2169 = vmatprep.mubr.bf16.mxu0 %v1853
        %2170 = vmatmul.mubr.bf16.gmra.mrb[0].mxu0 %v1852
        %v2171 = vpop.f32.mrb[0].mxu0
        %v2172 = vadd.f32 %v2059, %v2171
        %v2173 = vpop.f32.mrb[0].mxu0
        %v2174 = vadd.f32 %v2061, %v2173
        %v2175 = vpop.f32.mrb[0].mxu0
        %v2176 = vadd.f32 %v2063, %v2175
        %v2177 = vpop.f32.mrb[0].mxu0
        %v2178 = vadd.f32 %v2065, %v2177
        %2179 = vmatprep.mubr.bf16.mxu0 %v1858
        %2180 = vmatmul.mubr.bf16.gmra.mrb[0].mxu0 %v1857
        %v2181 = vpop.f32.mrb[0].mxu0
        %v2182 = vadd.f32 %v2069, %v2181
        %v2183 = vpop.f32.mrb[0].mxu0
        %v2184 = vadd.f32 %v2071, %v2183
        %v2185 = vpop.f32.mrb[0].mxu0
        %v2186 = vadd.f32 %v2073, %v2185
        %v2187 = vpop.f32.mrb[0].mxu0
        %v2188 = vadd.f32 %v2075, %v2187
        %2189 = vdwg.mxu0
        %2190 = vmatprep.subr.bf16.mxu0 0
        %2191 = vmatpush1.bf16.xpose.msra.mxu0 %v1917
        %2192 = vmatprep.subr.bf16.mxu0 0
        %2193 = vmatpush1.bf16.xpose.msra.mxu0 %v1920
        %2194 = vmatprep.subr.bf16.mxu0 0
        %2195 = vmatpush1.bf16.xpose.msra.mxu0 %v1923
        %2196 = vmatprep.subr.bf16.mxu0 0
        %2197 = vmatpush1.bf16.xpose.msra.mxu0 %v1926
        %2198 = vmatprep.subr.bf16.mxu0 0
        %2199 = vmatpush1.bf16.xpose.msra.mxu0 %v1929
        %2200 = vmatprep.subr.bf16.mxu0 0
        %2201 = vmatpush1.bf16.xpose.msra.mxu0 %v1932
        %2202 = vmatprep.subr.bf16.mxu0 0
        %2203 = vmatpush1.bf16.xpose.msra.mxu0 %v1935
        %2204 = vmatprep.subr.bf16.mxu0 0
        %2205 = vmatpush1.bf16.xpose.msra.mxu0 %v1938
        %2206 = vmatprep.subr.bf16.mxu0 0
        %2207 = vmatpush1.bf16.xpose.msra.mxu0 %v1941
        %2208 = vmatprep.subr.bf16.mxu0 0
        %2209 = vmatpush1.bf16.xpose.msra.mxu0 %v1944
        %2210 = vmatprep.subr.bf16.mxu0 0
        %2211 = vmatpush1.bf16.xpose.msra.mxu0 %v1947
        %2212 = vmatprep.subr.bf16.mxu0 0
        %2213 = vmatpush1.bf16.xpose.msra.mxu0 %v1950
        %2214 = vmatprep.subr.bf16.mxu0 0
        %2215 = vmatpush1.bf16.xpose.msra.mxu0 %v1953
        %2216 = vmatprep.subr.bf16.mxu0 0
        %2217 = vmatpush1.bf16.xpose.msra.mxu0 %v1956
        %2218 = vmatprep.subr.bf16.mxu0 0
        %2219 = vmatpush1.bf16.xpose.msra.mxu0 %v1959
        %2220 = vmatprep.subr.bf16.mxu0 0
        %2221 = vmatpush1.bf16.xpose.msra.mxu0 %v1962
        %2222 = vmatprep.mubr.bf16.mxu0 0
        %2223 = vmatmul.mubr.bf16.gmra.mrb[0].mxu0 %v1893
        %v2224 = vpop.f32.mrb[0].mxu0
        %v2225 = vadd.f32 %v2112, %v2224
        %v2226 = vpop.f32.mrb[0].mxu0
        %v2227 = vadd.f32 %v2114, %v2226
        %v2228 = vpop.f32.mrb[0].mxu0
        %v2229 = vadd.f32 %v2116, %v2228
        %v2230 = vpop.f32.mrb[0].mxu0
        %v2231 = vadd.f32 %v2118, %v2230
        %2232 = vmatprep.mubr.bf16.mxu0 0
        %2233 = vmatmul.mubr.bf16.gmra.mrb[0].mxu0 %v1896
        %v2234 = vpop.f32.mrb[0].mxu0
        %v2235 = vadd.f32 %v2122, %v2234
        %v2236 = vpop.f32.mrb[0].mxu0
        %v2237 = vadd.f32 %v2124, %v2236
        %v2238 = vpop.f32.mrb[0].mxu0
        %v2239 = vadd.f32 %v2126, %v2238
        %v2240 = vpop.f32.mrb[0].mxu0
        %v2241 = vadd.f32 %v2128, %v2240
        %2242 = vmatprep.mubr.bf16.mxu0 0
        %2243 = vmatmul.mubr.bf16.gmra.mrb[0].mxu0 %v1899
        %v2244 = vpop.f32.mrb[0].mxu0
        %v2245 = vadd.f32 %v2132, %v2244
        %v2246 = vpop.f32.mrb[0].mxu0
        %v2247 = vadd.f32 %v2134, %v2246
        %v2248 = vpop.f32.mrb[0].mxu0
        %v2249 = vadd.f32 %v2136, %v2248
        %v2250 = vpop.f32.mrb[0].mxu0
        %v2251 = vadd.f32 %v2138, %v2250
        %2252 = vmatprep.mubr.bf16.mxu0 0
        %2253 = vmatmul.mubr.bf16.gmra.mrb[0].mxu0 %v1902
        %v2254 = vpop.f32.mrb[0].mxu0
        %v2255 = vadd.f32 %v2142, %v2254
        %v2256 = vpop.f32.mrb[0].mxu0
        %v2257 = vadd.f32 %v2144, %v2256
        %v2258 = vpop.f32.mrb[0].mxu0
        %v2259 = vadd.f32 %v2146, %v2258
        %v2260 = vpop.f32.mrb[0].mxu0
        %v2261 = vadd.f32 %v2148, %v2260
        %2262 = vmatprep.mubr.bf16.mxu0 0
        %2263 = vmatmul.mubr.bf16.gmra.mrb[0].mxu0 %v1905
        %v2264 = vpop.f32.mrb[0].mxu0
        %v2265 = vadd.f32 %v2152, %v2264
        %v2266 = vpop.f32.mrb[0].mxu0
        %v2267 = vadd.f32 %v2154, %v2266
        %v2268 = vpop.f32.mrb[0].mxu0
        %v2269 = vadd.f32 %v2156, %v2268
        %v2270 = vpop.f32.mrb[0].mxu0
        %v2271 = vadd.f32 %v2158, %v2270
        %2272 = vmatprep.mubr.bf16.mxu0 0
        %2273 = vmatmul.mubr.bf16.gmra.mrb[0].mxu0 %v1908
        %v2274 = vpop.f32.mrb[0].mxu0
        %v2275 = vadd.f32 %v2162, %v2274
        %v2276 = vpop.f32.mrb[0].mxu0
        %v2277 = vadd.f32 %v2164, %v2276
        %v2278 = vpop.f32.mrb[0].mxu0
        %v2279 = vadd.f32 %v2166, %v2278
        %v2280 = vpop.f32.mrb[0].mxu0
        %v2281 = vadd.f32 %v2168, %v2280
        %2282 = vmatprep.mubr.bf16.mxu0 0
        %2283 = vmatmul.mubr.bf16.gmra.mrb[0].mxu0 %v1911
        %v2284 = vpop.f32.mrb[0].mxu0
        %v2285 = vadd.f32 %v2172, %v2284
        %v2286 = vpop.f32.mrb[0].mxu0
        %v2287 = vadd.f32 %v2174, %v2286
        %v2288 = vpop.f32.mrb[0].mxu0
        %v2289 = vadd.f32 %v2176, %v2288
        %v2290 = vpop.f32.mrb[0].mxu0
        %v2291 = vadd.f32 %v2178, %v2290
        %2292 = vmatprep.mubr.bf16.mxu0 0
        %2293 = vmatmul.mubr.bf16.gmra.mrb[0].mxu0 %v1914
        %v2294 = vpop.f32.mrb[0].mxu0
        %v2295 = vadd.f32 %v2182, %v2294
        %v2296 = vpop.f32.mrb[0].mxu0
        %v2297 = vadd.f32 %v2184, %v2296
        %v2298 = vpop.f32.mrb[0].mxu0
        %v2299 = vadd.f32 %v2186, %v2298
        %v2300 = vpop.f32.mrb[0].mxu0
        %v2301 = vadd.f32 %v2188, %v2300
        %2302 = vdwg.mxu0
        %v2303 = vmax.f32 %v2225, 0.0
        %v2304 = vmax.f32 %v2227, 0.0
        %v2305 = vmax.f32 %v2229, 0.0
        %v2306 = vmax.f32 %v2231, 0.0
        %v2307 = vmax.f32 %v2235, 0.0
        %v2308 = vmax.f32 %v2237, 0.0
        %v2309 = vmax.f32 %v2239, 0.0
        %v2310 = vmax.f32 %v2241, 0.0
        %v2311 = vmax.f32 %v2245, 0.0
        %v2312 = vmax.f32 %v2247, 0.0
        %v2313 = vmax.f32 %v2249, 0.0
        %v2314 = vmax.f32 %v2251, 0.0
        %v2315 = vmax.f32 %v2255, 0.0
        %v2316 = vmax.f32 %v2257, 0.0
        %v2317 = vmax.f32 %v2259, 0.0
        %v2318 = vmax.f32 %v2261, 0.0
        %v2319 = vmax.f32 %v2265, 0.0
        %v2320 = vmax.f32 %v2267, 0.0
        %v2321 = vmax.f32 %v2269, 0.0
        %v2322 = vmax.f32 %v2271, 0.0
        %v2323 = vmax.f32 %v2275, 0.0
        %v2324 = vmax.f32 %v2277, 0.0
        %v2325 = vmax.f32 %v2279, 0.0
        %v2326 = vmax.f32 %v2281, 0.0
        %v2327 = vmax.f32 %v2285, 0.0
        %v2328 = vmax.f32 %v2287, 0.0
        %v2329 = vmax.f32 %v2289, 0.0
        %v2330 = vmax.f32 %v2291, 0.0
        %v2331 = vmax.f32 %v2295, 0.0
        %v2332 = vmax.f32 %v2297, 0.0
        %v2333 = vmax.f32 %v2299, 0.0
        %v2334 = vmax.f32 %v2301, 0.0
        %v2335 = vpack.c.bf16 %v2305, %v2303
        %v2336 = vpack.c.bf16 %v2306, %v2304
        %v2337 = vpack.c.bf16 %v2309, %v2307
        %v2338 = vpack.c.bf16 %v2310, %v2308
        %v2339 = vpack.c.bf16 %v2313, %v2311
        %v2340 = vpack.c.bf16 %v2314, %v2312
        %v2341 = vpack.c.bf16 %v2317, %v2315
        %v2342 = vpack.c.bf16 %v2318, %v2316
        %v2351 = vunpack.c.l.b16 %v2335
        %v2352 = vunpack.c.l.b16 %v2336
        %v2353 = vunpack.c.h.b16 %v2335
        %v2354 = vunpack.c.h.b16 %v2336
        %v2355 = vunpack.c.l.b16 %v2337
        %v2356 = vunpack.c.l.b16 %v2338
        %v2357 = vunpack.c.h.b16 %v2337
        %v2358 = vunpack.c.h.b16 %v2338
        %v2359 = vunpack.c.l.b16 %v2339
        %v2360 = vunpack.c.l.b16 %v2340
        %v2361 = vunpack.c.h.b16 %v2339
        %v2362 = vunpack.c.h.b16 %v2340
        %v2363 = vunpack.c.l.b16 %v2341
        %v2364 = vunpack.c.l.b16 %v2342
        %v2365 = vunpack.c.h.b16 %v2341
        %v2366 = vunpack.c.h.b16 %v2342
        %v2367 = vpack.c.b16 %v2352, %v2351
        %v2368 = vpack.c.b16 %v2354, %v2353
        %v2369 = vpack.c.b16 %v2356, %v2355
        %v2370 = vpack.c.b16 %v2358, %v2357
        %v2371 = vpack.c.b16 %v2360, %v2359
        %v2372 = vpack.c.b16 %v2362, %v2361
        %v2373 = vpack.c.b16 %v2364, %v2363
        %v2374 = vpack.c.b16 %v2366, %v2365
        %2383 = vst [vmem:[%s629] sm:$0xff] %v2367
        %2384 = vst [vmem:[%s629 + $0x8] sm:$0xff] %v2368
        %2385 = vst [vmem:[%s629 + $0x10] sm:$0xff] %v2369
        %2386 = vst [vmem:[%s629 + $0x18] sm:$0xff] %v2370
        %2387 = vst [vmem:[%s629 + $0x20] sm:$0xff] %v2371
        %2388 = vst [vmem:[%s629 + $0x28] sm:$0xff] %v2372
        %2389 = vst [vmem:[%s629 + $0x30] sm:$0xff] %v2373
        %2390 = vst [vmem:[%s629 + $0x38] sm:$0xff] %v2374
        %v2391 = vld [vmem:[#allocation9] sm:$0xf]
        %v2392 = vld [vmem:[#allocation9 + $0x4] sm:$0xf]
        %v2393 = vld [vmem:[#allocation9 + $0x8] sm:$0xf]
        %v2394 = vld [vmem:[#allocation9 + $0xc] sm:$0xf]
        %v2395 = vld [vmem:[#allocation9 + $0x10] sm:$0xf]
        %v2396 = vld [vmem:[#allocation9 + $0x14] sm:$0xf]
        %v2397 = vld [vmem:[#allocation9 + $0x18] sm:$0xf]
        %v2398 = vld [vmem:[#allocation9 + $0x1c] sm:$0xf]
        %v2399 = vpack.c.bf16 %v2321, %v2319
        %v2400 = vpack.c.bf16 %v2322, %v2320
        %v2401 = vpack.c.bf16 %v2325, %v2323
        %v2402 = vpack.c.bf16 %v2326, %v2324
        %v2403 = vpack.c.bf16 %v2329, %v2327
        %v2404 = vpack.c.bf16 %v2330, %v2328
        %v2405 = vpack.c.bf16 %v2333, %v2331
        %v2406 = vpack.c.bf16 %v2334, %v2332
        %v2407 = vld [vmem:[#allocation11] sm:$0xf]
        %2409 = vset.pattern.permute.xlu0 0
        %2410 = vperm.xlu0 %2409, %v2407
        %v2411 = vpop.permute.xlu0 %2410
        %v2421 = vunpack.c.l.b16 %v2391
        %v2422 = vunpack.c.l.b16 %v2392
        %v2423 = vunpack.c.l.b16 %v2393
        %v2424 = vunpack.c.l.b16 %v2394
        %v2425 = vunpack.c.l.b16 %v2395
        %v2426 = vunpack.c.l.b16 %v2396
        %v2427 = vunpack.c.l.b16 %v2397
        %v2428 = vunpack.c.l.b16 %v2398
        %v2429 = vpack.c.b16 %v2422, %v2421
        %v2430 = vpack.c.b16 %v2424, %v2423
        %v2431 = vpack.c.b16 %v2426, %v2425
        %v2432 = vpack.c.b16 %v2428, %v2427
        %2437 = vxpose.xlu0.c.b16.start [1/8] %v2429, 128
        %2438 = vxpose.xlu0.c.b16.cont [2/8] %v2430, 128
        %2439 = vxpose.xlu0.c.b16.cont [3/8] %v2431, 128
        %2440 = vxpose.xlu0.c.b16.cont [4/8] %v2432, 128
        %2441 = vxpose.xlu0.c.b16.cont [5/8] 0, 128
        %2442 = vxpose.xlu0.c.b16.cont [6/8] 0, 128
        %2443 = vxpose.xlu0.c.b16.cont [7/8] 0, 128
        %2444 = vxpose.xlu0.c.b16.end [8/8] 0, 128
        %v2445 = vpop.trf.xlu0
        %v2446 = vpop.trf.xlu0
        %v2447 = vpop.trf.xlu0
        %v2448 = vpop.trf.xlu0
        %v2449 = vpop.trf.xlu0
        %v2450 = vpop.trf.xlu0
        %v2451 = vpop.trf.xlu0
        %v2452 = vpop.trf.xlu0
        %v2454 = vsel %vm776, %v2445, 0
        %2456 = vmatprep.subr.bf16.mxu0 %v2400
        %2457 = vmatpush1.bf16.msra.mxu0 %v2399
        %2458 = vmatprep.subr.bf16.mxu0 %v2402
        %2459 = vmatpush1.bf16.msra.mxu0 %v2401
        %2460 = vmatprep.subr.bf16.mxu0 %v2404
        %2461 = vmatpush1.bf16.msra.mxu0 %v2403
        %2462 = vmatprep.subr.bf16.mxu0 %v2406
        %2463 = vmatpush1.bf16.msra.mxu0 %v2405
        %2464 = vmatprep.subr.bf16.mxu0 0
        %2465 = vmatpush1.bf16.msra.mxu0 0
        %2466 = vmatprep.subr.bf16.mxu0 0
        %2467 = vmatpush1.bf16.msra.mxu0 0
        %2468 = vmatprep.subr.bf16.mxu0 0
        %2469 = vmatpush1.bf16.msra.mxu0 0
        %2470 = vmatprep.subr.bf16.mxu0 0
        %2471 = vmatpush1.bf16.msra.mxu0 0
        %2472 = vmatprep.subr.bf16.mxu0 0
        %2473 = vmatpush1.bf16.msra.mxu0 0
        %2474 = vmatprep.subr.bf16.mxu0 0
        %2475 = vmatpush1.bf16.msra.mxu0 0
        %2476 = vmatprep.subr.bf16.mxu0 0
        %2477 = vmatpush1.bf16.msra.mxu0 0
        %2478 = vmatprep.subr.bf16.mxu0 0
        %2479 = vmatpush1.bf16.msra.mxu0 0
        %2480 = vmatprep.subr.bf16.mxu0 0
        %2481 = vmatpush1.bf16.msra.mxu0 0
        %2482 = vmatprep.subr.bf16.mxu0 0
        %2483 = vmatpush1.bf16.msra.mxu0 0
        %2484 = vmatprep.subr.bf16.mxu0 0
        %2485 = vmatpush1.bf16.msra.mxu0 0
        %2486 = vmatprep.subr.bf16.mxu0 0
        %2487 = vmatpush1.bf16.msra.mxu0 0
        %2488 = vmatprep.mubr.bf16.mxu0 0
        %2489 = vmatmul.mubr.bf16.gmra.mrb[0].mxu0 %v2454
        %v2490 = vpop.f32.mrb[0].mxu0
        %v2491 = vadd.f32 %v2411, %v2490
        %v2492 = vpop.f32.mrb[0].mxu0
        %v2493 = vadd.f32 %v2411, %v2492
        %v2494 = vpop.f32.mrb[0].mxu0
        %v2495 = vpop.f32.mrb[0].mxu0
        %2496 = vdwg.mxu0
        %v2499 = vcombine.low %v2491, %v2493
        %2501 = vst [vmem:[%s636] sm:$0xff] %v2499
        %vm2502 = vcmask 1043456
        %v2503 = vsel %vm2502, %v2491, -inf
        %v2504 = vsel %vm2502, %v2493, -inf
        %v2505 = vmax.f32 %v2503, %v2504
        %2506 = vmax.xlane.f32.xlu0 %v2505
        %v2507 = vpop.xlane.xlu0 %2506
        %v2508 = vsub.f32 %v2491, %v2507
        %v2509 = vsub.f32 %v2493, %v2507
        %v2510 = vmul.f32 %v2508, 1.442695
        %v2511 = vpow.pop %v2510
        %v2512 = vmul.f32 %v2509, 1.442695
        %v2513 = vpow.pop %v2512
        %v2514 = vsel %vm2502, %v2511, 0.0
        %v2515 = vsel %vm2502, %v2513, 0.0
        %v2516 = vadd.f32 %v2514, %v2515
        %2517 = vadd.xlane.f32.xlu0 %v2516
        %v2518 = vpop.xlane.xlu0 %2517
        %v2519 = vrcp.pop %v2518
        %v2520 = vmul.f32 %v2511, %v2519
        %v2521 = vmul.f32 %v2513, %v2519
        %2522 = vmatprep.subr.mxu0 %v2304
        %2523 = vmatpush1.xpose.msra.mxu0 %v2303
        %2524 = vmatprep.subr.mxu0 %v2306
        %2525 = vmatpush1.xpose.msra.mxu0 %v2305
        %2526 = vmatprep.subr.mxu0 %v2308
        %2527 = vmatpush1.xpose.msra.mxu0 %v2307
        %2528 = vmatprep.subr.mxu0 %v2310
        %2529 = vmatpush1.xpose.msra.mxu0 %v2309
        %2530 = vmatprep.subr.mxu0 %v2312
        %2531 = vmatpush1.xpose.msra.mxu0 %v2311
        %2532 = vmatprep.subr.mxu0 %v2314
        %2533 = vmatpush1.xpose.msra.mxu0 %v2313
        %2534 = vmatprep.subr.mxu0 %v2316
        %2535 = vmatpush1.xpose.msra.mxu0 %v2315
        %2536 = vmatprep.subr.mxu0 %v2318
        %2537 = vmatpush1.xpose.msra.mxu0 %v2317
        %2538 = vmatprep.subr.mxu0 0.0
        %2539 = vmatpush1.xpose.msra.mxu0 0.0
        %2540 = vmatprep.subr.mxu0 0.0
        %2541 = vmatpush1.xpose.msra.mxu0 0.0
        %2542 = vmatprep.subr.mxu0 0.0
        %2543 = vmatpush1.xpose.msra.mxu0 0.0
        %2544 = vmatprep.subr.mxu0 0.0
        %2545 = vmatpush1.xpose.msra.mxu0 0.0
        %2546 = vmatprep.subr.mxu0 0.0
        %2547 = vmatpush1.xpose.msra.mxu0 0.0
        %2548 = vmatprep.subr.mxu0 0.0
        %2549 = vmatpush1.xpose.msra.mxu0 0.0
        %2550 = vmatprep.subr.mxu0 0.0
        %2551 = vmatpush1.xpose.msra.mxu0 0.0
        %2552 = vmatprep.subr.mxu0 0.0
        %2553 = vmatpush1.xpose.msra.mxu0 0.0
        %2554 = vmatprep.subr.mxu0 0.0
        %2555 = vmatpush1.xpose.msra.mxu0 0.0
        %2556 = vmatprep.subr.mxu0 0.0
        %2557 = vmatpush1.xpose.msra.mxu0 0.0
        %2558 = vmatprep.subr.mxu0 0.0
        %2559 = vmatpush1.xpose.msra.mxu0 0.0
        %2560 = vmatprep.subr.mxu0 0.0
        %2561 = vmatpush1.xpose.msra.mxu0 0.0
        %2562 = vmatprep.subr.mxu0 0.0
        %2563 = vmatpush1.xpose.msra.mxu0 0.0
        %2564 = vmatprep.subr.mxu0 0.0
        %2565 = vmatpush1.xpose.msra.mxu0 0.0
        %2566 = vmatprep.subr.mxu0 0.0
        %2567 = vmatpush1.xpose.msra.mxu0 0.0
        %2568 = vmatprep.subr.mxu0 0.0
        %2569 = vmatpush1.xpose.msra.mxu0 0.0
        %2570 = vmatprep.subr.mxu0 0.0
        %2571 = vmatpush1.xpose.msra.mxu0 0.0
        %2572 = vmatprep.subr.mxu0 0.0
        %2573 = vmatpush1.xpose.msra.mxu0 0.0
        %2574 = vmatprep.subr.mxu0 0.0
        %2575 = vmatpush1.xpose.msra.mxu0 0.0
        %2576 = vmatprep.subr.mxu0 0.0
        %2577 = vmatpush1.xpose.msra.mxu0 0.0
        %2578 = vmatprep.subr.mxu0 0.0
        %2579 = vmatpush1.xpose.msra.mxu0 0.0
        %2580 = vmatprep.subr.mxu0 0.0
        %2581 = vmatpush1.xpose.msra.mxu0 0.0
        %2582 = vmatprep.subr.mxu0 0.0
        %2583 = vmatpush1.xpose.msra.mxu0 0.0
        %2584 = vmatprep.subr.mxu0 0.0
        %2585 = vmatpush1.xpose.msra.mxu0 0.0
        %2586 = vmatprep.mubr.f32.mxu0 %v2521
        %2587 = vmatmul.mubr.f32.gmra.mrb[0].mxu0 %v2520
        %v2588 = vpop.f32.mrb[0].mxu0
        %v2589 = vadd.f32 0.0, %v2588
        %v2590 = vpop.f32.mrb[0].mxu0
        %2591 = vdwg.mxu0
        %v2592 = vpack.c.bf16 %v2589, %v2589
        %v2593 = vld [vmem:[#allocation12] sm:$0xf]
        %v2594 = vld [vmem:[#allocation12 + $0x4] sm:$0xf]
        %v2595 = vld [vmem:[#allocation12 + $0x8] sm:$0xf]
        %v2596 = vld [vmem:[#allocation12 + $0xc] sm:$0xf]
        %v2597 = vld [vmem:[#allocation12 + $0x10] sm:$0xf]
        %v2598 = vld [vmem:[#allocation12 + $0x14] sm:$0xf]
        %v2599 = vld [vmem:[#allocation12 + $0x18] sm:$0xf]
        %v2600 = vld [vmem:[#allocation12 + $0x1c] sm:$0xf]
        %v2601 = vld [vmem:[#allocation14] sm:$0x1]
        %v2603 = vlaneseq
        %v2604 = vshrl.u32 %v2603, 7
        %v2605 = vsub.s32 0, %v2604
        %v2606 = vrot.slane %v2601, %v2605
        %v2616 = vunpack.c.l.b16 %v2593
        %v2617 = vunpack.c.l.b16 %v2594
        %v2618 = vunpack.c.l.b16 %v2595
        %v2619 = vunpack.c.l.b16 %v2596
        %v2620 = vunpack.c.l.b16 %v2597
        %v2621 = vunpack.c.l.b16 %v2598
        %v2622 = vunpack.c.l.b16 %v2599
        %v2623 = vunpack.c.l.b16 %v2600
        %v2624 = vpack.c.b16 %v2617, %v2616
        %v2625 = vpack.c.b16 %v2619, %v2618
        %v2626 = vpack.c.b16 %v2621, %v2620
        %v2627 = vpack.c.b16 %v2623, %v2622
        %v2633 = vsel %vm776, %v2592, 0
        %2635 = vmatprep.subr.bf16.mxu0 0
        %2636 = vmatpush1.bf16.msra.mxu0 %v2624
        %2637 = vmatprep.subr.bf16.mxu0 0
        %2638 = vmatpush1.bf16.msra.mxu0 %v2625
        %2639 = vmatprep.subr.bf16.mxu0 0
        %2640 = vmatpush1.bf16.msra.mxu0 %v2626
        %2641 = vmatprep.subr.bf16.mxu0 0
        %2642 = vmatpush1.bf16.msra.mxu0 %v2627
        %2643 = vmatprep.subr.bf16.mxu0 0
        %2644 = vmatpush1.bf16.msra.mxu0 0
        %2645 = vmatprep.subr.bf16.mxu0 0
        %2646 = vmatpush1.bf16.msra.mxu0 0
        %2647 = vmatprep.subr.bf16.mxu0 0
        %2648 = vmatpush1.bf16.msra.mxu0 0
        %2649 = vmatprep.subr.bf16.mxu0 0
        %2650 = vmatpush1.bf16.msra.mxu0 0
        %2651 = vmatprep.subr.bf16.mxu0 0
        %2652 = vmatpush1.bf16.msra.mxu0 0
        %2653 = vmatprep.subr.bf16.mxu0 0
        %2654 = vmatpush1.bf16.msra.mxu0 0
        %2655 = vmatprep.subr.bf16.mxu0 0
        %2656 = vmatpush1.bf16.msra.mxu0 0
        %2657 = vmatprep.subr.bf16.mxu0 0
        %2658 = vmatpush1.bf16.msra.mxu0 0
        %2659 = vmatprep.subr.bf16.mxu0 0
        %2660 = vmatpush1.bf16.msra.mxu0 0
        %2661 = vmatprep.subr.bf16.mxu0 0
        %2662 = vmatpush1.bf16.msra.mxu0 0
        %2663 = vmatprep.subr.bf16.mxu0 0
        %2664 = vmatpush1.bf16.msra.mxu0 0
        %2665 = vmatprep.subr.bf16.mxu0 0
        %2666 = vmatpush1.bf16.msra.mxu0 0
        %2667 = vmatprep.mubr.bf16.mxu0 0
        %2668 = vmatmul.mubr.bf16.gmra.mrb[0].mxu0 %v2633
        %v2669 = vpop.f32.mrb[0].mxu0
        %v2670 = vadd.f32 %v2606, %v2669
        %v2671 = vpop.f32.mrb[0].mxu0
        %v2672 = vpop.f32.mrb[0].mxu0
        %v2673 = vpop.f32.mrb[0].mxu0
        %2674 = vdwg.mxu0
        %v2675 = vmax.f32 %v2670, 0.0
        %v2676 = vpack.c.bf16 %v2675, %v2675
        %v2677 = vld [vmem:[#allocation15] sm:$0xf]
        %v2678 = vld [vmem:[#allocation15 + $0x4] sm:$0xf]
        %v2679 = vld [vmem:[#allocation15 + $0x8] sm:$0xf]
        %v2680 = vld [vmem:[#allocation15 + $0xc] sm:$0xf]
        %v2681 = vld [vmem:[#allocation17] sm:$0x1]
        %v2683 = vlaneseq
        %v2684 = vshrl.u32 %v2683, 7
        %v2685 = vsub.s32 0, %v2684
        %v2686 = vrot.slane %v2681, %v2685
        %v2692 = vunpack.c.l.b16 %v2677
        %v2693 = vunpack.c.l.b16 %v2678
        %v2694 = vunpack.c.l.b16 %v2679
        %v2695 = vunpack.c.l.b16 %v2680
        %v2696 = vpack.c.b16 %v2693, %v2692
        %v2697 = vpack.c.b16 %v2695, %v2694
        %vm2700 = vcmask 261120
        %v2702 = vsel %vm2700, %v2676, 0
        %2704 = vmatprep.subr.bf16.mxu0 0
        %2705 = vmatpush1.bf16.msra.mxu0 %v2696
        %2706 = vmatprep.subr.bf16.mxu0 0
        %2707 = vmatpush1.bf16.msra.mxu0 %v2697
        %2708 = vmatprep.subr.bf16.mxu0 0
        %2709 = vmatpush1.bf16.msra.mxu0 0
        %2710 = vmatprep.subr.bf16.mxu0 0
        %2711 = vmatpush1.bf16.msra.mxu0 0
        %2712 = vmatprep.subr.bf16.mxu0 0
        %2713 = vmatpush1.bf16.msra.mxu0 0
        %2714 = vmatprep.subr.bf16.mxu0 0
        %2715 = vmatpush1.bf16.msra.mxu0 0
        %2716 = vmatprep.subr.bf16.mxu0 0
        %2717 = vmatpush1.bf16.msra.mxu0 0
        %2718 = vmatprep.subr.bf16.mxu0 0
        %2719 = vmatpush1.bf16.msra.mxu0 0
        %2720 = vmatprep.subr.bf16.mxu0 0
        %2721 = vmatpush1.bf16.msra.mxu0 0
        %2722 = vmatprep.subr.bf16.mxu0 0
        %2723 = vmatpush1.bf16.msra.mxu0 0
        %2724 = vmatprep.subr.bf16.mxu0 0
        %2725 = vmatpush1.bf16.msra.mxu0 0
        %2726 = vmatprep.subr.bf16.mxu0 0
        %2727 = vmatpush1.bf16.msra.mxu0 0
        %2728 = vmatprep.subr.bf16.mxu0 0
        %2729 = vmatpush1.bf16.msra.mxu0 0
        %2730 = vmatprep.subr.bf16.mxu0 0
        %2731 = vmatpush1.bf16.msra.mxu0 0
        %2732 = vmatprep.subr.bf16.mxu0 0
        %2733 = vmatpush1.bf16.msra.mxu0 0
        %2734 = vmatprep.subr.bf16.mxu0 0
        %2735 = vmatpush1.bf16.msra.mxu0 0
        %2736 = vmatprep.mubr.bf16.mxu0 0
        %2737 = vmatmul.mubr.bf16.gmra.mrb[0].mxu0 %v2702
        %v2738 = vpop.f32.mrb[0].mxu0
        %v2739 = vadd.f32 %v2686, %v2738
        %v2740 = vpop.f32.mrb[0].mxu0
        %v2741 = vpop.f32.mrb[0].mxu0
        %v2742 = vpop.f32.mrb[0].mxu0
        %2743 = vdwg.mxu0
        %v2744 = vmax.f32 %v2739, 0.0
        %v2745 = vld [vmem:[#allocation18] sm:$0xf]
        %v2746 = vld [vmem:[#allocation18 + $0x4] sm:$0xf]
        %v2747 = vld [vmem:[#allocation18 + $0x8] sm:$0xf]
        %v2748 = vld [vmem:[#allocation18 + $0xc] sm:$0xf]
        %v2749 = vld [vmem:[#allocation18 + $0x10] sm:$0xf]
        %v2750 = vld [vmem:[#allocation18 + $0x14] sm:$0xf]
        %v2751 = vld [vmem:[#allocation18 + $0x18] sm:$0xf]
        %v2752 = vld [vmem:[#allocation18 + $0x1c] sm:$0xf]
        %v2753 = vld [vmem:[#allocation20] sm:$0x1]
        %v2755 = vlaneseq
        %v2756 = vshrl.u32 %v2755, 7
        %v2757 = vsub.s32 0, %v2756
        %v2758 = vrot.slane %v2753, %v2757
        %v2768 = vunpack.c.l.b16 %v2745
        %v2769 = vunpack.c.l.b16 %v2746
        %v2770 = vunpack.c.l.b16 %v2747
        %v2771 = vunpack.c.l.b16 %v2748
        %v2772 = vunpack.c.l.b16 %v2749
        %v2773 = vunpack.c.l.b16 %v2750
        %v2774 = vunpack.c.l.b16 %v2751
        %v2775 = vunpack.c.l.b16 %v2752
        %v2776 = vpack.c.b16 %v2769, %v2768
        %v2777 = vpack.c.b16 %v2771, %v2770
        %v2778 = vpack.c.b16 %v2773, %v2772
        %v2779 = vpack.c.b16 %v2775, %v2774
        %2784 = vmatprep.subr.bf16.mxu0 0
        %2785 = vmatpush1.bf16.msra.mxu0 %v2776
        %2786 = vmatprep.subr.bf16.mxu0 0
        %2787 = vmatpush1.bf16.msra.mxu0 %v2777
        %2788 = vmatprep.subr.bf16.mxu0 0
        %2789 = vmatpush1.bf16.msra.mxu0 %v2778
        %2790 = vmatprep.subr.bf16.mxu0 0
        %2791 = vmatpush1.bf16.msra.mxu0 %v2779
        %2792 = vmatprep.subr.bf16.mxu0 0
        %2793 = vmatpush1.bf16.msra.mxu0 0
        %2794 = vmatprep.subr.bf16.mxu0 0
        %2795 = vmatpush1.bf16.msra.mxu0 0
        %2796 = vmatprep.subr.bf16.mxu0 0
        %2797 = vmatpush1.bf16.msra.mxu0 0
        %2798 = vmatprep.subr.bf16.mxu0 0
        %2799 = vmatpush1.bf16.msra.mxu0 0
        %2800 = vmatprep.subr.bf16.mxu0 0
        %2801 = vmatpush1.bf16.msra.mxu0 0
        %2802 = vmatprep.subr.bf16.mxu0 0
        %2803 = vmatpush1.bf16.msra.mxu0 0
        %2804 = vmatprep.subr.bf16.mxu0 0
        %2805 = vmatpush1.bf16.msra.mxu0 0
        %2806 = vmatprep.subr.bf16.mxu0 0
        %2807 = vmatpush1.bf16.msra.mxu0 0
        %2808 = vmatprep.subr.bf16.mxu0 0
        %2809 = vmatpush1.bf16.msra.mxu0 0
        %2810 = vmatprep.subr.bf16.mxu0 0
        %2811 = vmatpush1.bf16.msra.mxu0 0
        %2812 = vmatprep.subr.bf16.mxu0 0
        %2813 = vmatpush1.bf16.msra.mxu0 0
        %2814 = vmatprep.subr.bf16.mxu0 0
        %2815 = vmatpush1.bf16.msra.mxu0 0
        %2816 = vmatprep.mubr.bf16.mxu0 0
        %2817 = vmatmul.mubr.bf16.gmra.mrb[0].mxu0 %v2633
        %v2818 = vpop.f32.mrb[0].mxu0
        %v2819 = vadd.f32 %v2758, %v2818
        %v2820 = vpop.f32.mrb[0].mxu0
        %v2821 = vpop.f32.mrb[0].mxu0
        %v2822 = vpop.f32.mrb[0].mxu0
        %2823 = vdwg.mxu0
        %v2824 = vmax.f32 %v2819, 0.0
        %v2825 = vpack.c.bf16 %v2744, %v2744
        %vm2826 = vcmask 254976
        %2827 = vst.msk [vmem:[%s643] sm:$0x3] %vm2826, %v2825
        %v2828 = vpack.c.bf16 %v2824, %v2824
        %2829 = vst.msk [vmem:[%s650] sm:$0x3] %vm2826, %v2828
        %s2830 = sand.u32 %s287, 1
        %s2831 = scalar_lea.sflag [#allocation5], %s2830
        %s2832 = sand.u32 %s287, 1
        %s2833 = smul.addr %s2832, 64
        %s2834 = scalar_lea.vmem [#allocation21], %s2833
        %s2835 = sand.u32 %s43, 1
        %s2836 = scalar_lea.sflag [#allocation23], %s2835
        %s2837 = sand.u32 %s313, 1
        %s2838 = smul.addr %s2837, 8
        %s2839 = scalar_lea.vmem [#allocation22], %s2838
        %s2840 = sand.u32 %s43, 1
        %s2841 = scalar_lea.sflag [#allocation23], %s2840
        %s2842 = sand.u32 %s339, 1
        %s2843 = smul.addr %s2842, 2
        %s2844 = scalar_lea.vmem [#allocation24], %s2843
        %s2845 = sand.u32 %s365, 1
        %s2846 = scalar_lea.sflag [#allocation26], %s2845
        %s2847 = sand.u32 %s365, 1
        %s2848 = smul.addr %s2847, 2
        %s2849 = scalar_lea.vmem [#allocation25], %s2848
        // Predicated region
        $region109: #{ocr_block_forward.2} parent=63 // pred_check
          %p2850 = pneg %p297
        $region110: #{ocr_block_forward.2} parent=63 // pred_check_branch
          %2852 = sbr.rel (%p2850) target = $region112
        $region111: #{ocr_block_forward.2} parent=63 // pred_region
          %s2854 = ssub.s32 1024, 1024
          %2855 = vsyncadd %s2831, %s2854
          %s2856 = smul.addr %s43, 16
          %s2857 = smul.addr %s2856, 64
          %s2858 = scalar_lea.hbm %s11, %s2857
          %s2859 = sshll.u32 %s2834, 4
          %s2860 = int_to_ptr.vmem [resolvable:$true] %s2859
          %2865 = dma.vmem_to_hbm [thread:$0]  %s2860, 1024, %s2858, %s2831, 128, 128, 8
        $region112: #{ocr_block_forward.2} parent=63 // pred_fallthru
          _
        // Predicated region
        $region113: #{ocr_block_forward.2} parent=63 // pred_check
          %p2866 = pneg %p323
        $region114: #{ocr_block_forward.2} parent=63 // pred_check_branch
          %2868 = sbr.rel (%p2866) target = $region116
        $region115: #{ocr_block_forward.2} parent=63 // pred_region
          %s2870 = ssub.s32 128, 128
          %2871 = vsyncadd %s2836, %s2870
          %s2872 = smul.addr %s43, 2
          %s2873 = smul.addr %s2872, 64
          %s2874 = scalar_lea.hbm %s12, %s2873
          %s2876 = sshll.u32 %s2839, 4
          %s2877 = int_to_ptr.vmem [resolvable:$true] %s2876
          %2879 = dma.vmem_to_hbm [thread:$0]  %s2877, 128, %s2874, %s2836
        $region116: #{ocr_block_forward.2} parent=63 // pred_fallthru
          _
        // Predicated region
        $region117: #{ocr_block_forward.2} parent=63 // pred_check
          %p2880 = pneg %p349
        $region118: #{ocr_block_forward.2} parent=63 // pred_check_branch
          %2882 = sbr.rel (%p2880) target = $region120
        $region119: #{ocr_block_forward.2} parent=63 // pred_region
          %s2884 = ssub.s32 32, 32
          %2885 = vsyncadd %s2841, %s2884
          %s2886 = smul.addr %s43, 32
          %s2887 = scalar_lea.hbm %s13, %s2886
          %s2889 = sshll.u32 %s2844, 4
          %s2890 = int_to_ptr.vmem [resolvable:$true] %s2889
          %2892 = dma.vmem_to_hbm [thread:$0]  %s2890, 32, %s2887, %s2841
        $region120: #{ocr_block_forward.2} parent=63 // pred_fallthru
          _
        // Predicated region
        $region121: #{ocr_block_forward.2} parent=63 // pred_check
          %p2893 = pneg %p375
        $region122: #{ocr_block_forward.2} parent=63 // pred_check_branch
          %2895 = sbr.rel (%p2893) target = $region124
        $region123: #{ocr_block_forward.2} parent=63 // pred_region
          %s2897 = ssub.s32 32, 32
          %2898 = vsyncadd %s2846, %s2897
          %s2899 = smul.addr %s43, 32
          %s2900 = scalar_lea.hbm %s14, %s2899
          %s2902 = sshll.u32 %s2849, 4
          %s2903 = int_to_ptr.vmem [resolvable:$true] %s2902
          %2905 = dma.vmem_to_hbm [thread:$0]  %s2903, 32, %s2900, %s2846
        $region124: #{ocr_block_forward.2} parent=63 // pred_fallthru
          _
      $region64: #{ocr_block_forward.2} parent=5 // pred_fallthru
        _
      %p2906 = scmp.le.s32.totalorder 2, %s38
      // Predicated region
      $region125: #{ocr_block_forward.2} parent=5 // pred_check
        %p2907 = pneg %p2906
      $region126: #{ocr_block_forward.2} parent=5 // pred_check_branch
        %2909 = sbr.rel (%p2907) target = $region128
      $region127: #{ocr_block_forward.2} parent=5 // pred_region
        %s2910 = ssub.s32 %s38, 2
        // Predicated region
        $region129: #{ocr_block_forward.2} parent=127 // pred_check
          %p2911 = pneg %p303
        $region130: #{ocr_block_forward.2} parent=127 // pred_check_branch
          %2913 = sbr.rel (%p2911) target = $region132
        $region131: #{ocr_block_forward.2} parent=127 // pred_region
          %s2914 = sand.u32 %s288, 1
          %s2915 = scalar_lea.sflag [#allocation5], %s2914
          %s2916 = sand.u32 %s288, 1
          %s2917 = smul.addr %s2916, 64
          %s2918 = scalar_lea.vmem [#allocation21], %s2917
          %2919 = dma.done %s2915, 1024
        $region132: #{ocr_block_forward.2} parent=127 // pred_fallthru
          _
        // Predicated region
        $region133: #{ocr_block_forward.2} parent=127 // pred_check
          %p2920 = pneg %p329
        $region134: #{ocr_block_forward.2} parent=127 // pred_check_branch
          %2922 = sbr.rel (%p2920) target = $region136
        $region135: #{ocr_block_forward.2} parent=127 // pred_region
          %s2923 = sand.u32 %s44, 1
          %s2924 = scalar_lea.sflag [#allocation23], %s2923
          %s2925 = sand.u32 %s314, 1
          %s2926 = smul.addr %s2925, 8
          %s2927 = scalar_lea.vmem [#allocation22], %s2926
          %2928 = dma.done %s2924, 128
        $region136: #{ocr_block_forward.2} parent=127 // pred_fallthru
          _
        // Predicated region
        $region137: #{ocr_block_forward.2} parent=127 // pred_check
          %p2929 = pneg %p355
        $region138: #{ocr_block_forward.2} parent=127 // pred_check_branch
          %2931 = sbr.rel (%p2929) target = $region140
        $region139: #{ocr_block_forward.2} parent=127 // pred_region
          %s2932 = sand.u32 %s44, 1
          %s2933 = scalar_lea.sflag [#allocation23], %s2932
          %s2934 = sand.u32 %s340, 1
          %s2935 = smul.addr %s2934, 2
          %s2936 = scalar_lea.vmem [#allocation24], %s2935
          %2937 = dma.done %s2933, 32
        $region140: #{ocr_block_forward.2} parent=127 // pred_fallthru
          _
        // Predicated region
        $region141: #{ocr_block_forward.2} parent=127 // pred_check
          %p2938 = pneg %p381
        $region142: #{ocr_block_forward.2} parent=127 // pred_check_branch
          %2940 = sbr.rel (%p2938) target = $region144
        $region143: #{ocr_block_forward.2} parent=127 // pred_region
          %s2941 = sand.u32 %s366, 1
          %s2942 = scalar_lea.sflag [#allocation26], %s2941
          %s2943 = sand.u32 %s366, 1
          %s2944 = smul.addr %s2943, 2
          %s2945 = scalar_lea.vmem [#allocation25], %s2944
          %2946 = dma.done %s2942, 32
        $region144: #{ocr_block_forward.2} parent=127 // pred_fallthru
          _
      $region128: #{ocr_block_forward.2} parent=5 // pred_fallthru
        _
    $region6: #{ocr_block_forward.2} parent=1 // loop_footer
      %s42 = sadd.s32 1, %s38
    $region7: #{ocr_block_forward.2} parent=1 // loop_footer_branch
      %37 = sbr.rel target = $region3
    $region8: #{ocr_block_forward.2} parent=1 // loop_exit
      _
    %2947 = vsyncpa [#allocation4], 1
    %s2948 = scalar_lea.sflag [#allocation4], 1
    %2949 = vsyncpa %s2948, 1
    %2950 = vsyncpa [#allocation7], 1
    %2951 = vsyncpa [#allocation10], 1
    %2952 = vsyncpa [#allocation13], 1
    %2953 = vsyncpa [#allocation16], 1
    %2954 = vsyncpa [#allocation19], 1
    %2955 = vsyncpa [#allocation5], 1
    %s2956 = scalar_lea.sflag [#allocation5], 1
    %2957 = vsyncpa %s2956, 1
    %2958 = vsyncpa [#allocation23], 1
    %s2959 = scalar_lea.sflag [#allocation23], 1
    %2960 = vsyncpa %s2959, 1
    %2961 = vsyncpa [#allocation26], 1
    %s2962 = scalar_lea.sflag [#allocation26], 1
    %2963 = vsyncpa %s2962, 1

</llo_original>
